<compile_context>
chip_gen: v5e
topology: v5e:2x2
jax: 0.10.0
libtpu: 0.0.40
codegen_flags: <defaults>
</compile_context>

<pallas_src>
import functools
import math

import jax
import jax.numpy as jnp
from jax.experimental import pallas as pl
from jax.experimental.pallas import tpu as pltpu


def _round_up(x, m):
    return (x + m - 1) // m * m


# ----------------------------------------------------------------------------
# Pallas kernels
# ----------------------------------------------------------------------------

def _mm_kernel(a_ref, w_ref, b_ref, o_ref, acc_ref, *, activation):
    """Tiled matmul: bf16 MXU operands, f32 accumulation, fused bias(+relu)."""
    @pl.when(pl.program_id(2) == 0)
    def _():
        acc_ref[...] = jnp.zeros_like(acc_ref)

    acc_ref[...] += jnp.dot(
        a_ref[...].astype(jnp.bfloat16),
        w_ref[...].astype(jnp.bfloat16),
        preferred_element_type=jnp.float32,
    )

    @pl.when(pl.program_id(2) == pl.num_programs(2) - 1)
    def _():
        y = acc_ref[...] + b_ref[...]
        if activation == "relu":
            y = jnp.maximum(y, 0.0)
        o_ref[...] = y


def matmul_bias(a, w, b, activation=None):
    """a:(M,K) @ w:(K,N) + b:(N,), optional fused relu. Returns f32 (M,N)."""
    M, K = a.shape
    K2, N = w.shape
    assert K == K2
    tm = _round_up(M, 8) if M <= 256 else 256
    n128 = _round_up(N, 128)
    tn = n128 if n128 <= 512 else 256
    k128 = _round_up(K, 128)
    tk = k128 if k128 <= 512 else 512
    Mp, Np, Kp = _round_up(M, tm), _round_up(N, tn), _round_up(K, tk)

    a_p = jnp.pad(a.astype(jnp.float32), ((0, Mp - M), (0, Kp - K)))
    w_p = jnp.pad(w.astype(jnp.float32), ((0, Kp - K), (0, Np - N)))
    b_p = jnp.pad(b.astype(jnp.float32), (0, Np - N)).reshape(1, Np)

    out = pl.pallas_call(
        functools.partial(_mm_kernel, activation=activation),
        out_shape=jax.ShapeDtypeStruct((Mp, Np), jnp.float32),
        grid_spec=pltpu.PrefetchScalarGridSpec(
            num_scalar_prefetch=0,
            grid=(Mp // tm, Np // tn, Kp // tk),
            in_specs=[
                pl.BlockSpec((tm, tk), lambda i, j, k: (i, k)),
                pl.BlockSpec((tk, tn), lambda i, j, k: (k, j)),
                pl.BlockSpec((1, tn), lambda i, j, k: (0, j)),
            ],
            out_specs=pl.BlockSpec((tm, tn), lambda i, j, k: (i, j)),
            scratch_shapes=[pltpu.VMEM((tm, tn), jnp.float32)],
        ),
        compiler_params=pltpu.CompilerParams(
            dimension_semantics=("parallel", "parallel", "arbitrary"),
        ),
    )(a_p, w_p, b_p)
    return out[:M, :N]


def _mm_res_ln_kernel(a_ref, w_ref, b_ref, r_ref, g_ref, bt_ref, o_ref, acc_ref,
                      *, eps):
    """Matmul with fused epilogue: LayerNorm(residual + (a@w + b)) * g + beta."""
    @pl.when(pl.program_id(1) == 0)
    def _():
        acc_ref[...] = jnp.zeros_like(acc_ref)

    acc_ref[...] += jnp.dot(
        a_ref[...].astype(jnp.bfloat16),
        w_ref[...].astype(jnp.bfloat16),
        preferred_element_type=jnp.float32,
    )

    @pl.when(pl.program_id(1) == pl.num_programs(1) - 1)
    def _():
        y = acc_ref[...] + b_ref[...] + r_ref[...]
        mu = jnp.mean(y, axis=-1, keepdims=True)
        var = jnp.mean((y - mu) ** 2, axis=-1, keepdims=True)
        o_ref[...] = (y - mu) * jax.lax.rsqrt(var + eps) * g_ref[...] + bt_ref[...]


def matmul_res_layernorm(a, w, b, residual, gamma, beta, eps=1e-5):
    """LayerNorm over the full output dim N (one N tile), fused into the matmul."""
    M, K = a.shape
    K2, N = w.shape
    assert K == K2 and residual.shape == (M, N)
    tm = _round_up(M, 8) if M <= 256 else 256
    k128 = _round_up(K, 128)
    tk = k128 if k128 <= 512 else 512
    Mp, Kp = _round_up(M, tm), _round_up(K, tk)

    a_p = jnp.pad(a.astype(jnp.float32), ((0, Mp - M), (0, Kp - K)))
    w_p = jnp.pad(w.astype(jnp.float32), ((0, Kp - K), (0, 0)))
    r_p = jnp.pad(residual.astype(jnp.float32), ((0, Mp - M), (0, 0)))
    b2 = b.reshape(1, N).astype(jnp.float32)
    g2 = gamma.reshape(1, N).astype(jnp.float32)
    bt2 = beta.reshape(1, N).astype(jnp.float32)

    out = pl.pallas_call(
        functools.partial(_mm_res_ln_kernel, eps=eps),
        out_shape=jax.ShapeDtypeStruct((Mp, N), jnp.float32),
        grid_spec=pltpu.PrefetchScalarGridSpec(
            num_scalar_prefetch=0,
            grid=(Mp // tm, Kp // tk),
            in_specs=[
                pl.BlockSpec((tm, tk), lambda i, k: (i, k)),
                pl.BlockSpec((tk, N), lambda i, k: (k, 0)),
                pl.BlockSpec((1, N), lambda i, k: (0, 0)),
                pl.BlockSpec((tm, N), lambda i, k: (i, 0)),
                pl.BlockSpec((1, N), lambda i, k: (0, 0)),
                pl.BlockSpec((1, N), lambda i, k: (0, 0)),
            ],
            out_specs=pl.BlockSpec((tm, N), lambda i, k: (i, 0)),
            scratch_shapes=[pltpu.VMEM((tm, N), jnp.float32)],
        ),
        compiler_params=pltpu.CompilerParams(
            dimension_semantics=("parallel", "arbitrary"),
        ),
    )(a_p, w_p, b2, r_p, g2, bt2)
    return out[:M]


def _attn_kernel(q_ref, k_ref, v_ref, o_ref, *, scale):
    q = q_ref[...]                                              # (bt, S, D)
    k = k_ref[...]
    v = v_ref[...]
    s = jnp.einsum("bqd,bkd->bqk", q, k,
                   preferred_element_type=jnp.float32) * scale
    s = s - jnp.max(s, axis=-1, keepdims=True)
    p = jnp.exp(s)
    p = p / jnp.sum(p, axis=-1, keepdims=True)
    o_ref[...] = jnp.einsum("bqk,bkd->bqd", p, v,
                            preferred_element_type=jnp.float32)


def mha_core(q, k, v, scale):
    """q,k,v: (BH, S, D) -> softmax(q k^T * scale) v, tiled over batch-heads."""
    BH, S, D = q.shape
    bt = BH if BH <= 128 else 128
    BHp = _round_up(BH, bt)
    pad = ((0, BHp - BH), (0, 0), (0, 0))
    q_p, k_p, v_p = (jnp.pad(t.astype(jnp.float32), pad) for t in (q, k, v))
    out = pl.pallas_call(
        functools.partial(_attn_kernel, scale=scale),
        out_shape=jax.ShapeDtypeStruct((BHp, S, D), jnp.float32),
        grid_spec=pltpu.PrefetchScalarGridSpec(
            num_scalar_prefetch=0,
            grid=(BHp // bt,),
            in_specs=[
                pl.BlockSpec((bt, S, D), lambda i: (i, 0, 0)),
                pl.BlockSpec((bt, S, D), lambda i: (i, 0, 0)),
                pl.BlockSpec((bt, S, D), lambda i: (i, 0, 0)),
            ],
            out_specs=pl.BlockSpec((bt, S, D), lambda i: (i, 0, 0)),
        ),
        compiler_params=pltpu.CompilerParams(
            dimension_semantics=("parallel",),
        ),
    )(q_p, k_p, v_p)
    return out[:BH]


# ----------------------------------------------------------------------------
# Glue (layout plumbing) built on the Pallas kernels
# ----------------------------------------------------------------------------

def conv1d_cl(x_btc, weight, bias, stride, padding):
    """Conv1d in channels-last layout via im2col + Pallas matmul.

    x_btc: (B, L, Cin); weight: (Cout, Cin, K) (PyTorch layout); bias: (Cout,).
    """
    # TODO(synk): for large inputs, replace im2col with a K-tap accumulation
    # grid axis; here (K=5, stride=4) the expansion is only 1.25x and negligible.
    B, L, Cin = x_btc.shape
    Cout, _, K = weight.shape
    if padding > 0:
        x_btc = jnp.pad(x_btc, ((0, 0), (padding, padding), (0, 0)))
    Lp = x_btc.shape[1]
    Tout = (Lp - K) // stride + 1
    # (B, Tout, Cin, K) so the flattening matches weight.reshape(Cout, Cin*K).
    patches = jnp.stack(
        [x_btc[:, j: j + stride * Tout: stride, :] for j in range(K)], axis=-1)
    patches = patches.reshape(B * Tout, Cin * K)
    w2d = weight.reshape(Cout, Cin * K).T
    out = matmul_bias(patches, w2d, bias)
    return out.reshape(B, Tout, Cout)


def positional_encoding(T, d_model):
    position = jnp.arange(T, dtype=jnp.float32)[:, None]
    div_term = jnp.exp(jnp.arange(0, d_model, 2, dtype=jnp.float32)
                       * (-math.log(10000.0) / d_model))
    pe = jnp.zeros((T, d_model), jnp.float32)
    pe = pe.at[:, 0::2].set(jnp.sin(position * div_term))
    pe = pe.at[:, 1::2].set(jnp.cos(position * div_term))
    return pe


def transformer_encoder_layer(h, lp, nhead):
    """One nn.TransformerEncoderLayer (post-norm, relu) on h of shape (S, Nb, E)."""
    S, Nb, E = h.shape
    D = E // nhead
    x2d = h.reshape(S * Nb, E)

    # Self-attention: combined QKV projection in one matmul (E -> 3E).
    qkv = matmul_bias(x2d, lp["in_w"].T, lp["in_b"])            # (S*Nb, 3E)
    qkv = qkv.reshape(S, Nb, 3, nhead, D)
    qkv = jnp.transpose(qkv, (2, 1, 3, 0, 4)).reshape(3, Nb * nhead, S, D)
    ao = mha_core(qkv[0], qkv[1], qkv[2], scale=1.0 / math.sqrt(D))
    ao = jnp.transpose(ao.reshape(Nb, nhead, S, D),
                       (2, 0, 1, 3)).reshape(S * Nb, E)

    # out_proj + dropout1(identity) + residual + norm1, fused epilogue.
    y2d = matmul_res_layernorm(ao, lp["op_w"].T, lp["op_b"], x2d,
                               lp["ln1_g"], lp["ln1_b"])

    # Feed-forward: relu(linear1) fused; linear2 + residual + norm2 fused.
    f = matmul_bias(y2d, lp["l1_w"].T, lp["l1_b"], activation="relu")
    z2d = matmul_res_layernorm(f, lp["l2_w"].T, lp["l2_b"], y2d,
                               lp["ln2_g"], lp["ln2_b"])
    return z2d.reshape(S, Nb, E)


def transformer_listener_forward(x, params, *, nhead, stride=4):
    """x: (B, L, in_features) -> (B, T, conv_feature_dim)."""
    # x.transpose(1,2) + Conv1d(in_features, C, 5, stride, padding=2): absorbed
    # into channels-last layout.
    h = conv1d_cl(x, params["cnn_w"], params["cnn_b"], stride=stride,
                  padding=5 // 2)
    B, T, C = h.shape
    # PositionalEncoding over the time axis; dropout = identity (eval).
    h = h + positional_encoding(T, C)[None, :, :]
    # batch_first=False quirk: attention runs over axis 0 (batch), batched over
    # axis 1 (time).  Reproduced exactly.
    for lp in params["layers"]:
        h = transformer_encoder_layer(h, lp, nhead)
    return h


# ----------------------------------------------------------------------------
# Deterministic parameter init (shapes follow the module's __init__)
# ----------------------------------------------------------------------------

def _uniform(key, shape, bound):
    return jax.random.uniform(key, shape, jnp.float32, -bound, bound)


def init_params(key, in_features, conv_feature_dim, transformer_hid_dim,
                n_transformer_layers, n_attention_head):
    del n_attention_head  # only affects the head reshape, not parameter shapes
    E, FF = conv_feature_dim, transformer_hid_dim
    keys = iter(jax.random.split(key, 2 + 8 * n_transformer_layers))
    kb = 1.0 / math.sqrt(in_features * 5)
    p = {
        "cnn_w": _uniform(next(keys), (E, in_features, 5), kb),
        "cnn_b": _uniform(next(keys), (E,), kb),
        "layers": [],
    }
    for _ in range(n_transformer_layers):
        lp = {
            "in_w": _uniform(next(keys), (3 * E, E), math.sqrt(6.0 / (4 * E))),
            "in_b": jnp.zeros((3 * E,), jnp.float32),
            "op_w": _uniform(next(keys), (E, E), 1.0 / math.sqrt(E)),
            "op_b": jnp.zeros((E,), jnp.float32),
            "l1_w": _uniform(next(keys), (FF, E), 1.0 / math.sqrt(E)),
            "l1_b": _uniform(next(keys), (FF,), 1.0 / math.sqrt(E)),
            "l2_w": _uniform(next(keys), (E, FF), 1.0 / math.sqrt(FF)),
            "l2_b": _uniform(next(keys), (E,), 1.0 / math.sqrt(FF)),
            "ln1_g": jnp.ones((E,), jnp.float32),
            "ln1_b": jnp.zeros((E,), jnp.float32),
            "ln2_g": jnp.ones((E,), jnp.float32),
            "ln2_b": jnp.zeros((E,), jnp.float32),
        }
        p["layers"].append(lp)
    return p


# ----------------------------------------------------------------------------

if __name__ == "__main__":
    # small shapes: batch=2, seq=16, in_features=16, conv_feature_dim=128,
    # transformer_hid_dim=256, n_transformer_layers=2, n_attention_head=4, stride=4
    B, L, in_features = 2, 16, 16
    conv_feature_dim = 128
    transformer_hid_dim = 256
    n_transformer_layers = 2
    n_attention_head = 4
    stride = 4

    key = jax.random.PRNGKey(0)
    kx, kp = jax.random.split(key)
    x = jax.random.normal(kx, (B, L, in_features), dtype=jnp.float32)
    params = init_params(kp, in_features, conv_feature_dim, transformer_hid_dim,
                         n_transformer_layers, n_attention_head)

    fwd = jax.jit(functools.partial(transformer_listener_forward,
                                    nhead=n_attention_head, stride=stride))
    out = fwd(x, params)
    jax.block_until_ready(out)

    T_out = (L + 2 * (5 // 2) - 5) // stride + 1
    assert out.shape == (B, T_out, conv_feature_dim), out.shape
    assert bool(jnp.all(jnp.isfinite(out)))
    print("KERNEL_OK")
</pallas_src>

<mosaic_0001>
module attributes {stable_mosaic.version = 11 : i64} {
  func.func @_mm_kernel(%arg0: i32, %arg1: i32, %arg2: i32, %arg3: memref<8x128xf32, #tpu.memory_space<vmem>>, %arg4: memref<128x128xf32, #tpu.memory_space<vmem>>, %arg5: memref<1x128xf32, #tpu.memory_space<vmem>>, %arg6: memref<8x128xf32, #tpu.memory_space<vmem>>, %arg7: memref<8x128xf32, #tpu.memory_space<vmem>>) attributes {dimension_semantics = [#tpu.dimension_semantics<parallel>, #tpu.dimension_semantics<parallel>, #tpu.dimension_semantics<arbitrary>], iteration_bounds = array<i64: 1, 1, 1>, scalar_prefetch = 0 : i64, scratch_operands = 1 : i64, tpu.core_type = #tpu.core_type<tc>, window_params = [{transform_indices = @transform_0, window_bounds = array<i64: 8, 128>}, {transform_indices = @transform_1, window_bounds = array<i64: 128, 128>}, {transform_indices = @transform_2, window_bounds = array<i64: 1, 128>}, {transform_indices = @transform_3, window_bounds = array<i64: 8, 128>}]} {
    %c0_i32 = arith.constant 0 : i32
    %0 = arith.cmpi eq, %arg2, %c0_i32 : i32
    %1 = arith.extui %0 : i1 to i32
    %c0_i32_0 = arith.constant 0 : i32
    %2 = arith.cmpi ne, %1, %c0_i32_0 : i32
    scf.if %2 {
      %cst_10 = arith.constant 0.000000e+00 : f32
      %14 = vector.broadcast %cst_10 : f32 to vector<8x128xf32>
      %c0_11 = arith.constant 0 : index
      %c0_12 = arith.constant 0 : index
      %15 = vector.load %arg7[%c0_11, %c0_12] : memref<8x128xf32, #tpu.memory_space<vmem>>, vector<8x128xf32>
      tpu.vector_store %arg7[%c0_11, %c0_12], %14 {strides = array<i32>} : memref<8x128xf32, #tpu.memory_space<vmem>>, vector<8x128xf32>,
    } else {
    }
    %c0 = arith.constant 0 : index
    %c0_1 = arith.constant 0 : index
    %3 = vector.load %arg7[%c0, %c0_1] : memref<8x128xf32, #tpu.memory_space<vmem>>, vector<8x128xf32>
    %c0_2 = arith.constant 0 : index
    %c0_3 = arith.constant 0 : index
    %4 = vector.load %arg3[%c0_2, %c0_3] : memref<8x128xf32, #tpu.memory_space<vmem>>, vector<8x128xf32>
    %5 = arith.truncf %4 : vector<8x128xf32> to vector<8x128xbf16>
    %c0_4 = arith.constant 0 : index
    %c0_5 = arith.constant 0 : index
    %6 = vector.load %arg4[%c0_4, %c0_5] : memref<128x128xf32, #tpu.memory_space<vmem>>, vector<128x128xf32>
    %7 = arith.truncf %6 : vector<128x128xf32> to vector<128x128xbf16>
    %cst = arith.constant dense<0.000000e+00> : vector<8x128xf32>
    %8 = tpu.matmul %5, %7, %cst {dimension_numbers = #tpu.dot_dimension_numbers<[1], [0], [0], [1], [0, 0, 1, 1], [], []>} : vector<8x128xbf16>, vector<128x128xbf16>, vector<8x128xf32> -> vector<8x128xf32>
    %9 = arith.addf %3, %8 : vector<8x128xf32>
    %c0_6 = arith.constant 0 : index
    %c0_7 = arith.constant 0 : index
    %10 = vector.load %arg7[%c0_6, %c0_7] : memref<8x128xf32, #tpu.memory_space<vmem>>, vector<8x128xf32>
    tpu.vector_store %arg7[%c0_6, %c0_7], %9 {strides = array<i32>} : memref<8x128xf32, #tpu.memory_space<vmem>>, vector<8x128xf32>,
    %c0_i32_8 = arith.constant 0 : i32
    %11 = arith.cmpi eq, %arg2, %c0_i32_8 : i32
    %12 = arith.extui %11 : i1 to i32
    %c0_i32_9 = arith.constant 0 : i32
    %13 = arith.cmpi ne, %12, %c0_i32_9 : i32
    scf.if %13 {
      %c0_10 = arith.constant 0 : index
      %c0_11 = arith.constant 0 : index
      %14 = vector.load %arg7[%c0_10, %c0_11] : memref<8x128xf32, #tpu.memory_space<vmem>>, vector<8x128xf32>
      %c0_12 = arith.constant 0 : index
      %c0_13 = arith.constant 0 : index
      %15 = vector.load %arg5[%c0_12, %c0_13] : memref<1x128xf32, #tpu.memory_space<vmem>>, vector<1x128xf32>
      %16 = vector.broadcast %15 : vector<1x128xf32> to vector<8x128xf32>
      %17 = arith.addf %14, %16 : vector<8x128xf32>
      %c0_14 = arith.constant 0 : index
      %c0_15 = arith.constant 0 : index
      %18 = vector.load %arg6[%c0_14, %c0_15] : memref<8x128xf32, #tpu.memory_space<vmem>>, vector<8x128xf32>
      tpu.vector_store %arg6[%c0_14, %c0_15], %17 {strides = array<i32>} : memref<8x128xf32, #tpu.memory_space<vmem>>, vector<8x128xf32>,
    } else {
    }
    return
  }
  func.func @transform_0(%arg0: i32, %arg1: i32, %arg2: i32) -> (i32, i32) {
    %c0_i32 = arith.constant 0 : i32
    return %arg0, %arg2 : i32, i32
  }
  func.func @transform_1(%arg0: i32, %arg1: i32, %arg2: i32) -> (i32, i32) {
    %c0_i32 = arith.constant 0 : i32
    return %arg2, %arg1 : i32, i32
  }
  func.func @transform_2(%arg0: i32, %arg1: i32, %arg2: i32) -> (i32, i32) {
    %c0_i32 = arith.constant 0 : i32
    %c0_i32_0 = arith.constant 0 : i32
    return %c0_i32, %arg1 : i32, i32
  }
  func.func @transform_3(%arg0: i32, %arg1: i32, %arg2: i32) -> (i32, i32) {
    %c0_i32 = arith.constant 0 : i32
    return %arg0, %arg1 : i32, i32
  }
}

module attributes {stable_mosaic.version = 11 : i64} {
  func.func @_mm_kernel(%arg0: i32, %arg1: i32, %arg2: i32, %arg3: memref<8x128xf32, #tpu.memory_space<vmem>>, %arg4: memref<128x384xf32, #tpu.memory_space<vmem>>, %arg5: memref<1x384xf32, #tpu.memory_space<vmem>>, %arg6: memref<8x384xf32, #tpu.memory_space<vmem>>, %arg7: memref<8x384xf32, #tpu.memory_space<vmem>>) attributes {dimension_semantics = [#tpu.dimension_semantics<parallel>, #tpu.dimension_semantics<parallel>, #tpu.dimension_semantics<arbitrary>], iteration_bounds = array<i64: 1, 1, 1>, scalar_prefetch = 0 : i64, scratch_operands = 1 : i64, tpu.core_type = #tpu.core_type<tc>, window_params = [{transform_indices = @transform_0, window_bounds = array<i64: 8, 128>}, {transform_indices = @transform_1, window_bounds = array<i64: 128, 384>}, {transform_indices = @transform_2, window_bounds = array<i64: 1, 384>}, {transform_indices = @transform_3, window_bounds = array<i64: 8, 384>}]} {
    %c0_i32 = arith.constant 0 : i32
    %0 = arith.cmpi eq, %arg2, %c0_i32 : i32
    %1 = arith.extui %0 : i1 to i32
    %c0_i32_0 = arith.constant 0 : i32
    %2 = arith.cmpi ne, %1, %c0_i32_0 : i32
    scf.if %2 {
      %cst_10 = arith.constant 0.000000e+00 : f32
      %14 = vector.broadcast %cst_10 : f32 to vector<8x384xf32>
      %c0_11 = arith.constant 0 : index
      %c0_12 = arith.constant 0 : index
      %15 = vector.load %arg7[%c0_11, %c0_12] : memref<8x384xf32, #tpu.memory_space<vmem>>, vector<8x384xf32>
      tpu.vector_store %arg7[%c0_11, %c0_12], %14 {strides = array<i32>} : memref<8x384xf32, #tpu.memory_space<vmem>>, vector<8x384xf32>,
    } else {
    }
    %c0 = arith.constant 0 : index
    %c0_1 = arith.constant 0 : index
    %3 = vector.load %arg7[%c0, %c0_1] : memref<8x384xf32, #tpu.memory_space<vmem>>, vector<8x384xf32>
    %c0_2 = arith.constant 0 : index
    %c0_3 = arith.constant 0 : index
    %4 = vector.load %arg3[%c0_2, %c0_3] : memref<8x128xf32, #tpu.memory_space<vmem>>, vector<8x128xf32>
    %5 = arith.truncf %4 : vector<8x128xf32> to vector<8x128xbf16>
    %c0_4 = arith.constant 0 : index
    %c0_5 = arith.constant 0 : index
    %6 = vector.load %arg4[%c0_4, %c0_5] : memref<128x384xf32, #tpu.memory_space<vmem>>, vector<128x384xf32>
    %7 = arith.truncf %6 : vector<128x384xf32> to vector<128x384xbf16>
    %cst = arith.constant dense<0.000000e+00> : vector<8x384xf32>
    %8 = tpu.matmul %5, %7, %cst {dimension_numbers = #tpu.dot_dimension_numbers<[1], [0], [0], [1], [0, 0, 1, 1], [], []>} : vector<8x128xbf16>, vector<128x384xbf16>, vector<8x384xf32> -> vector<8x384xf32>
    %9 = arith.addf %3, %8 : vector<8x384xf32>
    %c0_6 = arith.constant 0 : index
    %c0_7 = arith.constant 0 : index
    %10 = vector.load %arg7[%c0_6, %c0_7] : memref<8x384xf32, #tpu.memory_space<vmem>>, vector<8x384xf32>
    tpu.vector_store %arg7[%c0_6, %c0_7], %9 {strides = array<i32>} : memref<8x384xf32, #tpu.memory_space<vmem>>, vector<8x384xf32>,
    %c0_i32_8 = arith.constant 0 : i32
    %11 = arith.cmpi eq, %arg2, %c0_i32_8 : i32
    %12 = arith.extui %11 : i1 to i32
    %c0_i32_9 = arith.constant 0 : i32
    %13 = arith.cmpi ne, %12, %c0_i32_9 : i32
    scf.if %13 {
      %c0_10 = arith.constant 0 : index
      %c0_11 = arith.constant 0 : index
      %14 = vector.load %arg7[%c0_10, %c0_11] : memref<8x384xf32, #tpu.memory_space<vmem>>, vector<8x384xf32>
      %c0_12 = arith.constant 0 : index
      %c0_13 = arith.constant 0 : index
      %15 = vector.load %arg5[%c0_12, %c0_13] : memref<1x384xf32, #tpu.memory_space<vmem>>, vector<1x384xf32>
      %16 = vector.broadcast %15 : vector<1x384xf32> to vector<8x384xf32>
      %17 = arith.addf %14, %16 : vector<8x384xf32>
      %c0_14 = arith.constant 0 : index
      %c0_15 = arith.constant 0 : index
      %18 = vector.load %arg6[%c0_14, %c0_15] : memref<8x384xf32, #tpu.memory_space<vmem>>, vector<8x384xf32>
      tpu.vector_store %arg6[%c0_14, %c0_15], %17 {strides = array<i32>} : memref<8x384xf32, #tpu.memory_space<vmem>>, vector<8x384xf32>,
    } else {
    }
    return
  }
  func.func @transform_0(%arg0: i32, %arg1: i32, %arg2: i32) -> (i32, i32) {
    %c0_i32 = arith.constant 0 : i32
    return %arg0, %arg2 : i32, i32
  }
  func.func @transform_1(%arg0: i32, %arg1: i32, %arg2: i32) -> (i32, i32) {
    %c0_i32 = arith.constant 0 : i32
    return %arg2, %arg1 : i32, i32
  }
  func.func @transform_2(%arg0: i32, %arg1: i32, %arg2: i32) -> (i32, i32) {
    %c0_i32 = arith.constant 0 : i32
    %c0_i32_0 = arith.constant 0 : i32
    return %c0_i32, %arg1 : i32, i32
  }
  func.func @transform_3(%arg0: i32, %arg1: i32, %arg2: i32) -> (i32, i32) {
    %c0_i32 = arith.constant 0 : i32
    return %arg0, %arg1 : i32, i32
  }
}

module attributes {stable_mosaic.version = 11 : i64} {
  func.func @_attn_kernel(%arg0: i32, %arg1: memref<16x2x32xf32, #tpu.memory_space<vmem>>, %arg2: memref<16x2x32xf32, #tpu.memory_space<vmem>>, %arg3: memref<16x2x32xf32, #tpu.memory_space<vmem>>, %arg4: memref<16x2x32xf32, #tpu.memory_space<vmem>>) attributes {dimension_semantics = [#tpu.dimension_semantics<parallel>], iteration_bounds = array<i64: 1>, scalar_prefetch = 0 : i64, scratch_operands = 0 : i64, tpu.core_type = #tpu.core_type<tc>, window_params = [{transform_indices = @transform_0, window_bounds = array<i64: 16, 2, 32>}, {transform_indices = @transform_1, window_bounds = array<i64: 16, 2, 32>}, {transform_indices = @transform_2, window_bounds = array<i64: 16, 2, 32>}, {transform_indices = @transform_3, window_bounds = array<i64: 16, 2, 32>}]} {
    %c0 = arith.constant 0 : index
    %c0_0 = arith.constant 0 : index
    %c0_1 = arith.constant 0 : index
    %0 = vector.load %arg1[%c0, %c0_0, %c0_1] : memref<16x2x32xf32, #tpu.memory_space<vmem>>, vector<16x2x32xf32>
    %c0_2 = arith.constant 0 : index
    %c0_3 = arith.constant 0 : index
    %c0_4 = arith.constant 0 : index
    %1 = vector.load %arg2[%c0_2, %c0_3, %c0_4] : memref<16x2x32xf32, #tpu.memory_space<vmem>>, vector<16x2x32xf32>
    %c0_5 = arith.constant 0 : index
    %c0_6 = arith.constant 0 : index
    %c0_7 = arith.constant 0 : index
    %2 = vector.load %arg3[%c0_5, %c0_6, %c0_7] : memref<16x2x32xf32, #tpu.memory_space<vmem>>, vector<16x2x32xf32>
    "tpu.trace_start"() <{level = 10 : i32, message = "bqd,bkd->bqk"}> : () -> ()
    %cst = arith.constant dense<0.000000e+00> : vector<16x2x2xf32>
    %3 = tpu.matmul %0, %1, %cst {dimension_numbers = #tpu.dot_dimension_numbers<[2], [2], [1], [1], [0, 0, 0, 1, 1, 1], [0], [0]>} : vector<16x2x32xf32>, vector<16x2x32xf32>, vector<16x2x2xf32> -> vector<16x2x2xf32>
    "tpu.trace_stop"() : () -> ()
    %cst_8 = arith.constant 0.176776692 : f32
    %4 = vector.broadcast %cst_8 : f32 to vector<16x2x2xf32>
    %5 = arith.mulf %3, %4 : vector<16x2x2xf32>
    %cst_9 = arith.constant dense<0xFF800000> : vector<16x2xf32>
    %6 = vector.multi_reduction <maximumf>, %5, %cst_9 [2] : vector<16x2x2xf32> to vector<16x2xf32>
    %7 = vector.shape_cast %6 : vector<16x2xf32> to vector<16x2x1xf32>
    %8 = vector.broadcast %7 : vector<16x2x1xf32> to vector<16x2x2xf32>
    %9 = arith.subf %5, %8 : vector<16x2x2xf32>
    %10 = math.exp %9 : vector<16x2x2xf32>
    %cst_10 = arith.constant dense<0.000000e+00> : vector<16x2xf32>
    %11 = vector.multi_reduction <add>, %10, %cst_10 [2] : vector<16x2x2xf32> to vector<16x2xf32>
    %12 = vector.shape_cast %11 : vector<16x2xf32> to vector<16x2x1xf32>
    %13 = vector.broadcast %12 : vector<16x2x1xf32> to vector<16x2x2xf32>
    %14 = arith.divf %10, %13 : vector<16x2x2xf32>
    "tpu.trace_start"() <{level = 10 : i32, message = "bqk,bkd->bqd"}> : () -> ()
    %cst_11 = arith.constant dense<0.000000e+00> : vector<16x2x32xf32>
    %15 = tpu.matmul %14, %2, %cst_11 {dimension_numbers = #tpu.dot_dimension_numbers<[2], [1], [1], [2], [0, 0, 0, 1, 1, 2], [0], [0]>} : vector<16x2x2xf32>, vector<16x2x32xf32>, vector<16x2x32xf32> -> vector<16x2x32xf32>
    "tpu.trace_stop"() : () -> ()
    %c0_12 = arith.constant 0 : index
    %c0_13 = arith.constant 0 : index
    %c0_14 = arith.constant 0 : index
    %16 = vector.load %arg4[%c0_12, %c0_13, %c0_14] : memref<16x2x32xf32, #tpu.memory_space<vmem>>, vector<16x2x32xf32>
    tpu.vector_store %arg4[%c0_12, %c0_13, %c0_14], %15 {strides = array<i32>} : memref<16x2x32xf32, #tpu.memory_space<vmem>>, vector<16x2x32xf32>,
    return
  }
  func.func @transform_0(%arg0: i32) -> (i32, i32, i32) {
    %c0_i32 = arith.constant 0 : i32
    %c0_i32_0 = arith.constant 0 : i32
    %c0_i32_1 = arith.constant 0 : i32
    return %arg0, %c0_i32, %c0_i32_0 : i32, i32, i32
  }
  func.func @transform_1(%arg0: i32) -> (i32, i32, i32) {
    %c0_i32 = arith.constant 0 : i32
    %c0_i32_0 = arith.constant 0 : i32
    %c0_i32_1 = arith.constant 0 : i32
    return %arg0, %c0_i32, %c0_i32_0 : i32, i32, i32
  }
  func.func @transform_2(%arg0: i32) -> (i32, i32, i32) {
    %c0_i32 = arith.constant 0 : i32
    %c0_i32_0 = arith.constant 0 : i32
    %c0_i32_1 = arith.constant 0 : i32
    return %arg0, %c0_i32, %c0_i32_0 : i32, i32, i32
  }
  func.func @transform_3(%arg0: i32) -> (i32, i32, i32) {
    %c0_i32 = arith.constant 0 : i32
    %c0_i32_0 = arith.constant 0 : i32
    %c0_i32_1 = arith.constant 0 : i32
    return %arg0, %c0_i32, %c0_i32_0 : i32, i32, i32
  }
}

module attributes {stable_mosaic.version = 11 : i64} {
  func.func @_mm_kernel(%arg0: i32, %arg1: i32, %arg2: i32, %arg3: memref<8x128xf32, #tpu.memory_space<vmem>>, %arg4: memref<128x256xf32, #tpu.memory_space<vmem>>, %arg5: memref<1x256xf32, #tpu.memory_space<vmem>>, %arg6: memref<8x256xf32, #tpu.memory_space<vmem>>, %arg7: memref<8x256xf32, #tpu.memory_space<vmem>>) attributes {dimension_semantics = [#tpu.dimension_semantics<parallel>, #tpu.dimension_semantics<parallel>, #tpu.dimension_semantics<arbitrary>], iteration_bounds = array<i64: 1, 1, 1>, scalar_prefetch = 0 : i64, scratch_operands = 1 : i64, tpu.core_type = #tpu.core_type<tc>, window_params = [{transform_indices = @transform_0, window_bounds = array<i64: 8, 128>}, {transform_indices = @transform_1, window_bounds = array<i64: 128, 256>}, {transform_indices = @transform_2, window_bounds = array<i64: 1, 256>}, {transform_indices = @transform_3, window_bounds = array<i64: 8, 256>}]} {
    %c0_i32 = arith.constant 0 : i32
    %0 = arith.cmpi eq, %arg2, %c0_i32 : i32
    %1 = arith.extui %0 : i1 to i32
    %c0_i32_0 = arith.constant 0 : i32
    %2 = arith.cmpi ne, %1, %c0_i32_0 : i32
    scf.if %2 {
      %cst_10 = arith.constant 0.000000e+00 : f32
      %14 = vector.broadcast %cst_10 : f32 to vector<8x256xf32>
      %c0_11 = arith.constant 0 : index
      %c0_12 = arith.constant 0 : index
      %15 = vector.load %arg7[%c0_11, %c0_12] : memref<8x256xf32, #tpu.memory_space<vmem>>, vector<8x256xf32>
      tpu.vector_store %arg7[%c0_11, %c0_12], %14 {strides = array<i32>} : memref<8x256xf32, #tpu.memory_space<vmem>>, vector<8x256xf32>,
    } else {
    }
    %c0 = arith.constant 0 : index
    %c0_1 = arith.constant 0 : index
    %3 = vector.load %arg7[%c0, %c0_1] : memref<8x256xf32, #tpu.memory_space<vmem>>, vector<8x256xf32>
    %c0_2 = arith.constant 0 : index
    %c0_3 = arith.constant 0 : index
    %4 = vector.load %arg3[%c0_2, %c0_3] : memref<8x128xf32, #tpu.memory_space<vmem>>, vector<8x128xf32>
    %5 = arith.truncf %4 : vector<8x128xf32> to vector<8x128xbf16>
    %c0_4 = arith.constant 0 : index
    %c0_5 = arith.constant 0 : index
    %6 = vector.load %arg4[%c0_4, %c0_5] : memref<128x256xf32, #tpu.memory_space<vmem>>, vector<128x256xf32>
    %7 = arith.truncf %6 : vector<128x256xf32> to vector<128x256xbf16>
    %cst = arith.constant dense<0.000000e+00> : vector<8x256xf32>
    %8 = tpu.matmul %5, %7, %cst {dimension_numbers = #tpu.dot_dimension_numbers<[1], [0], [0], [1], [0, 0, 1, 1], [], []>} : vector<8x128xbf16>, vector<128x256xbf16>, vector<8x256xf32> -> vector<8x256xf32>
    %9 = arith.addf %3, %8 : vector<8x256xf32>
    %c0_6 = arith.constant 0 : index
    %c0_7 = arith.constant 0 : index
    %10 = vector.load %arg7[%c0_6, %c0_7] : memref<8x256xf32, #tpu.memory_space<vmem>>, vector<8x256xf32>
    tpu.vector_store %arg7[%c0_6, %c0_7], %9 {strides = array<i32>} : memref<8x256xf32, #tpu.memory_space<vmem>>, vector<8x256xf32>,
    %c0_i32_8 = arith.constant 0 : i32
    %11 = arith.cmpi eq, %arg2, %c0_i32_8 : i32
    %12 = arith.extui %11 : i1 to i32
    %c0_i32_9 = arith.constant 0 : i32
    %13 = arith.cmpi ne, %12, %c0_i32_9 : i32
    scf.if %13 {
      %c0_10 = arith.constant 0 : index
      %c0_11 = arith.constant 0 : index
      %14 = vector.load %arg7[%c0_10, %c0_11] : memref<8x256xf32, #tpu.memory_space<vmem>>, vector<8x256xf32>
      %c0_12 = arith.constant 0 : index
      %c0_13 = arith.constant 0 : index
      %15 = vector.load %arg5[%c0_12, %c0_13] : memref<1x256xf32, #tpu.memory_space<vmem>>, vector<1x256xf32>
      %16 = vector.broadcast %15 : vector<1x256xf32> to vector<8x256xf32>
      %17 = arith.addf %14, %16 : vector<8x256xf32>
      %cst_14 = arith.constant 0.000000e+00 : f32
      %18 = vector.broadcast %cst_14 : f32 to vector<8x256xf32>
      %19 = arith.maximumf %17, %18 : vector<8x256xf32>
      %c0_15 = arith.constant 0 : index
      %c0_16 = arith.constant 0 : index
      %20 = vector.load %arg6[%c0_15, %c0_16] : memref<8x256xf32, #tpu.memory_space<vmem>>, vector<8x256xf32>
      tpu.vector_store %arg6[%c0_15, %c0_16], %19 {strides = array<i32>} : memref<8x256xf32, #tpu.memory_space<vmem>>, vector<8x256xf32>,
    } else {
    }
    return
  }
  func.func @transform_0(%arg0: i32, %arg1: i32, %arg2: i32) -> (i32, i32) {
    %c0_i32 = arith.constant 0 : i32
    return %arg0, %arg2 : i32, i32
  }
  func.func @transform_1(%arg0: i32, %arg1: i32, %arg2: i32) -> (i32, i32) {
    %c0_i32 = arith.constant 0 : i32
    return %arg2, %arg1 : i32, i32
  }
  func.func @transform_2(%arg0: i32, %arg1: i32, %arg2: i32) -> (i32, i32) {
    %c0_i32 = arith.constant 0 : i32
    %c0_i32_0 = arith.constant 0 : i32
    return %c0_i32, %arg1 : i32, i32
  }
  func.func @transform_3(%arg0: i32, %arg1: i32, %arg2: i32) -> (i32, i32) {
    %c0_i32 = arith.constant 0 : i32
    return %arg0, %arg1 : i32, i32
  }
}

module attributes {stable_mosaic.version = 11 : i64} {
  func.func @_mm_res_ln_kernel(%arg0: i32, %arg1: i32, %arg2: memref<8x128xf32, #tpu.memory_space<vmem>>, %arg3: memref<128x128xf32, #tpu.memory_space<vmem>>, %arg4: memref<1x128xf32, #tpu.memory_space<vmem>>, %arg5: memref<8x128xf32, #tpu.memory_space<vmem>>, %arg6: memref<1x128xf32, #tpu.memory_space<vmem>>, %arg7: memref<1x128xf32, #tpu.memory_space<vmem>>, %arg8: memref<8x128xf32, #tpu.memory_space<vmem>>, %arg9: memref<8x128xf32, #tpu.memory_space<vmem>>) attributes {dimension_semantics = [#tpu.dimension_semantics<parallel>, #tpu.dimension_semantics<arbitrary>], iteration_bounds = array<i64: 1, 1>, scalar_prefetch = 0 : i64, scratch_operands = 1 : i64, tpu.core_type = #tpu.core_type<tc>, window_params = [{transform_indices = @transform_0, window_bounds = array<i64: 8, 128>}, {transform_indices = @transform_1, window_bounds = array<i64: 128, 128>}, {pipeline_mode = #tpu.pipeline_mode<synchronous>, transform_indices = @transform_2, window_bounds = array<i64: 1, 128>}, {transform_indices = @transform_3, window_bounds = array<i64: 8, 128>}, {pipeline_mode = #tpu.pipeline_mode<synchronous>, transform_indices = @transform_4, window_bounds = array<i64: 1, 128>}, {pipeline_mode = #tpu.pipeline_mode<synchronous>, transform_indices = @transform_5, window_bounds = array<i64: 1, 128>}, {transform_indices = @transform_6, window_bounds = array<i64: 8, 128>}]} {
    %c0_i32 = arith.constant 0 : i32
    %0 = arith.cmpi eq, %arg1, %c0_i32 : i32
    %1 = arith.extui %0 : i1 to i32
    %c0_i32_0 = arith.constant 0 : i32
    %2 = arith.cmpi ne, %1, %c0_i32_0 : i32
    scf.if %2 {
      %cst_10 = arith.constant 0.000000e+00 : f32
      %14 = vector.broadcast %cst_10 : f32 to vector<8x128xf32>
      %c0_11 = arith.constant 0 : index
      %c0_12 = arith.constant 0 : index
      %15 = vector.load %arg9[%c0_11, %c0_12] : memref<8x128xf32, #tpu.memory_space<vmem>>, vector<8x128xf32>
      tpu.vector_store %arg9[%c0_11, %c0_12], %14 {strides = array<i32>} : memref<8x128xf32, #tpu.memory_space<vmem>>, vector<8x128xf32>,
    } else {
    }
    %c0 = arith.constant 0 : index
    %c0_1 = arith.constant 0 : index
    %3 = vector.load %arg9[%c0, %c0_1] : memref<8x128xf32, #tpu.memory_space<vmem>>, vector<8x128xf32>
    %c0_2 = arith.constant 0 : index
    %c0_3 = arith.constant 0 : index
    %4 = vector.load %arg2[%c0_2, %c0_3] : memref<8x128xf32, #tpu.memory_space<vmem>>, vector<8x128xf32>
    %5 = arith.truncf %4 : vector<8x128xf32> to vector<8x128xbf16>
    %c0_4 = arith.constant 0 : index
    %c0_5 = arith.constant 0 : index
    %6 = vector.load %arg3[%c0_4, %c0_5] : memref<128x128xf32, #tpu.memory_space<vmem>>, vector<128x128xf32>
    %7 = arith.truncf %6 : vector<128x128xf32> to vector<128x128xbf16>
    %cst = arith.constant dense<0.000000e+00> : vector<8x128xf32>
    %8 = tpu.matmul %5, %7, %cst {dimension_numbers = #tpu.dot_dimension_numbers<[1], [0], [0], [1], [0, 0, 1, 1], [], []>} : vector<8x128xbf16>, vector<128x128xbf16>, vector<8x128xf32> -> vector<8x128xf32>
    %9 = arith.addf %3, %8 : vector<8x128xf32>
    %c0_6 = arith.constant 0 : index
    %c0_7 = arith.constant 0 : index
    %10 = vector.load %arg9[%c0_6, %c0_7] : memref<8x128xf32, #tpu.memory_space<vmem>>, vector<8x128xf32>
    tpu.vector_store %arg9[%c0_6, %c0_7], %9 {strides = array<i32>} : memref<8x128xf32, #tpu.memory_space<vmem>>, vector<8x128xf32>,
    %c0_i32_8 = arith.constant 0 : i32
    %11 = arith.cmpi eq, %arg1, %c0_i32_8 : i32
    %12 = arith.extui %11 : i1 to i32
    %c0_i32_9 = arith.constant 0 : i32
    %13 = arith.cmpi ne, %12, %c0_i32_9 : i32
    scf.if %13 {
      %c0_10 = arith.constant 0 : index
      %c0_11 = arith.constant 0 : index
      %14 = vector.load %arg9[%c0_10, %c0_11] : memref<8x128xf32, #tpu.memory_space<vmem>>, vector<8x128xf32>
      %c0_12 = arith.constant 0 : index
      %c0_13 = arith.constant 0 : index
      %15 = vector.load %arg4[%c0_12, %c0_13] : memref<1x128xf32, #tpu.memory_space<vmem>>, vector<1x128xf32>
      %16 = vector.broadcast %15 : vector<1x128xf32> to vector<8x128xf32>
      %17 = arith.addf %14, %16 : vector<8x128xf32>
      %c0_14 = arith.constant 0 : index
      %c0_15 = arith.constant 0 : index
      %18 = vector.load %arg5[%c0_14, %c0_15] : memref<8x128xf32, #tpu.memory_space<vmem>>, vector<8x128xf32>
      %19 = arith.addf %17, %18 : vector<8x128xf32>
      %cst_16 = arith.constant dense<0.000000e+00> : vector<8xf32>
      %20 = vector.multi_reduction <add>, %19, %cst_16 [1] : vector<8x128xf32> to vector<8xf32>
      %21 = vector.shape_cast %20 : vector<8xf32> to vector<8x1xf32>
      %cst_17 = arith.constant 1.280000e+02 : f32
      %22 = vector.broadcast %cst_17 : f32 to vector<8x1xf32>
      %23 = arith.divf %21, %22 : vector<8x1xf32>
      %24 = vector.broadcast %23 : vector<8x1xf32> to vector<8x128xf32>
      %25 = arith.subf %19, %24 : vector<8x128xf32>
      %26 = arith.mulf %25, %25 : vector<8x128xf32>
      %cst_18 = arith.constant dense<0.000000e+00> : vector<8xf32>
      %27 = vector.multi_reduction <add>, %26, %cst_18 [1] : vector<8x128xf32> to vector<8xf32>
      %28 = vector.shape_cast %27 : vector<8xf32> to vector<8x1xf32>
      %cst_19 = arith.constant 1.280000e+02 : f32
      %29 = vector.broadcast %cst_19 : f32 to vector<8x1xf32>
      %30 = arith.divf %28, %29 : vector<8x1xf32>
      %31 = vector.broadcast %23 : vector<8x1xf32> to vector<8x128xf32>
      %32 = arith.subf %19, %31 : vector<8x128xf32>
      %cst_20 = arith.constant 9.99999974E-6 : f32
      %33 = vector.broadcast %cst_20 : f32 to vector<8x1xf32>
      %34 = arith.addf %30, %33 : vector<8x1xf32>
      %35 = math.rsqrt %34 : vector<8x1xf32>
      %36 = vector.broadcast %35 : vector<8x1xf32> to vector<8x128xf32>
      %37 = arith.mulf %32, %36 : vector<8x128xf32>
      %c0_21 = arith.constant 0 : index
      %c0_22 = arith.constant 0 : index
      %38 = vector.load %arg6[%c0_21, %c0_22] : memref<1x128xf32, #tpu.memory_space<vmem>>, vector<1x128xf32>
      %39 = vector.broadcast %38 : vector<1x128xf32> to vector<8x128xf32>
      %40 = arith.mulf %37, %39 : vector<8x128xf32>
      %c0_23 = arith.constant 0 : index
      %c0_24 = arith.constant 0 : index
      %41 = vector.load %arg7[%c0_23, %c0_24] : memref<1x128xf32, #tpu.memory_space<vmem>>, vector<1x128xf32>
      %42 = vector.broadcast %41 : vector<1x128xf32> to vector<8x128xf32>
      %43 = arith.addf %40, %42 : vector<8x128xf32>
      %c0_25 = arith.constant 0 : index
      %c0_26 = arith.constant 0 : index
      %44 = vector.load %arg8[%c0_25, %c0_26] : memref<8x128xf32, #tpu.memory_space<vmem>>, vector<8x128xf32>
      tpu.vector_store %arg8[%c0_25, %c0_26], %43 {strides = array<i32>} : memref<8x128xf32, #tpu.memory_space<vmem>>, vector<8x128xf32>,
    } else {
    }
    return
  }
  func.func @transform_0(%arg0: i32, %arg1: i32) -> (i32, i32) {
    %c0_i32 = arith.constant 0 : i32
    return %arg0, %arg1 : i32, i32
  }
  func.func @transform_1(%arg0: i32, %arg1: i32) -> (i32, i32) {
    %c0_i32 = arith.constant 0 : i32
    %c0_i32_0 = arith.constant 0 : i32
    return %arg1, %c0_i32 : i32, i32
  }
  func.func @transform_2(%arg0: i32, %arg1: i32) -> (i32, i32) {
    %c0_i32 = arith.constant 0 : i32
    %c0_i32_0 = arith.constant 0 : i32
    %c0_i32_1 = arith.constant 0 : i32
    return %c0_i32, %c0_i32_0 : i32, i32
  }
  func.func @transform_3(%arg0: i32, %arg1: i32) -> (i32, i32) {
    %c0_i32 = arith.constant 0 : i32
    %c0_i32_0 = arith.constant 0 : i32
    return %arg0, %c0_i32 : i32, i32
  }
  func.func @transform_4(%arg0: i32, %arg1: i32) -> (i32, i32) {
    %c0_i32 = arith.constant 0 : i32
    %c0_i32_0 = arith.constant 0 : i32
    %c0_i32_1 = arith.constant 0 : i32
    return %c0_i32, %c0_i32_0 : i32, i32
  }
  func.func @transform_5(%arg0: i32, %arg1: i32) -> (i32, i32) {
    %c0_i32 = arith.constant 0 : i32
    %c0_i32_0 = arith.constant 0 : i32
    %c0_i32_1 = arith.constant 0 : i32
    return %c0_i32, %c0_i32_0 : i32, i32
  }
  func.func @transform_6(%arg0: i32, %arg1: i32) -> (i32, i32) {
    %c0_i32 = arith.constant 0 : i32
    %c0_i32_0 = arith.constant 0 : i32
    return %arg0, %c0_i32 : i32, i32
  }
}

module attributes {stable_mosaic.version = 11 : i64} {
  func.func @_mm_res_ln_kernel(%arg0: i32, %arg1: i32, %arg2: memref<8x256xf32, #tpu.memory_space<vmem>>, %arg3: memref<256x128xf32, #tpu.memory_space<vmem>>, %arg4: memref<1x128xf32, #tpu.memory_space<vmem>>, %arg5: memref<8x128xf32, #tpu.memory_space<vmem>>, %arg6: memref<1x128xf32, #tpu.memory_space<vmem>>, %arg7: memref<1x128xf32, #tpu.memory_space<vmem>>, %arg8: memref<8x128xf32, #tpu.memory_space<vmem>>, %arg9: memref<8x128xf32, #tpu.memory_space<vmem>>) attributes {dimension_semantics = [#tpu.dimension_semantics<parallel>, #tpu.dimension_semantics<arbitrary>], iteration_bounds = array<i64: 1, 1>, scalar_prefetch = 0 : i64, scratch_operands = 1 : i64, tpu.core_type = #tpu.core_type<tc>, window_params = [{transform_indices = @transform_0, window_bounds = array<i64: 8, 256>}, {transform_indices = @transform_1, window_bounds = array<i64: 256, 128>}, {pipeline_mode = #tpu.pipeline_mode<synchronous>, transform_indices = @transform_2, window_bounds = array<i64: 1, 128>}, {transform_indices = @transform_3, window_bounds = array<i64: 8, 128>}, {pipeline_mode = #tpu.pipeline_mode<synchronous>, transform_indices = @transform_4, window_bounds = array<i64: 1, 128>}, {pipeline_mode = #tpu.pipeline_mode<synchronous>, transform_indices = @transform_5, window_bounds = array<i64: 1, 128>}, {transform_indices = @transform_6, window_bounds = array<i64: 8, 128>}]} {
    %c0_i32 = arith.constant 0 : i32
    %0 = arith.cmpi eq, %arg1, %c0_i32 : i32
    %1 = arith.extui %0 : i1 to i32
    %c0_i32_0 = arith.constant 0 : i32
    %2 = arith.cmpi ne, %1, %c0_i32_0 : i32
    scf.if %2 {
      %cst_10 = arith.constant 0.000000e+00 : f32
      %14 = vector.broadcast %cst_10 : f32 to vector<8x128xf32>
      %c0_11 = arith.constant 0 : index
      %c0_12 = arith.constant 0 : index
      %15 = vector.load %arg9[%c0_11, %c0_12] : memref<8x128xf32, #tpu.memory_space<vmem>>, vector<8x128xf32>
      tpu.vector_store %arg9[%c0_11, %c0_12], %14 {strides = array<i32>} : memref<8x128xf32, #tpu.memory_space<vmem>>, vector<8x128xf32>,
    } else {
    }
    %c0 = arith.constant 0 : index
    %c0_1 = arith.constant 0 : index
    %3 = vector.load %arg9[%c0, %c0_1] : memref<8x128xf32, #tpu.memory_space<vmem>>, vector<8x128xf32>
    %c0_2 = arith.constant 0 : index
    %c0_3 = arith.constant 0 : index
    %4 = vector.load %arg2[%c0_2, %c0_3] : memref<8x256xf32, #tpu.memory_space<vmem>>, vector<8x256xf32>
    %5 = arith.truncf %4 : vector<8x256xf32> to vector<8x256xbf16>
    %c0_4 = arith.constant 0 : index
    %c0_5 = arith.constant 0 : index
    %6 = vector.load %arg3[%c0_4, %c0_5] : memref<256x128xf32, #tpu.memory_space<vmem>>, vector<256x128xf32>
    %7 = arith.truncf %6 : vector<256x128xf32> to vector<256x128xbf16>
    %cst = arith.constant dense<0.000000e+00> : vector<8x128xf32>
    %8 = tpu.matmul %5, %7, %cst {dimension_numbers = #tpu.dot_dimension_numbers<[1], [0], [0], [1], [0, 0, 1, 1], [], []>} : vector<8x256xbf16>, vector<256x128xbf16>, vector<8x128xf32> -> vector<8x128xf32>
    %9 = arith.addf %3, %8 : vector<8x128xf32>
    %c0_6 = arith.constant 0 : index
    %c0_7 = arith.constant 0 : index
    %10 = vector.load %arg9[%c0_6, %c0_7] : memref<8x128xf32, #tpu.memory_space<vmem>>, vector<8x128xf32>
    tpu.vector_store %arg9[%c0_6, %c0_7], %9 {strides = array<i32>} : memref<8x128xf32, #tpu.memory_space<vmem>>, vector<8x128xf32>,
    %c0_i32_8 = arith.constant 0 : i32
    %11 = arith.cmpi eq, %arg1, %c0_i32_8 : i32
    %12 = arith.extui %11 : i1 to i32
    %c0_i32_9 = arith.constant 0 : i32
    %13 = arith.cmpi ne, %12, %c0_i32_9 : i32
    scf.if %13 {
      %c0_10 = arith.constant 0 : index
      %c0_11 = arith.constant 0 : index
      %14 = vector.load %arg9[%c0_10, %c0_11] : memref<8x128xf32, #tpu.memory_space<vmem>>, vector<8x128xf32>
      %c0_12 = arith.constant 0 : index
      %c0_13 = arith.constant 0 : index
      %15 = vector.load %arg4[%c0_12, %c0_13] : memref<1x128xf32, #tpu.memory_space<vmem>>, vector<1x128xf32>
      %16 = vector.broadcast %15 : vector<1x128xf32> to vector<8x128xf32>
      %17 = arith.addf %14, %16 : vector<8x128xf32>
      %c0_14 = arith.constant 0 : index
      %c0_15 = arith.constant 0 : index
      %18 = vector.load %arg5[%c0_14, %c0_15] : memref<8x128xf32, #tpu.memory_space<vmem>>, vector<8x128xf32>
      %19 = arith.addf %17, %18 : vector<8x128xf32>
      %cst_16 = arith.constant dense<0.000000e+00> : vector<8xf32>
      %20 = vector.multi_reduction <add>, %19, %cst_16 [1] : vector<8x128xf32> to vector<8xf32>
      %21 = vector.shape_cast %20 : vector<8xf32> to vector<8x1xf32>
      %cst_17 = arith.constant 1.280000e+02 : f32
      %22 = vector.broadcast %cst_17 : f32 to vector<8x1xf32>
      %23 = arith.divf %21, %22 : vector<8x1xf32>
      %24 = vector.broadcast %23 : vector<8x1xf32> to vector<8x128xf32>
      %25 = arith.subf %19, %24 : vector<8x128xf32>
      %26 = arith.mulf %25, %25 : vector<8x128xf32>
      %cst_18 = arith.constant dense<0.000000e+00> : vector<8xf32>
      %27 = vector.multi_reduction <add>, %26, %cst_18 [1] : vector<8x128xf32> to vector<8xf32>
      %28 = vector.shape_cast %27 : vector<8xf32> to vector<8x1xf32>
      %cst_19 = arith.constant 1.280000e+02 : f32
      %29 = vector.broadcast %cst_19 : f32 to vector<8x1xf32>
      %30 = arith.divf %28, %29 : vector<8x1xf32>
      %31 = vector.broadcast %23 : vector<8x1xf32> to vector<8x128xf32>
      %32 = arith.subf %19, %31 : vector<8x128xf32>
      %cst_20 = arith.constant 9.99999974E-6 : f32
      %33 = vector.broadcast %cst_20 : f32 to vector<8x1xf32>
      %34 = arith.addf %30, %33 : vector<8x1xf32>
      %35 = math.rsqrt %34 : vector<8x1xf32>
      %36 = vector.broadcast %35 : vector<8x1xf32> to vector<8x128xf32>
      %37 = arith.mulf %32, %36 : vector<8x128xf32>
      %c0_21 = arith.constant 0 : index
      %c0_22 = arith.constant 0 : index
      %38 = vector.load %arg6[%c0_21, %c0_22] : memref<1x128xf32, #tpu.memory_space<vmem>>, vector<1x128xf32>
      %39 = vector.broadcast %38 : vector<1x128xf32> to vector<8x128xf32>
      %40 = arith.mulf %37, %39 : vector<8x128xf32>
      %c0_23 = arith.constant 0 : index
      %c0_24 = arith.constant 0 : index
      %41 = vector.load %arg7[%c0_23, %c0_24] : memref<1x128xf32, #tpu.memory_space<vmem>>, vector<1x128xf32>
      %42 = vector.broadcast %41 : vector<1x128xf32> to vector<8x128xf32>
      %43 = arith.addf %40, %42 : vector<8x128xf32>
      %c0_25 = arith.constant 0 : index
      %c0_26 = arith.constant 0 : index
      %44 = vector.load %arg8[%c0_25, %c0_26] : memref<8x128xf32, #tpu.memory_space<vmem>>, vector<8x128xf32>
      tpu.vector_store %arg8[%c0_25, %c0_26], %43 {strides = array<i32>} : memref<8x128xf32, #tpu.memory_space<vmem>>, vector<8x128xf32>,
    } else {
    }
    return
  }
  func.func @transform_0(%arg0: i32, %arg1: i32) -> (i32, i32) {
    %c0_i32 = arith.constant 0 : i32
    return %arg0, %arg1 : i32, i32
  }
  func.func @transform_1(%arg0: i32, %arg1: i32) -> (i32, i32) {
    %c0_i32 = arith.constant 0 : i32
    %c0_i32_0 = arith.constant 0 : i32
    return %arg1, %c0_i32 : i32, i32
  }
  func.func @transform_2(%arg0: i32, %arg1: i32) -> (i32, i32) {
    %c0_i32 = arith.constant 0 : i32
    %c0_i32_0 = arith.constant 0 : i32
    %c0_i32_1 = arith.constant 0 : i32
    return %c0_i32, %c0_i32_0 : i32, i32
  }
  func.func @transform_3(%arg0: i32, %arg1: i32) -> (i32, i32) {
    %c0_i32 = arith.constant 0 : i32
    %c0_i32_0 = arith.constant 0 : i32
    return %arg0, %c0_i32 : i32, i32
  }
  func.func @transform_4(%arg0: i32, %arg1: i32) -> (i32, i32) {
    %c0_i32 = arith.constant 0 : i32
    %c0_i32_0 = arith.constant 0 : i32
    %c0_i32_1 = arith.constant 0 : i32
    return %c0_i32, %c0_i32_0 : i32, i32
  }
  func.func @transform_5(%arg0: i32, %arg1: i32) -> (i32, i32) {
    %c0_i32 = arith.constant 0 : i32
    %c0_i32_0 = arith.constant 0 : i32
    %c0_i32_1 = arith.constant 0 : i32
    return %c0_i32, %c0_i32_0 : i32, i32
  }
  func.func @transform_6(%arg0: i32, %arg1: i32) -> (i32, i32) {
    %c0_i32 = arith.constant 0 : i32
    %c0_i32_0 = arith.constant 0 : i32
    return %arg0, %c0_i32 : i32, i32
  }
}

module attributes {stable_mosaic.version = 11 : i64} {
  func.func @_mm_res_ln_kernel(%arg0: i32, %arg1: i32, %arg2: memref<8x256xf32, #tpu.memory_space<vmem>>, %arg3: memref<256x128xf32, #tpu.memory_space<vmem>>, %arg4: memref<1x128xf32, #tpu.memory_space<vmem>>, %arg5: memref<8x128xf32, #tpu.memory_space<vmem>>, %arg6: memref<1x128xf32, #tpu.memory_space<vmem>>, %arg7: memref<1x128xf32, #tpu.memory_space<vmem>>, %arg8: memref<8x128xf32, #tpu.memory_space<vmem>>, %arg9: memref<8x128xf32, #tpu.memory_space<vmem>>) attributes {dimension_semantics = [#tpu.dimension_semantics<parallel>, #tpu.dimension_semantics<arbitrary>], iteration_bounds = array<i64: 1, 1>, scalar_prefetch = 0 : i64, scratch_operands = 1 : i64, tpu.core_type = #tpu.core_type<tc>, window_params = [{transform_indices = @transform_0, window_bounds = array<i64: 8, 256>}, {transform_indices = @transform_1, window_bounds = array<i64: 256, 128>}, {pipeline_mode = #tpu.pipeline_mode<synchronous>, transform_indices = @transform_2, window_bounds = array<i64: 1, 128>}, {transform_indices = @transform_3, window_bounds = array<i64: 8, 128>}, {pipeline_mode = #tpu.pipeline_mode<synchronous>, transform_indices = @transform_4, window_bounds = array<i64: 1, 128>}, {pipeline_mode = #tpu.pipeline_mode<synchronous>, transform_indices = @transform_5, window_bounds = array<i64: 1, 128>}, {transform_indices = @transform_6, window_bounds = array<i64: 8, 128>}]} {
    %c0_i32 = arith.constant 0 : i32
    %0 = arith.cmpi eq, %arg1, %c0_i32 : i32
    %1 = arith.extui %0 : i1 to i32
    %c0_i32_0 = arith.constant 0 : i32
    %2 = arith.cmpi ne, %1, %c0_i32_0 : i32
    scf.if %2 {
      %cst_10 = arith.constant 0.000000e+00 : f32
      %14 = vector.broadcast %cst_10 : f32 to vector<8x128xf32>
      %c0_11 = arith.constant 0 : index
      %c0_12 = arith.constant 0 : index
      %15 = vector.load %arg9[%c0_11, %c0_12] : memref<8x128xf32, #tpu.memory_space<vmem>>, vector<8x128xf32>
      tpu.vector_store %arg9[%c0_11, %c0_12], %14 {strides = array<i32>} : memref<8x128xf32, #tpu.memory_space<vmem>>, vector<8x128xf32>,
    } else {
    }
    %c0 = arith.constant 0 : index
    %c0_1 = arith.constant 0 : index
    %3 = vector.load %arg9[%c0, %c0_1] : memref<8x128xf32, #tpu.memory_space<vmem>>, vector<8x128xf32>
    %c0_2 = arith.constant 0 : index
    %c0_3 = arith.constant 0 : index
    %4 = vector.load %arg2[%c0_2, %c0_3] : memref<8x256xf32, #tpu.memory_space<vmem>>, vector<8x256xf32>
    %5 = arith.truncf %4 : vector<8x256xf32> to vector<8x256xbf16>
    %c0_4 = arith.constant 0 : index
    %c0_5 = arith.constant 0 : index
    %6 = vector.load %arg3[%c0_4, %c0_5] : memref<256x128xf32, #tpu.memory_space<vmem>>, vector<256x128xf32>
    %7 = arith.truncf %6 : vector<256x128xf32> to vector<256x128xbf16>
    %cst = arith.constant dense<0.000000e+00> : vector<8x128xf32>
    %8 = tpu.matmul %5, %7, %cst {dimension_numbers = #tpu.dot_dimension_numbers<[1], [0], [0], [1], [0, 0, 1, 1], [], []>} : vector<8x256xbf16>, vector<256x128xbf16>, vector<8x128xf32> -> vector<8x128xf32>
    %9 = arith.addf %3, %8 : vector<8x128xf32>
    %c0_6 = arith.constant 0 : index
    %c0_7 = arith.constant 0 : index
    %10 = vector.load %arg9[%c0_6, %c0_7] : memref<8x128xf32, #tpu.memory_space<vmem>>, vector<8x128xf32>
    tpu.vector_store %arg9[%c0_6, %c0_7], %9 {strides = array<i32>} : memref<8x128xf32, #tpu.memory_space<vmem>>, vector<8x128xf32>,
    %c0_i32_8 = arith.constant 0 : i32
    %11 = arith.cmpi eq, %arg1, %c0_i32_8 : i32
    %12 = arith.extui %11 : i1 to i32
    %c0_i32_9 = arith.constant 0 : i32
    %13 = arith.cmpi ne, %12, %c0_i32_9 : i32
    scf.if %13 {
      %c0_10 = arith.constant 0 : index
      %c0_11 = arith.constant 0 : index
      %14 = vector.load %arg9[%c0_10, %c0_11] : memref<8x128xf32, #tpu.memory_space<vmem>>, vector<8x128xf32>
      %c0_12 = arith.constant 0 : index
      %c0_13 = arith.constant 0 : index
      %15 = vector.load %arg4[%c0_12, %c0_13] : memref<1x128xf32, #tpu.memory_space<vmem>>, vector<1x128xf32>
      %16 = vector.broadcast %15 : vector<1x128xf32> to vector<8x128xf32>
      %17 = arith.addf %14, %16 : vector<8x128xf32>
      %c0_14 = arith.constant 0 : index
      %c0_15 = arith.constant 0 : index
      %18 = vector.load %arg5[%c0_14, %c0_15] : memref<8x128xf32, #tpu.memory_space<vmem>>, vector<8x128xf32>
      %19 = arith.addf %17, %18 : vector<8x128xf32>
      %cst_16 = arith.constant dense<0.000000e+00> : vector<8xf32>
      %20 = vector.multi_reduction <add>, %19, %cst_16 [1] : vector<8x128xf32> to vector<8xf32>
      %21 = vector.shape_cast %20 : vector<8xf32> to vector<8x1xf32>
      %cst_17 = arith.constant 1.280000e+02 : f32
      %22 = vector.broadcast %cst_17 : f32 to vector<8x1xf32>
      %23 = arith.divf %21, %22 : vector<8x1xf32>
      %24 = vector.broadcast %23 : vector<8x1xf32> to vector<8x128xf32>
      %25 = arith.subf %19, %24 : vector<8x128xf32>
      %26 = arith.mulf %25, %25 : vector<8x128xf32>
      %cst_18 = arith.constant dense<0.000000e+00> : vector<8xf32>
      %27 = vector.multi_reduction <add>, %26, %cst_18 [1] : vector<8x128xf32> to vector<8xf32>
      %28 = vector.shape_cast %27 : vector<8xf32> to vector<8x1xf32>
      %cst_19 = arith.constant 1.280000e+02 : f32
      %29 = vector.broadcast %cst_19 : f32 to vector<8x1xf32>
      %30 = arith.divf %28, %29 : vector<8x1xf32>
      %31 = vector.broadcast %23 : vector<8x1xf32> to vector<8x128xf32>
      %32 = arith.subf %19, %31 : vector<8x128xf32>
      %cst_20 = arith.constant 9.99999974E-6 : f32
      %33 = vector.broadcast %cst_20 : f32 to vector<8x1xf32>
      %34 = arith.addf %30, %33 : vector<8x1xf32>
      %35 = math.rsqrt %34 : vector<8x1xf32>
      %36 = vector.broadcast %35 : vector<8x1xf32> to vector<8x128xf32>
      %37 = arith.mulf %32, %36 : vector<8x128xf32>
      %c0_21 = arith.constant 0 : index
      %c0_22 = arith.constant 0 : index
      %38 = vector.load %arg6[%c0_21, %c0_22] : memref<1x128xf32, #tpu.memory_space<vmem>>, vector<1x128xf32>
      %39 = vector.broadcast %38 : vector<1x128xf32> to vector<8x128xf32>
      %40 = arith.mulf %37, %39 : vector<8x128xf32>
      %c0_23 = arith.constant 0 : index
      %c0_24 = arith.constant 0 : index
      %41 = vector.load %arg7[%c0_23, %c0_24] : memref<1x128xf32, #tpu.memory_space<vmem>>, vector<1x128xf32>
      %42 = vector.broadcast %41 : vector<1x128xf32> to vector<8x128xf32>
      %43 = arith.addf %40, %42 : vector<8x128xf32>
      %c0_25 = arith.constant 0 : index
      %c0_26 = arith.constant 0 : index
      %44 = vector.load %arg8[%c0_25, %c0_26] : memref<8x128xf32, #tpu.memory_space<vmem>>, vector<8x128xf32>
      tpu.vector_store %arg8[%c0_25, %c0_26], %43 {strides = array<i32>} : memref<8x128xf32, #tpu.memory_space<vmem>>, vector<8x128xf32>,
    } else {
    }
    return
  }
  func.func @transform_0(%arg0: i32, %arg1: i32) -> (i32, i32) {
    %c0_i32 = arith.constant 0 : i32
    return %arg0, %arg1 : i32, i32
  }
  func.func @transform_1(%arg0: i32, %arg1: i32) -> (i32, i32) {
    %c0_i32 = arith.constant 0 : i32
    %c0_i32_0 = arith.constant 0 : i32
    return %arg1, %c0_i32 : i32, i32
  }
  func.func @transform_2(%arg0: i32, %arg1: i32) -> (i32, i32) {
    %c0_i32 = arith.constant 0 : i32
    %c0_i32_0 = arith.constant 0 : i32
    %c0_i32_1 = arith.constant 0 : i32
    return %c0_i32, %c0_i32_0 : i32, i32
  }
  func.func @transform_3(%arg0: i32, %arg1: i32) -> (i32, i32) {
    %c0_i32 = arith.constant 0 : i32
    %c0_i32_0 = arith.constant 0 : i32
    return %arg0, %c0_i32 : i32, i32
  }
  func.func @transform_4(%arg0: i32, %arg1: i32) -> (i32, i32) {
    %c0_i32 = arith.constant 0 : i32
    %c0_i32_0 = arith.constant 0 : i32
    %c0_i32_1 = arith.constant 0 : i32
    return %c0_i32, %c0_i32_0 : i32, i32
  }
  func.func @transform_5(%arg0: i32, %arg1: i32) -> (i32, i32) {
    %c0_i32 = arith.constant 0 : i32
    %c0_i32_0 = arith.constant 0 : i32
    %c0_i32_1 = arith.constant 0 : i32
    return %c0_i32, %c0_i32_0 : i32, i32
  }
  func.func @transform_6(%arg0: i32, %arg1: i32) -> (i32, i32) {
    %c0_i32 = arith.constant 0 : i32
    %c0_i32_0 = arith.constant 0 : i32
    return %arg0, %c0_i32 : i32, i32
  }
}

</mosaic_0001>

<llo_original>
// kernel: transformer_listener_forward.11
$region0: #{transformer_listener_forward.11}
  #allocation0 [shape = 'u32[]', space=smem, size = 0x4, offset = 0x4, fixed_abs, tag = 'smem constant byte address 0x4 - core index']
  #allocation1 [shape = 'u32[72,128]{1,0:T(1,128)}', space=vmem, size = 0x9000, scoped, tag = 'internal scratch']
  #allocation2 [shape = 'f32[8,128]{1,0:T(8,128)}', space=vmem, size = 0x1000, scoped, tag = 'scratch operand']
  %s0 = inlined_call_operand.vmem [shape: f32[8,128], index: 0, kind: input, shape index: {}]
  %s1 = inlined_call_operand.vmem [shape: f32[128,128], index: 1, kind: input, shape index: {}]
  %s2 = inlined_call_operand.vmem [shape: f32[1,128], index: 2, kind: input, shape index: {}]
  %s3 = inlined_call_operand.vmem [shape: f32[8,128], index: 3, kind: output, shape index: {}]
  %s4 = sld [smem:[#allocation0]]
  $region30: #{transformer_listener_forward.11} parent=0
    _
  %s6 = ssub.s32 1, %s4
  %s7 = scalar_select 0, %s6, %s4
  // Predicated region
  $region2: #{transformer_listener_forward.11} parent=0 // pred_check
    _
  $region3: #{transformer_listener_forward.11} parent=0 // pred_check_branch
    %9 = sbr.rel (0) target = $region5
  $region4: #{transformer_listener_forward.11} parent=0 // pred_region
    _
  $region5: #{transformer_listener_forward.11} parent=0 // pred_fallthru
    _
  // Predicated region
  $region6: #{transformer_listener_forward.11} parent=0 // pred_check
    _
  $region7: #{transformer_listener_forward.11} parent=0 // pred_check_branch
    %11 = sbr.rel (0) target = $region9
  $region8: #{transformer_listener_forward.11} parent=0 // pred_region
    _
  $region9: #{transformer_listener_forward.11} parent=0 // pred_fallthru
    _
  // Predicated region
  $region10: #{transformer_listener_forward.11} parent=0 // pred_check
    _
  $region11: #{transformer_listener_forward.11} parent=0 // pred_check_branch
    %13 = sbr.rel (0) target = $region13
  $region12: #{transformer_listener_forward.11} parent=0 // pred_region
    _
  $region13: #{transformer_listener_forward.11} parent=0 // pred_fallthru
    _
  %p14 = scmp.eq.s32.totalorder 0, 0
  // Predicated region
  $region14: #{transformer_listener_forward.11} parent=0 // pred_check
    %p15 = pneg %p14
  $region15: #{transformer_listener_forward.11} parent=0 // pred_check_branch
    %17 = sbr.rel (%p15) target = $region17
  $region16: #{transformer_listener_forward.11} parent=0 // pred_region
    %18 = vst [vmem:[#allocation2] sm:$0xff] 0.0
  $region17: #{transformer_listener_forward.11} parent=0 // pred_fallthru
    _
  %v19 = vld [vmem:[#allocation2] sm:$0xff]
  %v20 = vld [vmem:[%s0] sm:$0xff]
  %v21 = vpack.c.bf16 %v20, %v20
  %v22 = vld [vmem:[%s1] sm:$0xff]
  %v23 = vld [vmem:[%s1 + $0x8] sm:$0xff]
  %v24 = vld [vmem:[%s1 + $0x10] sm:$0xff]
  %v25 = vld [vmem:[%s1 + $0x18] sm:$0xff]
  %v26 = vld [vmem:[%s1 + $0x20] sm:$0xff]
  %v27 = vld [vmem:[%s1 + $0x28] sm:$0xff]
  %v28 = vld [vmem:[%s1 + $0x30] sm:$0xff]
  %v29 = vld [vmem:[%s1 + $0x38] sm:$0xff]
  %v30 = vld [vmem:[%s1 + $0x40] sm:$0xff]
  %v31 = vld [vmem:[%s1 + $0x48] sm:$0xff]
  %v32 = vld [vmem:[%s1 + $0x50] sm:$0xff]
  %v33 = vld [vmem:[%s1 + $0x58] sm:$0xff]
  %v34 = vld [vmem:[%s1 + $0x60] sm:$0xff]
  %v35 = vld [vmem:[%s1 + $0x68] sm:$0xff]
  %v36 = vld [vmem:[%s1 + $0x70] sm:$0xff]
  %v37 = vld [vmem:[%s1 + $0x78] sm:$0xff]
  %v38 = vpack.c.bf16 %v23, %v22
  %v39 = vpack.c.bf16 %v25, %v24
  %v40 = vpack.c.bf16 %v27, %v26
  %v41 = vpack.c.bf16 %v29, %v28
  %v42 = vpack.c.bf16 %v31, %v30
  %v43 = vpack.c.bf16 %v33, %v32
  %v44 = vpack.c.bf16 %v35, %v34
  %v45 = vpack.c.bf16 %v37, %v36
  %46 = vmatpush.bf16.msra.mxu0 %v45
  %47 = vmatpush.bf16.msra.mxu0 %v44
  %48 = vmatpush.bf16.msra.mxu0 %v43
  %49 = vmatpush.bf16.msra.mxu0 %v42
  %50 = vmatpush.bf16.msra.mxu0 %v41
  %51 = vmatpush.bf16.msra.mxu0 %v40
  %52 = vmatpush.bf16.msra.mxu0 %v39
  %53 = vmatpush.bf16.msra.mxu0 %v38
  %54 = vmatmul.bf16.gmra.mxu0 %v21
  %v55 = vpop.f32.mrf.mxu0
  %v56 = vadd.f32 0.0, %v55
  %v57 = vpop.f32.mrf.mxu0
  %58 = vdwg.mxu0
  %v59 = vadd.f32 %v19, %v56
  %60 = vst [vmem:[#allocation2] sm:$0xff] %v59
  // Predicated region
  $region18: #{transformer_listener_forward.11} parent=0 // pred_check
    %p61 = pneg %p14
  $region19: #{transformer_listener_forward.11} parent=0 // pred_check_branch
    %63 = sbr.rel (%p61) target = $region21
  $region20: #{transformer_listener_forward.11} parent=0 // pred_region
    %v64 = vld [vmem:[#allocation2] sm:$0xff]
    %v65 = vld [vmem:[%s2] sm:$0x1]
    %v67 = vperm.slane %v65, 0
    %v69 = vadd.f32 %v64, %v67
    %70 = vst [vmem:[%s3] sm:$0xff] %v69
  $region21: #{transformer_listener_forward.11} parent=0 // pred_fallthru
    _
  // Predicated region
  $region22: #{transformer_listener_forward.11} parent=0 // pred_check
    _
  $region23: #{transformer_listener_forward.11} parent=0 // pred_check_branch
    %72 = sbr.rel (0) target = $region25
  $region24: #{transformer_listener_forward.11} parent=0 // pred_region
    _
  $region25: #{transformer_listener_forward.11} parent=0 // pred_fallthru
    _
  // Predicated region
  $region26: #{transformer_listener_forward.11} parent=0 // pred_check
    _
  $region27: #{transformer_listener_forward.11} parent=0 // pred_check_branch
    %74 = sbr.rel (0) target = $region29
  $region28: #{transformer_listener_forward.11} parent=0 // pred_region
    _
  $region29: #{transformer_listener_forward.11} parent=0 // pred_fallthru
    _

// kernel: transformer_listener_forward.12
$region0: #{transformer_listener_forward.12}
  #allocation0 [shape = 'u32[]', space=smem, size = 0x4, offset = 0x4, fixed_abs, tag = 'smem constant byte address 0x4 - core index']
  #allocation1 [shape = 'u32[72,128]{1,0:T(1,128)}', space=vmem, size = 0x9000, scoped, tag = 'internal scratch']
  #allocation2 [shape = 'f32[8,384]{1,0:T(8,128)}', space=vmem, size = 0x3000, scoped, tag = 'scratch operand']
  %s0 = inlined_call_operand.vmem [shape: f32[8,128], index: 0, kind: input, shape index: {}]
  %s1 = inlined_call_operand.vmem [shape: f32[128,384], index: 1, kind: input, shape index: {}]
  %s2 = inlined_call_operand.vmem [shape: f32[1,384], index: 2, kind: input, shape index: {}]
  %s3 = inlined_call_operand.vmem [shape: f32[8,384], index: 3, kind: output, shape index: {}]
  %s4 = sld [smem:[#allocation0]]
  $region30: #{transformer_listener_forward.12} parent=0
    _
  %s6 = ssub.s32 1, %s4
  %s7 = scalar_select 0, %s6, %s4
  // Predicated region
  $region2: #{transformer_listener_forward.12} parent=0 // pred_check
    _
  $region3: #{transformer_listener_forward.12} parent=0 // pred_check_branch
    %9 = sbr.rel (0) target = $region5
  $region4: #{transformer_listener_forward.12} parent=0 // pred_region
    _
  $region5: #{transformer_listener_forward.12} parent=0 // pred_fallthru
    _
  // Predicated region
  $region6: #{transformer_listener_forward.12} parent=0 // pred_check
    _
  $region7: #{transformer_listener_forward.12} parent=0 // pred_check_branch
    %11 = sbr.rel (0) target = $region9
  $region8: #{transformer_listener_forward.12} parent=0 // pred_region
    _
  $region9: #{transformer_listener_forward.12} parent=0 // pred_fallthru
    _
  // Predicated region
  $region10: #{transformer_listener_forward.12} parent=0 // pred_check
    _
  $region11: #{transformer_listener_forward.12} parent=0 // pred_check_branch
    %13 = sbr.rel (0) target = $region13
  $region12: #{transformer_listener_forward.12} parent=0 // pred_region
    _
  $region13: #{transformer_listener_forward.12} parent=0 // pred_fallthru
    _
  %p14 = scmp.eq.s32.totalorder 0, 0
  // Predicated region
  $region14: #{transformer_listener_forward.12} parent=0 // pred_check
    %p15 = pneg %p14
  $region15: #{transformer_listener_forward.12} parent=0 // pred_check_branch
    %17 = sbr.rel (%p15) target = $region17
  $region16: #{transformer_listener_forward.12} parent=0 // pred_region
    %18 = vst [vmem:[#allocation2] sm:$0xff] 0.0
    %19 = vst [vmem:[#allocation2 + $0x8] sm:$0xff] 0.0
    %20 = vst [vmem:[#allocation2 + $0x10] sm:$0xff] 0.0
  $region17: #{transformer_listener_forward.12} parent=0 // pred_fallthru
    _
  %v21 = vld [vmem:[#allocation2] sm:$0xff]
  %v22 = vld [vmem:[#allocation2 + $0x8] sm:$0xff]
  %v23 = vld [vmem:[#allocation2 + $0x10] sm:$0xff]
  %v24 = vld [vmem:[%s0] sm:$0xff]
  %v25 = vpack.c.bf16 %v24, %v24
  %v26 = vld [vmem:[%s1] sm:$0xff]
  %v27 = vld [vmem:[%s1 + $0x8] sm:$0xff]
  %v28 = vld [vmem:[%s1 + $0x10] sm:$0xff]
  %v29 = vld [vmem:[%s1 + $0x18] sm:$0xff]
  %v30 = vld [vmem:[%s1 + $0x20] sm:$0xff]
  %v31 = vld [vmem:[%s1 + $0x28] sm:$0xff]
  %v32 = vld [vmem:[%s1 + $0x30] sm:$0xff]
  %v33 = vld [vmem:[%s1 + $0x38] sm:$0xff]
  %v34 = vld [vmem:[%s1 + $0x40] sm:$0xff]
  %v35 = vld [vmem:[%s1 + $0x48] sm:$0xff]
  %v36 = vld [vmem:[%s1 + $0x50] sm:$0xff]
  %v37 = vld [vmem:[%s1 + $0x58] sm:$0xff]
  %v38 = vld [vmem:[%s1 + $0x60] sm:$0xff]
  %v39 = vld [vmem:[%s1 + $0x68] sm:$0xff]
  %v40 = vld [vmem:[%s1 + $0x70] sm:$0xff]
  %v41 = vld [vmem:[%s1 + $0x78] sm:$0xff]
  %v42 = vld [vmem:[%s1 + $0x80] sm:$0xff]
  %v43 = vld [vmem:[%s1 + $0x88] sm:$0xff]
  %v44 = vld [vmem:[%s1 + $0x90] sm:$0xff]
  %v45 = vld [vmem:[%s1 + $0x98] sm:$0xff]
  %v46 = vld [vmem:[%s1 + $0xa0] sm:$0xff]
  %v47 = vld [vmem:[%s1 + $0xa8] sm:$0xff]
  %v48 = vld [vmem:[%s1 + $0xb0] sm:$0xff]
  %v49 = vld [vmem:[%s1 + $0xb8] sm:$0xff]
  %v50 = vld [vmem:[%s1 + $0xc0] sm:$0xff]
  %v51 = vld [vmem:[%s1 + $0xc8] sm:$0xff]
  %v52 = vld [vmem:[%s1 + $0xd0] sm:$0xff]
  %v53 = vld [vmem:[%s1 + $0xd8] sm:$0xff]
  %v54 = vld [vmem:[%s1 + $0xe0] sm:$0xff]
  %v55 = vld [vmem:[%s1 + $0xe8] sm:$0xff]
  %v56 = vld [vmem:[%s1 + $0xf0] sm:$0xff]
  %v57 = vld [vmem:[%s1 + $0xf8] sm:$0xff]
  %v58 = vld [vmem:[%s1 + $0x100] sm:$0xff]
  %v59 = vld [vmem:[%s1 + $0x108] sm:$0xff]
  %v60 = vld [vmem:[%s1 + $0x110] sm:$0xff]
  %v61 = vld [vmem:[%s1 + $0x118] sm:$0xff]
  %v62 = vld [vmem:[%s1 + $0x120] sm:$0xff]
  %v63 = vld [vmem:[%s1 + $0x128] sm:$0xff]
  %v64 = vld [vmem:[%s1 + $0x130] sm:$0xff]
  %v65 = vld [vmem:[%s1 + $0x138] sm:$0xff]
  %v66 = vld [vmem:[%s1 + $0x140] sm:$0xff]
  %v67 = vld [vmem:[%s1 + $0x148] sm:$0xff]
  %v68 = vld [vmem:[%s1 + $0x150] sm:$0xff]
  %v69 = vld [vmem:[%s1 + $0x158] sm:$0xff]
  %v70 = vld [vmem:[%s1 + $0x160] sm:$0xff]
  %v71 = vld [vmem:[%s1 + $0x168] sm:$0xff]
  %v72 = vld [vmem:[%s1 + $0x170] sm:$0xff]
  %v73 = vld [vmem:[%s1 + $0x178] sm:$0xff]
  %v74 = vpack.c.bf16 %v29, %v26
  %v75 = vpack.c.bf16 %v30, %v27
  %v76 = vpack.c.bf16 %v31, %v28
  %v77 = vpack.c.bf16 %v35, %v32
  %v78 = vpack.c.bf16 %v36, %v33
  %v79 = vpack.c.bf16 %v37, %v34
  %v80 = vpack.c.bf16 %v41, %v38
  %v81 = vpack.c.bf16 %v42, %v39
  %v82 = vpack.c.bf16 %v43, %v40
  %v83 = vpack.c.bf16 %v47, %v44
  %v84 = vpack.c.bf16 %v48, %v45
  %v85 = vpack.c.bf16 %v49, %v46
  %v86 = vpack.c.bf16 %v53, %v50
  %v87 = vpack.c.bf16 %v54, %v51
  %v88 = vpack.c.bf16 %v55, %v52
  %v89 = vpack.c.bf16 %v59, %v56
  %v90 = vpack.c.bf16 %v60, %v57
  %v91 = vpack.c.bf16 %v61, %v58
  %v92 = vpack.c.bf16 %v65, %v62
  %v93 = vpack.c.bf16 %v66, %v63
  %v94 = vpack.c.bf16 %v67, %v64
  %v95 = vpack.c.bf16 %v71, %v68
  %v96 = vpack.c.bf16 %v72, %v69
  %v97 = vpack.c.bf16 %v73, %v70
  %98 = vmatpush.bf16.msra.mxu0 %v95
  %99 = vmatpush.bf16.msra.mxu0 %v92
  %100 = vmatpush.bf16.msra.mxu0 %v89
  %101 = vmatpush.bf16.msra.mxu0 %v86
  %102 = vmatpush.bf16.msra.mxu0 %v83
  %103 = vmatpush.bf16.msra.mxu0 %v80
  %104 = vmatpush.bf16.msra.mxu0 %v77
  %105 = vmatpush.bf16.msra.mxu0 %v74
  %106 = vmatmul.bf16.gmra.mxu0 %v25
  %v107 = vpop.f32.mrf.mxu0
  %v108 = vadd.f32 0.0, %v107
  %v109 = vpop.f32.mrf.mxu0
  %110 = vdwg.mxu0
  %111 = vmatpush.bf16.msra.mxu0 %v96
  %112 = vmatpush.bf16.msra.mxu0 %v93
  %113 = vmatpush.bf16.msra.mxu0 %v90
  %114 = vmatpush.bf16.msra.mxu0 %v87
  %115 = vmatpush.bf16.msra.mxu0 %v84
  %116 = vmatpush.bf16.msra.mxu0 %v81
  %117 = vmatpush.bf16.msra.mxu0 %v78
  %118 = vmatpush.bf16.msra.mxu0 %v75
  %119 = vmatmul.bf16.gmra.mxu0 %v25
  %v120 = vpop.f32.mrf.mxu0
  %v121 = vadd.f32 0.0, %v120
  %v122 = vpop.f32.mrf.mxu0
  %123 = vdwg.mxu0
  %124 = vmatpush.bf16.msra.mxu0 %v97
  %125 = vmatpush.bf16.msra.mxu0 %v94
  %126 = vmatpush.bf16.msra.mxu0 %v91
  %127 = vmatpush.bf16.msra.mxu0 %v88
  %128 = vmatpush.bf16.msra.mxu0 %v85
  %129 = vmatpush.bf16.msra.mxu0 %v82
  %130 = vmatpush.bf16.msra.mxu0 %v79
  %131 = vmatpush.bf16.msra.mxu0 %v76
  %132 = vmatmul.bf16.gmra.mxu0 %v25
  %v133 = vpop.f32.mrf.mxu0
  %v134 = vadd.f32 0.0, %v133
  %v135 = vpop.f32.mrf.mxu0
  %136 = vdwg.mxu0
  %v137 = vadd.f32 %v21, %v108
  %v138 = vadd.f32 %v22, %v121
  %v139 = vadd.f32 %v23, %v134
  %140 = vst [vmem:[#allocation2] sm:$0xff] %v137
  %141 = vst [vmem:[#allocation2 + $0x8] sm:$0xff] %v138
  %142 = vst [vmem:[#allocation2 + $0x10] sm:$0xff] %v139
  // Predicated region
  $region18: #{transformer_listener_forward.12} parent=0 // pred_check
    %p143 = pneg %p14
  $region19: #{transformer_listener_forward.12} parent=0 // pred_check_branch
    %145 = sbr.rel (%p143) target = $region21
  $region20: #{transformer_listener_forward.12} parent=0 // pred_region
    %v146 = vld [vmem:[#allocation2] sm:$0xff]
    %v147 = vld [vmem:[#allocation2 + $0x8] sm:$0xff]
    %v148 = vld [vmem:[#allocation2 + $0x10] sm:$0xff]
    %v149 = vld [vmem:[%s2] sm:$0x7]
    %v151 = vperm.slane %v149, 0
    %v152 = vperm.slane %v149, 1
    %v153 = vperm.slane %v149, 2
    %v157 = vadd.f32 %v146, %v151
    %v158 = vadd.f32 %v147, %v152
    %v159 = vadd.f32 %v148, %v153
    %160 = vst [vmem:[%s3] sm:$0xff] %v157
    %161 = vst [vmem:[%s3 + $0x8] sm:$0xff] %v158
    %162 = vst [vmem:[%s3 + $0x10] sm:$0xff] %v159
  $region21: #{transformer_listener_forward.12} parent=0 // pred_fallthru
    _
  // Predicated region
  $region22: #{transformer_listener_forward.12} parent=0 // pred_check
    _
  $region23: #{transformer_listener_forward.12} parent=0 // pred_check_branch
    %164 = sbr.rel (0) target = $region25
  $region24: #{transformer_listener_forward.12} parent=0 // pred_region
    _
  $region25: #{transformer_listener_forward.12} parent=0 // pred_fallthru
    _
  // Predicated region
  $region26: #{transformer_listener_forward.12} parent=0 // pred_check
    _
  $region27: #{transformer_listener_forward.12} parent=0 // pred_check_branch
    %166 = sbr.rel (0) target = $region29
  $region28: #{transformer_listener_forward.12} parent=0 // pred_region
    _
  $region29: #{transformer_listener_forward.12} parent=0 // pred_fallthru
    _

// kernel: transformer_listener_forward.15
$region0: #{transformer_listener_forward.15}
  #allocation0 [shape = 'u32[]', space=smem, size = 0x4, offset = 0x4, fixed_abs, tag = 'smem constant byte address 0x4 - core index']
  #allocation1 [shape = 'u32[72,128]{1,0:T(1,128)}', space=vmem, size = 0x9000, scoped, tag = 'internal scratch']
  #allocation2 [shape = 'f32[8,256]{1,0:T(8,128)}', space=vmem, size = 0x2000, scoped, tag = 'scratch operand']
  %s0 = inlined_call_operand.vmem [shape: f32[8,128], index: 0, kind: input, shape index: {}]
  %s1 = inlined_call_operand.vmem [shape: f32[128,256], index: 1, kind: input, shape index: {}]
  %s2 = inlined_call_operand.vmem [shape: f32[1,256], index: 2, kind: input, shape index: {}]
  %s3 = inlined_call_operand.vmem [shape: f32[8,256], index: 3, kind: output, shape index: {}]
  %s4 = sld [smem:[#allocation0]]
  $region30: #{transformer_listener_forward.15} parent=0
    _
  %s6 = ssub.s32 1, %s4
  %s7 = scalar_select 0, %s6, %s4
  // Predicated region
  $region2: #{transformer_listener_forward.15} parent=0 // pred_check
    _
  $region3: #{transformer_listener_forward.15} parent=0 // pred_check_branch
    %9 = sbr.rel (0) target = $region5
  $region4: #{transformer_listener_forward.15} parent=0 // pred_region
    _
  $region5: #{transformer_listener_forward.15} parent=0 // pred_fallthru
    _
  // Predicated region
  $region6: #{transformer_listener_forward.15} parent=0 // pred_check
    _
  $region7: #{transformer_listener_forward.15} parent=0 // pred_check_branch
    %11 = sbr.rel (0) target = $region9
  $region8: #{transformer_listener_forward.15} parent=0 // pred_region
    _
  $region9: #{transformer_listener_forward.15} parent=0 // pred_fallthru
    _
  // Predicated region
  $region10: #{transformer_listener_forward.15} parent=0 // pred_check
    _
  $region11: #{transformer_listener_forward.15} parent=0 // pred_check_branch
    %13 = sbr.rel (0) target = $region13
  $region12: #{transformer_listener_forward.15} parent=0 // pred_region
    _
  $region13: #{transformer_listener_forward.15} parent=0 // pred_fallthru
    _
  %p14 = scmp.eq.s32.totalorder 0, 0
  // Predicated region
  $region14: #{transformer_listener_forward.15} parent=0 // pred_check
    %p15 = pneg %p14
  $region15: #{transformer_listener_forward.15} parent=0 // pred_check_branch
    %17 = sbr.rel (%p15) target = $region17
  $region16: #{transformer_listener_forward.15} parent=0 // pred_region
    %18 = vst [vmem:[#allocation2] sm:$0xff] 0.0
    %19 = vst [vmem:[#allocation2 + $0x8] sm:$0xff] 0.0
  $region17: #{transformer_listener_forward.15} parent=0 // pred_fallthru
    _
  %v20 = vld [vmem:[#allocation2] sm:$0xff]
  %v21 = vld [vmem:[#allocation2 + $0x8] sm:$0xff]
  %v22 = vld [vmem:[%s0] sm:$0xff]
  %v23 = vpack.c.bf16 %v22, %v22
  %v24 = vld [vmem:[%s1] sm:$0xff]
  %v25 = vld [vmem:[%s1 + $0x8] sm:$0xff]
  %v26 = vld [vmem:[%s1 + $0x10] sm:$0xff]
  %v27 = vld [vmem:[%s1 + $0x18] sm:$0xff]
  %v28 = vld [vmem:[%s1 + $0x20] sm:$0xff]
  %v29 = vld [vmem:[%s1 + $0x28] sm:$0xff]
  %v30 = vld [vmem:[%s1 + $0x30] sm:$0xff]
  %v31 = vld [vmem:[%s1 + $0x38] sm:$0xff]
  %v32 = vld [vmem:[%s1 + $0x40] sm:$0xff]
  %v33 = vld [vmem:[%s1 + $0x48] sm:$0xff]
  %v34 = vld [vmem:[%s1 + $0x50] sm:$0xff]
  %v35 = vld [vmem:[%s1 + $0x58] sm:$0xff]
  %v36 = vld [vmem:[%s1 + $0x60] sm:$0xff]
  %v37 = vld [vmem:[%s1 + $0x68] sm:$0xff]
  %v38 = vld [vmem:[%s1 + $0x70] sm:$0xff]
  %v39 = vld [vmem:[%s1 + $0x78] sm:$0xff]
  %v40 = vld [vmem:[%s1 + $0x80] sm:$0xff]
  %v41 = vld [vmem:[%s1 + $0x88] sm:$0xff]
  %v42 = vld [vmem:[%s1 + $0x90] sm:$0xff]
  %v43 = vld [vmem:[%s1 + $0x98] sm:$0xff]
  %v44 = vld [vmem:[%s1 + $0xa0] sm:$0xff]
  %v45 = vld [vmem:[%s1 + $0xa8] sm:$0xff]
  %v46 = vld [vmem:[%s1 + $0xb0] sm:$0xff]
  %v47 = vld [vmem:[%s1 + $0xb8] sm:$0xff]
  %v48 = vld [vmem:[%s1 + $0xc0] sm:$0xff]
  %v49 = vld [vmem:[%s1 + $0xc8] sm:$0xff]
  %v50 = vld [vmem:[%s1 + $0xd0] sm:$0xff]
  %v51 = vld [vmem:[%s1 + $0xd8] sm:$0xff]
  %v52 = vld [vmem:[%s1 + $0xe0] sm:$0xff]
  %v53 = vld [vmem:[%s1 + $0xe8] sm:$0xff]
  %v54 = vld [vmem:[%s1 + $0xf0] sm:$0xff]
  %v55 = vld [vmem:[%s1 + $0xf8] sm:$0xff]
  %v56 = vpack.c.bf16 %v26, %v24
  %v57 = vpack.c.bf16 %v27, %v25
  %v58 = vpack.c.bf16 %v30, %v28
  %v59 = vpack.c.bf16 %v31, %v29
  %v60 = vpack.c.bf16 %v34, %v32
  %v61 = vpack.c.bf16 %v35, %v33
  %v62 = vpack.c.bf16 %v38, %v36
  %v63 = vpack.c.bf16 %v39, %v37
  %v64 = vpack.c.bf16 %v42, %v40
  %v65 = vpack.c.bf16 %v43, %v41
  %v66 = vpack.c.bf16 %v46, %v44
  %v67 = vpack.c.bf16 %v47, %v45
  %v68 = vpack.c.bf16 %v50, %v48
  %v69 = vpack.c.bf16 %v51, %v49
  %v70 = vpack.c.bf16 %v54, %v52
  %v71 = vpack.c.bf16 %v55, %v53
  %72 = vmatpush.bf16.msra.mxu0 %v70
  %73 = vmatpush.bf16.msra.mxu0 %v68
  %74 = vmatpush.bf16.msra.mxu0 %v66
  %75 = vmatpush.bf16.msra.mxu0 %v64
  %76 = vmatpush.bf16.msra.mxu0 %v62
  %77 = vmatpush.bf16.msra.mxu0 %v60
  %78 = vmatpush.bf16.msra.mxu0 %v58
  %79 = vmatpush.bf16.msra.mxu0 %v56
  %80 = vmatmul.bf16.gmra.mxu0 %v23
  %v81 = vpop.f32.mrf.mxu0
  %v82 = vadd.f32 0.0, %v81
  %v83 = vpop.f32.mrf.mxu0
  %84 = vdwg.mxu0
  %85 = vmatpush.bf16.msra.mxu0 %v71
  %86 = vmatpush.bf16.msra.mxu0 %v69
  %87 = vmatpush.bf16.msra.mxu0 %v67
  %88 = vmatpush.bf16.msra.mxu0 %v65
  %89 = vmatpush.bf16.msra.mxu0 %v63
  %90 = vmatpush.bf16.msra.mxu0 %v61
  %91 = vmatpush.bf16.msra.mxu0 %v59
  %92 = vmatpush.bf16.msra.mxu0 %v57
  %93 = vmatmul.bf16.gmra.mxu0 %v23
  %v94 = vpop.f32.mrf.mxu0
  %v95 = vadd.f32 0.0, %v94
  %v96 = vpop.f32.mrf.mxu0
  %97 = vdwg.mxu0
  %v98 = vadd.f32 %v20, %v82
  %v99 = vadd.f32 %v21, %v95
  %100 = vst [vmem:[#allocation2] sm:$0xff] %v98
  %101 = vst [vmem:[#allocation2 + $0x8] sm:$0xff] %v99
  // Predicated region
  $region18: #{transformer_listener_forward.15} parent=0 // pred_check
    %p102 = pneg %p14
  $region19: #{transformer_listener_forward.15} parent=0 // pred_check_branch
    %104 = sbr.rel (%p102) target = $region21
  $region20: #{transformer_listener_forward.15} parent=0 // pred_region
    %v105 = vld [vmem:[#allocation2] sm:$0xff]
    %v106 = vld [vmem:[#allocation2 + $0x8] sm:$0xff]
    %v107 = vld [vmem:[%s2] sm:$0x3]
    %v109 = vperm.slane %v107, 0
    %v110 = vperm.slane %v107, 1
    %v113 = vadd.f32 %v105, %v109
    %v114 = vadd.f32 %v106, %v110
    %v115 = vmax.f32 %v113, 0.0
    %v116 = vmax.f32 %v114, 0.0
    %117 = vst [vmem:[%s3] sm:$0xff] %v115
    %118 = vst [vmem:[%s3 + $0x8] sm:$0xff] %v116
  $region21: #{transformer_listener_forward.15} parent=0 // pred_fallthru
    _
  // Predicated region
  $region22: #{transformer_listener_forward.15} parent=0 // pred_check
    _
  $region23: #{transformer_listener_forward.15} parent=0 // pred_check_branch
    %120 = sbr.rel (0) target = $region25
  $region24: #{transformer_listener_forward.15} parent=0 // pred_region
    _
  $region25: #{transformer_listener_forward.15} parent=0 // pred_fallthru
    _
  // Predicated region
  $region26: #{transformer_listener_forward.15} parent=0 // pred_check
    _
  $region27: #{transformer_listener_forward.15} parent=0 // pred_check_branch
    %122 = sbr.rel (0) target = $region29
  $region28: #{transformer_listener_forward.15} parent=0 // pred_region
    _
  $region29: #{transformer_listener_forward.15} parent=0 // pred_fallthru
    _

// kernel: transformer_listener_forward.16
$region0: #{transformer_listener_forward.16}
  #allocation0 [shape = 'u32[]', space=smem, size = 0x4, offset = 0x4, fixed_abs, tag = 'smem constant byte address 0x4 - core index']
  #allocation1 [shape = 'u32[72,128]{1,0:T(1,128)}', space=vmem, size = 0x9000, scoped, tag = 'internal scratch']
  #allocation2 [shape = 'f32[8,128]{1,0:T(8,128)}', space=vmem, size = 0x1000, scoped, tag = 'scratch operand']
  %s0 = inlined_call_operand.vmem [shape: f32[8,256], index: 0, kind: input, shape index: {}]
  %s1 = inlined_call_operand.vmem [shape: f32[256,128], index: 1, kind: input, shape index: {}]
  %s2 = inlined_call_operand.vmem [shape: f32[1,128], index: 2, kind: input, shape index: {}]
  %s3 = inlined_call_operand.vmem [shape: f32[8,128], index: 3, kind: input, shape index: {}]
  %s4 = inlined_call_operand.vmem [shape: f32[1,128], index: 4, kind: input, shape index: {}]
  %s5 = inlined_call_operand.vmem [shape: f32[1,128], index: 5, kind: input, shape index: {}]
  %s6 = inlined_call_operand.vmem [shape: f32[8,128], index: 6, kind: output, shape index: {}]
  %s7 = sld [smem:[#allocation0]]
  $region42: #{transformer_listener_forward.16} parent=0
    _
  %s9 = ssub.s32 1, %s7
  %s10 = scalar_select 0, %s9, %s7
  // Predicated region
  $region2: #{transformer_listener_forward.16} parent=0 // pred_check
    _
  $region3: #{transformer_listener_forward.16} parent=0 // pred_check_branch
    %12 = sbr.rel (0) target = $region5
  $region4: #{transformer_listener_forward.16} parent=0 // pred_region
    _
  $region5: #{transformer_listener_forward.16} parent=0 // pred_fallthru
    _
  // Predicated region
  $region6: #{transformer_listener_forward.16} parent=0 // pred_check
    _
  $region7: #{transformer_listener_forward.16} parent=0 // pred_check_branch
    %14 = sbr.rel (0) target = $region9
  $region8: #{transformer_listener_forward.16} parent=0 // pred_region
    _
  $region9: #{transformer_listener_forward.16} parent=0 // pred_fallthru
    _
  // Predicated region
  $region10: #{transformer_listener_forward.16} parent=0 // pred_check
    _
  $region11: #{transformer_listener_forward.16} parent=0 // pred_check_branch
    %16 = sbr.rel (0) target = $region13
  $region12: #{transformer_listener_forward.16} parent=0 // pred_region
    _
  $region13: #{transformer_listener_forward.16} parent=0 // pred_fallthru
    _
  // Predicated region
  $region14: #{transformer_listener_forward.16} parent=0 // pred_check
    _
  $region15: #{transformer_listener_forward.16} parent=0 // pred_check_branch
    %18 = sbr.rel (0) target = $region17
  $region16: #{transformer_listener_forward.16} parent=0 // pred_region
    _
  $region17: #{transformer_listener_forward.16} parent=0 // pred_fallthru
    _
  // Predicated region
  $region18: #{transformer_listener_forward.16} parent=0 // pred_check
    _
  $region19: #{transformer_listener_forward.16} parent=0 // pred_check_branch
    %20 = sbr.rel (0) target = $region21
  $region20: #{transformer_listener_forward.16} parent=0 // pred_region
    _
  $region21: #{transformer_listener_forward.16} parent=0 // pred_fallthru
    _
  // Predicated region
  $region22: #{transformer_listener_forward.16} parent=0 // pred_check
    _
  $region23: #{transformer_listener_forward.16} parent=0 // pred_check_branch
    %22 = sbr.rel (0) target = $region25
  $region24: #{transformer_listener_forward.16} parent=0 // pred_region
    _
  $region25: #{transformer_listener_forward.16} parent=0 // pred_fallthru
    _
  %p23 = scmp.eq.s32.totalorder 0, 0
  // Predicated region
  $region26: #{transformer_listener_forward.16} parent=0 // pred_check
    %p24 = pneg %p23
  $region27: #{transformer_listener_forward.16} parent=0 // pred_check_branch
    %26 = sbr.rel (%p24) target = $region29
  $region28: #{transformer_listener_forward.16} parent=0 // pred_region
    %27 = vst [vmem:[#allocation2] sm:$0xff] 0.0
  $region29: #{transformer_listener_forward.16} parent=0 // pred_fallthru
    _
  %v28 = vld [vmem:[#allocation2] sm:$0xff]
  %v29 = vld [vmem:[%s0] sm:$0xff]
  %v30 = vld [vmem:[%s0 + $0x8] sm:$0xff]
  %v31 = vpack.c.bf16 %v29, %v29
  %v32 = vpack.c.bf16 %v30, %v30
  %v33 = vld [vmem:[%s1] sm:$0xff]
  %v34 = vld [vmem:[%s1 + $0x8] sm:$0xff]
  %v35 = vld [vmem:[%s1 + $0x10] sm:$0xff]
  %v36 = vld [vmem:[%s1 + $0x18] sm:$0xff]
  %v37 = vld [vmem:[%s1 + $0x20] sm:$0xff]
  %v38 = vld [vmem:[%s1 + $0x28] sm:$0xff]
  %v39 = vld [vmem:[%s1 + $0x30] sm:$0xff]
  %v40 = vld [vmem:[%s1 + $0x38] sm:$0xff]
  %v41 = vld [vmem:[%s1 + $0x40] sm:$0xff]
  %v42 = vld [vmem:[%s1 + $0x48] sm:$0xff]
  %v43 = vld [vmem:[%s1 + $0x50] sm:$0xff]
  %v44 = vld [vmem:[%s1 + $0x58] sm:$0xff]
  %v45 = vld [vmem:[%s1 + $0x60] sm:$0xff]
  %v46 = vld [vmem:[%s1 + $0x68] sm:$0xff]
  %v47 = vld [vmem:[%s1 + $0x70] sm:$0xff]
  %v48 = vld [vmem:[%s1 + $0x78] sm:$0xff]
  %v49 = vld [vmem:[%s1 + $0x80] sm:$0xff]
  %v50 = vld [vmem:[%s1 + $0x88] sm:$0xff]
  %v51 = vld [vmem:[%s1 + $0x90] sm:$0xff]
  %v52 = vld [vmem:[%s1 + $0x98] sm:$0xff]
  %v53 = vld [vmem:[%s1 + $0xa0] sm:$0xff]
  %v54 = vld [vmem:[%s1 + $0xa8] sm:$0xff]
  %v55 = vld [vmem:[%s1 + $0xb0] sm:$0xff]
  %v56 = vld [vmem:[%s1 + $0xb8] sm:$0xff]
  %v57 = vld [vmem:[%s1 + $0xc0] sm:$0xff]
  %v58 = vld [vmem:[%s1 + $0xc8] sm:$0xff]
  %v59 = vld [vmem:[%s1 + $0xd0] sm:$0xff]
  %v60 = vld [vmem:[%s1 + $0xd8] sm:$0xff]
  %v61 = vld [vmem:[%s1 + $0xe0] sm:$0xff]
  %v62 = vld [vmem:[%s1 + $0xe8] sm:$0xff]
  %v63 = vld [vmem:[%s1 + $0xf0] sm:$0xff]
  %v64 = vld [vmem:[%s1 + $0xf8] sm:$0xff]
  %v65 = vpack.c.bf16 %v34, %v33
  %v66 = vpack.c.bf16 %v36, %v35
  %v67 = vpack.c.bf16 %v38, %v37
  %v68 = vpack.c.bf16 %v40, %v39
  %v69 = vpack.c.bf16 %v42, %v41
  %v70 = vpack.c.bf16 %v44, %v43
  %v71 = vpack.c.bf16 %v46, %v45
  %v72 = vpack.c.bf16 %v48, %v47
  %v73 = vpack.c.bf16 %v50, %v49
  %v74 = vpack.c.bf16 %v52, %v51
  %v75 = vpack.c.bf16 %v54, %v53
  %v76 = vpack.c.bf16 %v56, %v55
  %v77 = vpack.c.bf16 %v58, %v57
  %v78 = vpack.c.bf16 %v60, %v59
  %v79 = vpack.c.bf16 %v62, %v61
  %v80 = vpack.c.bf16 %v64, %v63
  %81 = vmatpush.bf16.msra.mxu0 %v72
  %82 = vmatpush.bf16.msra.mxu0 %v71
  %83 = vmatpush.bf16.msra.mxu0 %v70
  %84 = vmatpush.bf16.msra.mxu0 %v69
  %85 = vmatpush.bf16.msra.mxu0 %v68
  %86 = vmatpush.bf16.msra.mxu0 %v67
  %87 = vmatpush.bf16.msra.mxu0 %v66
  %88 = vmatpush.bf16.msra.mxu0 %v65
  %89 = vmatmul.bf16.gmra.mxu0 %v31
  %v90 = vpop.f32.mrf.mxu0
  %v91 = vadd.f32 0.0, %v90
  %v92 = vpop.f32.mrf.mxu0
  %93 = vdwg.mxu0
  %94 = vmatpush.bf16.msra.mxu0 %v80
  %95 = vmatpush.bf16.msra.mxu0 %v79
  %96 = vmatpush.bf16.msra.mxu0 %v78
  %97 = vmatpush.bf16.msra.mxu0 %v77
  %98 = vmatpush.bf16.msra.mxu0 %v76
  %99 = vmatpush.bf16.msra.mxu0 %v75
  %100 = vmatpush.bf16.msra.mxu0 %v74
  %101 = vmatpush.bf16.msra.mxu0 %v73
  %102 = vmatmul.bf16.gmra.mxu0 %v32
  %v103 = vpop.f32.mrf.mxu0
  %v104 = vadd.f32 %v91, %v103
  %v105 = vpop.f32.mrf.mxu0
  %106 = vdwg.mxu0
  %v107 = vadd.f32 %v28, %v104
  %108 = vst [vmem:[#allocation2] sm:$0xff] %v107
  // Predicated region
  $region30: #{transformer_listener_forward.16} parent=0 // pred_check
    %p109 = pneg %p23
  $region31: #{transformer_listener_forward.16} parent=0 // pred_check_branch
    %111 = sbr.rel (%p109) target = $region33
  $region32: #{transformer_listener_forward.16} parent=0 // pred_region
    %v112 = vld [vmem:[#allocation2] sm:$0xff]
    %v113 = vld [vmem:[%s2] sm:$0x1]
    %v115 = vperm.slane %v113, 0
    %v117 = vadd.f32 %v112, %v115
    %v118 = vld [vmem:[%s3] sm:$0xff]
    %v119 = vadd.f32 %v117, %v118
    %120 = vadd.xlane.f32.xlu0 %v119
    %v121 = vpop.xlane.xlu0 %120
    %v122 = vrcp.pop 128.0
    %v123 = vmul.f32 128.0, %v122
    %v124 = vsub.f32 1.0, %v123
    %v125 = vmul.f32 %v122, %v124
    %v126 = vadd.f32 %v122, %v125
    %vm127 = vweird.f32 %v122
    %v128 = vsel %vm127, %v122, %v126
    %v129 = vmul.f32 %v121, %v128
    %v130 = vsub.f32 %v119, %v129
    %v131 = vmul.f32 %v130, %v130
    %132 = vadd.xlane.f32.xlu0 %v131
    %v133 = vpop.xlane.xlu0 %132
    %v134 = vmul.f32 %v133, %v128
    %v135 = vadd.f32 %v134, 1e-05
    %v136 = vrsqrt.pop %v135
    %v137 = vmul.f32 %v136, %v135
    %v138 = vmul.f32 %v137, %v136
    %v139 = vmul.f32 0.5, %v138
    %v140 = vsub.f32 1.5, %v139
    %v141 = vmul.f32 %v136, %v140
    %vm142 = vweird.f32 %v135
    %vm143 = vweird.f32 %v136
    %vm144 = vmor %vm142, %vm143
    %v145 = vsel %vm144, %v136, %v141
    %v146 = vmul.f32 %v130, %v145
    %v147 = vld [vmem:[%s4] sm:$0x1]
    %v149 = vperm.slane %v147, 0
    %v151 = vmul.f32 %v146, %v149
    %v152 = vld [vmem:[%s5] sm:$0x1]
    %v154 = vperm.slane %v152, 0
    %v156 = vadd.f32 %v151, %v154
    %157 = vst [vmem:[%s6] sm:$0xff] %v156
  $region33: #{transformer_listener_forward.16} parent=0 // pred_fallthru
    _
  // Predicated region
  $region34: #{transformer_listener_forward.16} parent=0 // pred_check
    _
  $region35: #{transformer_listener_forward.16} parent=0 // pred_check_branch
    %159 = sbr.rel (0) target = $region37
  $region36: #{transformer_listener_forward.16} parent=0 // pred_region
    _
  $region37: #{transformer_listener_forward.16} parent=0 // pred_fallthru
    _
  // Predicated region
  $region38: #{transformer_listener_forward.16} parent=0 // pred_check
    _
  $region39: #{transformer_listener_forward.16} parent=0 // pred_check_branch
    %161 = sbr.rel (0) target = $region41
  $region40: #{transformer_listener_forward.16} parent=0 // pred_region
    _
  $region41: #{transformer_listener_forward.16} parent=0 // pred_fallthru
    _

// kernel: transformer_listener_forward.13
$region0: #{transformer_listener_forward.13}
  #allocation0 [shape = 'u32[]', space=smem, size = 0x4, offset = 0x4, fixed_abs, tag = 'smem constant byte address 0x4 - core index']
  #allocation1 [shape = 'u32[72,128]{1,0:T(1,128)}', space=vmem, size = 0x9000, scoped, tag = 'internal scratch']
  %s0 = inlined_call_operand.vmem [shape: f32[16,2,32], index: 0, kind: input, shape index: {}]
  %s1 = inlined_call_operand.vmem [shape: f32[16,2,32], index: 1, kind: input, shape index: {}]
  %s2 = inlined_call_operand.vmem [shape: f32[16,2,32], index: 2, kind: input, shape index: {}]
  %s3 = inlined_call_operand.vmem [shape: f32[16,2,32], index: 3, kind: output, shape index: {}]
  %s4 = sld [smem:[#allocation0]]
  $region22: #{transformer_listener_forward.13} parent=0
    _
  %s6 = ssub.s32 1, %s4
  %s7 = scalar_select 0, %s6, %s4
  // Predicated region
  $region2: #{transformer_listener_forward.13} parent=0 // pred_check
    _
  $region3: #{transformer_listener_forward.13} parent=0 // pred_check_branch
    %9 = sbr.rel (0) target = $region5
  $region4: #{transformer_listener_forward.13} parent=0 // pred_region
    _
  $region5: #{transformer_listener_forward.13} parent=0 // pred_fallthru
    _
  // Predicated region
  $region6: #{transformer_listener_forward.13} parent=0 // pred_check
    _
  $region7: #{transformer_listener_forward.13} parent=0 // pred_check_branch
    %11 = sbr.rel (0) target = $region9
  $region8: #{transformer_listener_forward.13} parent=0 // pred_region
    _
  $region9: #{transformer_listener_forward.13} parent=0 // pred_fallthru
    _
  // Predicated region
  $region10: #{transformer_listener_forward.13} parent=0 // pred_check
    _
  $region11: #{transformer_listener_forward.13} parent=0 // pred_check_branch
    %13 = sbr.rel (0) target = $region13
  $region12: #{transformer_listener_forward.13} parent=0 // pred_region
    _
  $region13: #{transformer_listener_forward.13} parent=0 // pred_fallthru
    _
  %v14 = vld [vmem:[%s0] sm:$0x3]
  %v15 = vld [vmem:[%s0 + $0x2] sm:$0x3]
  %v16 = vld [vmem:[%s0 + $0x4] sm:$0x3]
  %v17 = vld [vmem:[%s0 + $0x6] sm:$0x3]
  %v18 = vld [vmem:[%s0 + $0x8] sm:$0x3]
  %v19 = vld [vmem:[%s0 + $0xa] sm:$0x3]
  %v20 = vld [vmem:[%s0 + $0xc] sm:$0x3]
  %v21 = vld [vmem:[%s0 + $0xe] sm:$0x3]
  %v22 = vld [vmem:[%s0 + $0x10] sm:$0x3]
  %v23 = vld [vmem:[%s0 + $0x12] sm:$0x3]
  %v24 = vld [vmem:[%s0 + $0x14] sm:$0x3]
  %v25 = vld [vmem:[%s0 + $0x16] sm:$0x3]
  %v26 = vld [vmem:[%s0 + $0x18] sm:$0x3]
  %v27 = vld [vmem:[%s0 + $0x1a] sm:$0x3]
  %v28 = vld [vmem:[%s0 + $0x1c] sm:$0x3]
  %v29 = vld [vmem:[%s0 + $0x1e] sm:$0x3]
  %v30 = vld [vmem:[%s1] sm:$0x3]
  %v31 = vld [vmem:[%s1 + $0x2] sm:$0x3]
  %v32 = vld [vmem:[%s1 + $0x4] sm:$0x3]
  %v33 = vld [vmem:[%s1 + $0x6] sm:$0x3]
  %v34 = vld [vmem:[%s1 + $0x8] sm:$0x3]
  %v35 = vld [vmem:[%s1 + $0xa] sm:$0x3]
  %v36 = vld [vmem:[%s1 + $0xc] sm:$0x3]
  %v37 = vld [vmem:[%s1 + $0xe] sm:$0x3]
  %v38 = vld [vmem:[%s1 + $0x10] sm:$0x3]
  %v39 = vld [vmem:[%s1 + $0x12] sm:$0x3]
  %v40 = vld [vmem:[%s1 + $0x14] sm:$0x3]
  %v41 = vld [vmem:[%s1 + $0x16] sm:$0x3]
  %v42 = vld [vmem:[%s1 + $0x18] sm:$0x3]
  %v43 = vld [vmem:[%s1 + $0x1a] sm:$0x3]
  %v44 = vld [vmem:[%s1 + $0x1c] sm:$0x3]
  %v45 = vld [vmem:[%s1 + $0x1e] sm:$0x3]
  %v46 = vld [vmem:[%s2] sm:$0x3]
  %v47 = vld [vmem:[%s2 + $0x2] sm:$0x3]
  %v48 = vld [vmem:[%s2 + $0x4] sm:$0x3]
  %v49 = vld [vmem:[%s2 + $0x6] sm:$0x3]
  %v50 = vld [vmem:[%s2 + $0x8] sm:$0x3]
  %v51 = vld [vmem:[%s2 + $0xa] sm:$0x3]
  %v52 = vld [vmem:[%s2 + $0xc] sm:$0x3]
  %v53 = vld [vmem:[%s2 + $0xe] sm:$0x3]
  %v54 = vld [vmem:[%s2 + $0x10] sm:$0x3]
  %v55 = vld [vmem:[%s2 + $0x12] sm:$0x3]
  %v56 = vld [vmem:[%s2 + $0x14] sm:$0x3]
  %v57 = vld [vmem:[%s2 + $0x16] sm:$0x3]
  %v58 = vld [vmem:[%s2 + $0x18] sm:$0x3]
  %v59 = vld [vmem:[%s2 + $0x1a] sm:$0x3]
  %v60 = vld [vmem:[%s2 + $0x1c] sm:$0x3]
  %v61 = vld [vmem:[%s2 + $0x1e] sm:$0x3]
  %vm62 = vcmask 261120
  %v64 = vsel %vm62, %v14, 0
  %v67 = vsel %vm62, %v30, 0
  %69 = vmatpush.xpose.msra.mxu0 0.0
  %70 = vmatpush.xpose.msra.mxu0 0.0
  %71 = vmatpush.xpose.msra.mxu0 0.0
  %72 = vmatpush.xpose.msra.mxu0 0.0
  %73 = vmatpush.xpose.msra.mxu0 0.0
  %74 = vmatpush.xpose.msra.mxu0 0.0
  %75 = vmatpush.xpose.msra.mxu0 0.0
  %76 = vmatpush.xpose.msra.mxu0 0.0
  %77 = vmatpush.xpose.msra.mxu0 0.0
  %78 = vmatpush.xpose.msra.mxu0 0.0
  %79 = vmatpush.xpose.msra.mxu0 0.0
  %80 = vmatpush.xpose.msra.mxu0 0.0
  %81 = vmatpush.xpose.msra.mxu0 0.0
  %82 = vmatpush.xpose.msra.mxu0 0.0
  %83 = vmatpush.xpose.msra.mxu0 0.0
  %84 = vmatpush.xpose.msra.mxu0 %v67
  %85 = vmatmul.f32.gmra.mxu0 %v64
  %v86 = vpop.f32.mrf.mxu0
  %v87 = vadd.f32 0.0, %v86
  %88 = vdwg.mxu0
  %v90 = vsel %vm62, %v15, 0
  %v93 = vsel %vm62, %v31, 0
  %95 = vmatpush.xpose.msra.mxu0 0.0
  %96 = vmatpush.xpose.msra.mxu0 0.0
  %97 = vmatpush.xpose.msra.mxu0 0.0
  %98 = vmatpush.xpose.msra.mxu0 0.0
  %99 = vmatpush.xpose.msra.mxu0 0.0
  %100 = vmatpush.xpose.msra.mxu0 0.0
  %101 = vmatpush.xpose.msra.mxu0 0.0
  %102 = vmatpush.xpose.msra.mxu0 0.0
  %103 = vmatpush.xpose.msra.mxu0 0.0
  %104 = vmatpush.xpose.msra.mxu0 0.0
  %105 = vmatpush.xpose.msra.mxu0 0.0
  %106 = vmatpush.xpose.msra.mxu0 0.0
  %107 = vmatpush.xpose.msra.mxu0 0.0
  %108 = vmatpush.xpose.msra.mxu0 0.0
  %109 = vmatpush.xpose.msra.mxu0 0.0
  %110 = vmatpush.xpose.msra.mxu0 %v93
  %111 = vmatmul.f32.gmra.mxu0 %v90
  %v112 = vpop.f32.mrf.mxu0
  %v113 = vadd.f32 0.0, %v112
  %114 = vdwg.mxu0
  %v116 = vsel %vm62, %v16, 0
  %v119 = vsel %vm62, %v32, 0
  %121 = vmatpush.xpose.msra.mxu0 0.0
  %122 = vmatpush.xpose.msra.mxu0 0.0
  %123 = vmatpush.xpose.msra.mxu0 0.0
  %124 = vmatpush.xpose.msra.mxu0 0.0
  %125 = vmatpush.xpose.msra.mxu0 0.0
  %126 = vmatpush.xpose.msra.mxu0 0.0
  %127 = vmatpush.xpose.msra.mxu0 0.0
  %128 = vmatpush.xpose.msra.mxu0 0.0
  %129 = vmatpush.xpose.msra.mxu0 0.0
  %130 = vmatpush.xpose.msra.mxu0 0.0
  %131 = vmatpush.xpose.msra.mxu0 0.0
  %132 = vmatpush.xpose.msra.mxu0 0.0
  %133 = vmatpush.xpose.msra.mxu0 0.0
  %134 = vmatpush.xpose.msra.mxu0 0.0
  %135 = vmatpush.xpose.msra.mxu0 0.0
  %136 = vmatpush.xpose.msra.mxu0 %v119
  %137 = vmatmul.f32.gmra.mxu0 %v116
  %v138 = vpop.f32.mrf.mxu0
  %v139 = vadd.f32 0.0, %v138
  %140 = vdwg.mxu0
  %v142 = vsel %vm62, %v17, 0
  %v145 = vsel %vm62, %v33, 0
  %147 = vmatpush.xpose.msra.mxu0 0.0
  %148 = vmatpush.xpose.msra.mxu0 0.0
  %149 = vmatpush.xpose.msra.mxu0 0.0
  %150 = vmatpush.xpose.msra.mxu0 0.0
  %151 = vmatpush.xpose.msra.mxu0 0.0
  %152 = vmatpush.xpose.msra.mxu0 0.0
  %153 = vmatpush.xpose.msra.mxu0 0.0
  %154 = vmatpush.xpose.msra.mxu0 0.0
  %155 = vmatpush.xpose.msra.mxu0 0.0
  %156 = vmatpush.xpose.msra.mxu0 0.0
  %157 = vmatpush.xpose.msra.mxu0 0.0
  %158 = vmatpush.xpose.msra.mxu0 0.0
  %159 = vmatpush.xpose.msra.mxu0 0.0
  %160 = vmatpush.xpose.msra.mxu0 0.0
  %161 = vmatpush.xpose.msra.mxu0 0.0
  %162 = vmatpush.xpose.msra.mxu0 %v145
  %163 = vmatmul.f32.gmra.mxu0 %v142
  %v164 = vpop.f32.mrf.mxu0
  %v165 = vadd.f32 0.0, %v164
  %166 = vdwg.mxu0
  %v168 = vsel %vm62, %v18, 0
  %v171 = vsel %vm62, %v34, 0
  %173 = vmatpush.xpose.msra.mxu0 0.0
  %174 = vmatpush.xpose.msra.mxu0 0.0
  %175 = vmatpush.xpose.msra.mxu0 0.0
  %176 = vmatpush.xpose.msra.mxu0 0.0
  %177 = vmatpush.xpose.msra.mxu0 0.0
  %178 = vmatpush.xpose.msra.mxu0 0.0
  %179 = vmatpush.xpose.msra.mxu0 0.0
  %180 = vmatpush.xpose.msra.mxu0 0.0
  %181 = vmatpush.xpose.msra.mxu0 0.0
  %182 = vmatpush.xpose.msra.mxu0 0.0
  %183 = vmatpush.xpose.msra.mxu0 0.0
  %184 = vmatpush.xpose.msra.mxu0 0.0
  %185 = vmatpush.xpose.msra.mxu0 0.0
  %186 = vmatpush.xpose.msra.mxu0 0.0
  %187 = vmatpush.xpose.msra.mxu0 0.0
  %188 = vmatpush.xpose.msra.mxu0 %v171
  %189 = vmatmul.f32.gmra.mxu0 %v168
  %v190 = vpop.f32.mrf.mxu0
  %v191 = vadd.f32 0.0, %v190
  %192 = vdwg.mxu0
  %v194 = vsel %vm62, %v19, 0
  %v197 = vsel %vm62, %v35, 0
  %199 = vmatpush.xpose.msra.mxu0 0.0
  %200 = vmatpush.xpose.msra.mxu0 0.0
  %201 = vmatpush.xpose.msra.mxu0 0.0
  %202 = vmatpush.xpose.msra.mxu0 0.0
  %203 = vmatpush.xpose.msra.mxu0 0.0
  %204 = vmatpush.xpose.msra.mxu0 0.0
  %205 = vmatpush.xpose.msra.mxu0 0.0
  %206 = vmatpush.xpose.msra.mxu0 0.0
  %207 = vmatpush.xpose.msra.mxu0 0.0
  %208 = vmatpush.xpose.msra.mxu0 0.0
  %209 = vmatpush.xpose.msra.mxu0 0.0
  %210 = vmatpush.xpose.msra.mxu0 0.0
  %211 = vmatpush.xpose.msra.mxu0 0.0
  %212 = vmatpush.xpose.msra.mxu0 0.0
  %213 = vmatpush.xpose.msra.mxu0 0.0
  %214 = vmatpush.xpose.msra.mxu0 %v197
  %215 = vmatmul.f32.gmra.mxu0 %v194
  %v216 = vpop.f32.mrf.mxu0
  %v217 = vadd.f32 0.0, %v216
  %218 = vdwg.mxu0
  %v220 = vsel %vm62, %v20, 0
  %v223 = vsel %vm62, %v36, 0
  %225 = vmatpush.xpose.msra.mxu0 0.0
  %226 = vmatpush.xpose.msra.mxu0 0.0
  %227 = vmatpush.xpose.msra.mxu0 0.0
  %228 = vmatpush.xpose.msra.mxu0 0.0
  %229 = vmatpush.xpose.msra.mxu0 0.0
  %230 = vmatpush.xpose.msra.mxu0 0.0
  %231 = vmatpush.xpose.msra.mxu0 0.0
  %232 = vmatpush.xpose.msra.mxu0 0.0
  %233 = vmatpush.xpose.msra.mxu0 0.0
  %234 = vmatpush.xpose.msra.mxu0 0.0
  %235 = vmatpush.xpose.msra.mxu0 0.0
  %236 = vmatpush.xpose.msra.mxu0 0.0
  %237 = vmatpush.xpose.msra.mxu0 0.0
  %238 = vmatpush.xpose.msra.mxu0 0.0
  %239 = vmatpush.xpose.msra.mxu0 0.0
  %240 = vmatpush.xpose.msra.mxu0 %v223
  %241 = vmatmul.f32.gmra.mxu0 %v220
  %v242 = vpop.f32.mrf.mxu0
  %v243 = vadd.f32 0.0, %v242
  %244 = vdwg.mxu0
  %v246 = vsel %vm62, %v21, 0
  %v249 = vsel %vm62, %v37, 0
  %251 = vmatpush.xpose.msra.mxu0 0.0
  %252 = vmatpush.xpose.msra.mxu0 0.0
  %253 = vmatpush.xpose.msra.mxu0 0.0
  %254 = vmatpush.xpose.msra.mxu0 0.0
  %255 = vmatpush.xpose.msra.mxu0 0.0
  %256 = vmatpush.xpose.msra.mxu0 0.0
  %257 = vmatpush.xpose.msra.mxu0 0.0
  %258 = vmatpush.xpose.msra.mxu0 0.0
  %259 = vmatpush.xpose.msra.mxu0 0.0
  %260 = vmatpush.xpose.msra.mxu0 0.0
  %261 = vmatpush.xpose.msra.mxu0 0.0
  %262 = vmatpush.xpose.msra.mxu0 0.0
  %263 = vmatpush.xpose.msra.mxu0 0.0
  %264 = vmatpush.xpose.msra.mxu0 0.0
  %265 = vmatpush.xpose.msra.mxu0 0.0
  %266 = vmatpush.xpose.msra.mxu0 %v249
  %267 = vmatmul.f32.gmra.mxu0 %v246
  %v268 = vpop.f32.mrf.mxu0
  %v269 = vadd.f32 0.0, %v268
  %270 = vdwg.mxu0
  %v272 = vsel %vm62, %v22, 0
  %v275 = vsel %vm62, %v38, 0
  %277 = vmatpush.xpose.msra.mxu0 0.0
  %278 = vmatpush.xpose.msra.mxu0 0.0
  %279 = vmatpush.xpose.msra.mxu0 0.0
  %280 = vmatpush.xpose.msra.mxu0 0.0
  %281 = vmatpush.xpose.msra.mxu0 0.0
  %282 = vmatpush.xpose.msra.mxu0 0.0
  %283 = vmatpush.xpose.msra.mxu0 0.0
  %284 = vmatpush.xpose.msra.mxu0 0.0
  %285 = vmatpush.xpose.msra.mxu0 0.0
  %286 = vmatpush.xpose.msra.mxu0 0.0
  %287 = vmatpush.xpose.msra.mxu0 0.0
  %288 = vmatpush.xpose.msra.mxu0 0.0
  %289 = vmatpush.xpose.msra.mxu0 0.0
  %290 = vmatpush.xpose.msra.mxu0 0.0
  %291 = vmatpush.xpose.msra.mxu0 0.0
  %292 = vmatpush.xpose.msra.mxu0 %v275
  %293 = vmatmul.f32.gmra.mxu0 %v272
  %v294 = vpop.f32.mrf.mxu0
  %v295 = vadd.f32 0.0, %v294
  %296 = vdwg.mxu0
  %v298 = vsel %vm62, %v23, 0
  %v301 = vsel %vm62, %v39, 0
  %303 = vmatpush.xpose.msra.mxu0 0.0
  %304 = vmatpush.xpose.msra.mxu0 0.0
  %305 = vmatpush.xpose.msra.mxu0 0.0
  %306 = vmatpush.xpose.msra.mxu0 0.0
  %307 = vmatpush.xpose.msra.mxu0 0.0
  %308 = vmatpush.xpose.msra.mxu0 0.0
  %309 = vmatpush.xpose.msra.mxu0 0.0
  %310 = vmatpush.xpose.msra.mxu0 0.0
  %311 = vmatpush.xpose.msra.mxu0 0.0
  %312 = vmatpush.xpose.msra.mxu0 0.0
  %313 = vmatpush.xpose.msra.mxu0 0.0
  %314 = vmatpush.xpose.msra.mxu0 0.0
  %315 = vmatpush.xpose.msra.mxu0 0.0
  %316 = vmatpush.xpose.msra.mxu0 0.0
  %317 = vmatpush.xpose.msra.mxu0 0.0
  %318 = vmatpush.xpose.msra.mxu0 %v301
  %319 = vmatmul.f32.gmra.mxu0 %v298
  %v320 = vpop.f32.mrf.mxu0
  %v321 = vadd.f32 0.0, %v320
  %322 = vdwg.mxu0
  %v324 = vsel %vm62, %v24, 0
  %v327 = vsel %vm62, %v40, 0
  %329 = vmatpush.xpose.msra.mxu0 0.0
  %330 = vmatpush.xpose.msra.mxu0 0.0
  %331 = vmatpush.xpose.msra.mxu0 0.0
  %332 = vmatpush.xpose.msra.mxu0 0.0
  %333 = vmatpush.xpose.msra.mxu0 0.0
  %334 = vmatpush.xpose.msra.mxu0 0.0
  %335 = vmatpush.xpose.msra.mxu0 0.0
  %336 = vmatpush.xpose.msra.mxu0 0.0
  %337 = vmatpush.xpose.msra.mxu0 0.0
  %338 = vmatpush.xpose.msra.mxu0 0.0
  %339 = vmatpush.xpose.msra.mxu0 0.0
  %340 = vmatpush.xpose.msra.mxu0 0.0
  %341 = vmatpush.xpose.msra.mxu0 0.0
  %342 = vmatpush.xpose.msra.mxu0 0.0
  %343 = vmatpush.xpose.msra.mxu0 0.0
  %344 = vmatpush.xpose.msra.mxu0 %v327
  %345 = vmatmul.f32.gmra.mxu0 %v324
  %v346 = vpop.f32.mrf.mxu0
  %v347 = vadd.f32 0.0, %v346
  %348 = vdwg.mxu0
  %v350 = vsel %vm62, %v25, 0
  %v353 = vsel %vm62, %v41, 0
  %355 = vmatpush.xpose.msra.mxu0 0.0
  %356 = vmatpush.xpose.msra.mxu0 0.0
  %357 = vmatpush.xpose.msra.mxu0 0.0
  %358 = vmatpush.xpose.msra.mxu0 0.0
  %359 = vmatpush.xpose.msra.mxu0 0.0
  %360 = vmatpush.xpose.msra.mxu0 0.0
  %361 = vmatpush.xpose.msra.mxu0 0.0
  %362 = vmatpush.xpose.msra.mxu0 0.0
  %363 = vmatpush.xpose.msra.mxu0 0.0
  %364 = vmatpush.xpose.msra.mxu0 0.0
  %365 = vmatpush.xpose.msra.mxu0 0.0
  %366 = vmatpush.xpose.msra.mxu0 0.0
  %367 = vmatpush.xpose.msra.mxu0 0.0
  %368 = vmatpush.xpose.msra.mxu0 0.0
  %369 = vmatpush.xpose.msra.mxu0 0.0
  %370 = vmatpush.xpose.msra.mxu0 %v353
  %371 = vmatmul.f32.gmra.mxu0 %v350
  %v372 = vpop.f32.mrf.mxu0
  %v373 = vadd.f32 0.0, %v372
  %374 = vdwg.mxu0
  %v376 = vsel %vm62, %v26, 0
  %v379 = vsel %vm62, %v42, 0
  %381 = vmatpush.xpose.msra.mxu0 0.0
  %382 = vmatpush.xpose.msra.mxu0 0.0
  %383 = vmatpush.xpose.msra.mxu0 0.0
  %384 = vmatpush.xpose.msra.mxu0 0.0
  %385 = vmatpush.xpose.msra.mxu0 0.0
  %386 = vmatpush.xpose.msra.mxu0 0.0
  %387 = vmatpush.xpose.msra.mxu0 0.0
  %388 = vmatpush.xpose.msra.mxu0 0.0
  %389 = vmatpush.xpose.msra.mxu0 0.0
  %390 = vmatpush.xpose.msra.mxu0 0.0
  %391 = vmatpush.xpose.msra.mxu0 0.0
  %392 = vmatpush.xpose.msra.mxu0 0.0
  %393 = vmatpush.xpose.msra.mxu0 0.0
  %394 = vmatpush.xpose.msra.mxu0 0.0
  %395 = vmatpush.xpose.msra.mxu0 0.0
  %396 = vmatpush.xpose.msra.mxu0 %v379
  %397 = vmatmul.f32.gmra.mxu0 %v376
  %v398 = vpop.f32.mrf.mxu0
  %v399 = vadd.f32 0.0, %v398
  %400 = vdwg.mxu0
  %v402 = vsel %vm62, %v27, 0
  %v405 = vsel %vm62, %v43, 0
  %407 = vmatpush.xpose.msra.mxu0 0.0
  %408 = vmatpush.xpose.msra.mxu0 0.0
  %409 = vmatpush.xpose.msra.mxu0 0.0
  %410 = vmatpush.xpose.msra.mxu0 0.0
  %411 = vmatpush.xpose.msra.mxu0 0.0
  %412 = vmatpush.xpose.msra.mxu0 0.0
  %413 = vmatpush.xpose.msra.mxu0 0.0
  %414 = vmatpush.xpose.msra.mxu0 0.0
  %415 = vmatpush.xpose.msra.mxu0 0.0
  %416 = vmatpush.xpose.msra.mxu0 0.0
  %417 = vmatpush.xpose.msra.mxu0 0.0
  %418 = vmatpush.xpose.msra.mxu0 0.0
  %419 = vmatpush.xpose.msra.mxu0 0.0
  %420 = vmatpush.xpose.msra.mxu0 0.0
  %421 = vmatpush.xpose.msra.mxu0 0.0
  %422 = vmatpush.xpose.msra.mxu0 %v405
  %423 = vmatmul.f32.gmra.mxu0 %v402
  %v424 = vpop.f32.mrf.mxu0
  %v425 = vadd.f32 0.0, %v424
  %426 = vdwg.mxu0
  %v428 = vsel %vm62, %v28, 0
  %v431 = vsel %vm62, %v44, 0
  %433 = vmatpush.xpose.msra.mxu0 0.0
  %434 = vmatpush.xpose.msra.mxu0 0.0
  %435 = vmatpush.xpose.msra.mxu0 0.0
  %436 = vmatpush.xpose.msra.mxu0 0.0
  %437 = vmatpush.xpose.msra.mxu0 0.0
  %438 = vmatpush.xpose.msra.mxu0 0.0
  %439 = vmatpush.xpose.msra.mxu0 0.0
  %440 = vmatpush.xpose.msra.mxu0 0.0
  %441 = vmatpush.xpose.msra.mxu0 0.0
  %442 = vmatpush.xpose.msra.mxu0 0.0
  %443 = vmatpush.xpose.msra.mxu0 0.0
  %444 = vmatpush.xpose.msra.mxu0 0.0
  %445 = vmatpush.xpose.msra.mxu0 0.0
  %446 = vmatpush.xpose.msra.mxu0 0.0
  %447 = vmatpush.xpose.msra.mxu0 0.0
  %448 = vmatpush.xpose.msra.mxu0 %v431
  %449 = vmatmul.f32.gmra.mxu0 %v428
  %v450 = vpop.f32.mrf.mxu0
  %v451 = vadd.f32 0.0, %v450
  %452 = vdwg.mxu0
  %v454 = vsel %vm62, %v29, 0
  %v457 = vsel %vm62, %v45, 0
  %459 = vmatpush.xpose.msra.mxu0 0.0
  %460 = vmatpush.xpose.msra.mxu0 0.0
  %461 = vmatpush.xpose.msra.mxu0 0.0
  %462 = vmatpush.xpose.msra.mxu0 0.0
  %463 = vmatpush.xpose.msra.mxu0 0.0
  %464 = vmatpush.xpose.msra.mxu0 0.0
  %465 = vmatpush.xpose.msra.mxu0 0.0
  %466 = vmatpush.xpose.msra.mxu0 0.0
  %467 = vmatpush.xpose.msra.mxu0 0.0
  %468 = vmatpush.xpose.msra.mxu0 0.0
  %469 = vmatpush.xpose.msra.mxu0 0.0
  %470 = vmatpush.xpose.msra.mxu0 0.0
  %471 = vmatpush.xpose.msra.mxu0 0.0
  %472 = vmatpush.xpose.msra.mxu0 0.0
  %473 = vmatpush.xpose.msra.mxu0 0.0
  %474 = vmatpush.xpose.msra.mxu0 %v457
  %475 = vmatmul.f32.gmra.mxu0 %v454
  %v476 = vpop.f32.mrf.mxu0
  %v477 = vadd.f32 0.0, %v476
  %478 = vdwg.mxu0
  %v479 = vmul.f32 %v87, 0.17677669
  %v480 = vmul.f32 %v113, 0.17677669
  %v481 = vmul.f32 %v139, 0.17677669
  %v482 = vmul.f32 %v165, 0.17677669
  %v483 = vmul.f32 %v191, 0.17677669
  %v484 = vmul.f32 %v217, 0.17677669
  %v485 = vmul.f32 %v243, 0.17677669
  %v486 = vmul.f32 %v269, 0.17677669
  %v487 = vmul.f32 %v295, 0.17677669
  %v488 = vmul.f32 %v321, 0.17677669
  %v489 = vmul.f32 %v347, 0.17677669
  %v490 = vmul.f32 %v373, 0.17677669
  %v491 = vmul.f32 %v399, 0.17677669
  %v492 = vmul.f32 %v425, 0.17677669
  %v493 = vmul.f32 %v451, 0.17677669
  %v494 = vmul.f32 %v477, 0.17677669
  %vm495 = vcmask 9216
  %v496 = vsel %vm495, %v479, -inf
  %497 = vmax.xlane.f32.xlu0 %v496
  %v498 = vpop.xlane.xlu0 %497
  %v499 = vsel %vm495, %v480, -inf
  %500 = vmax.xlane.f32.xlu0 %v499
  %v501 = vpop.xlane.xlu0 %500
  %v502 = vsel %vm495, %v481, -inf
  %503 = vmax.xlane.f32.xlu0 %v502
  %v504 = vpop.xlane.xlu0 %503
  %v505 = vsel %vm495, %v482, -inf
  %506 = vmax.xlane.f32.xlu0 %v505
  %v507 = vpop.xlane.xlu0 %506
  %v508 = vsel %vm495, %v483, -inf
  %509 = vmax.xlane.f32.xlu0 %v508
  %v510 = vpop.xlane.xlu0 %509
  %v511 = vsel %vm495, %v484, -inf
  %512 = vmax.xlane.f32.xlu0 %v511
  %v513 = vpop.xlane.xlu0 %512
  %v514 = vsel %vm495, %v485, -inf
  %515 = vmax.xlane.f32.xlu0 %v514
  %v516 = vpop.xlane.xlu0 %515
  %v517 = vsel %vm495, %v486, -inf
  %518 = vmax.xlane.f32.xlu0 %v517
  %v519 = vpop.xlane.xlu0 %518
  %v520 = vsel %vm495, %v487, -inf
  %521 = vmax.xlane.f32.xlu0 %v520
  %v522 = vpop.xlane.xlu0 %521
  %v523 = vsel %vm495, %v488, -inf
  %524 = vmax.xlane.f32.xlu0 %v523
  %v525 = vpop.xlane.xlu0 %524
  %v526 = vsel %vm495, %v489, -inf
  %527 = vmax.xlane.f32.xlu0 %v526
  %v528 = vpop.xlane.xlu0 %527
  %v529 = vsel %vm495, %v490, -inf
  %530 = vmax.xlane.f32.xlu0 %v529
  %v531 = vpop.xlane.xlu0 %530
  %v532 = vsel %vm495, %v491, -inf
  %533 = vmax.xlane.f32.xlu0 %v532
  %v534 = vpop.xlane.xlu0 %533
  %v535 = vsel %vm495, %v492, -inf
  %536 = vmax.xlane.f32.xlu0 %v535
  %v537 = vpop.xlane.xlu0 %536
  %v538 = vsel %vm495, %v493, -inf
  %539 = vmax.xlane.f32.xlu0 %v538
  %v540 = vpop.xlane.xlu0 %539
  %v541 = vsel %vm495, %v494, -inf
  %542 = vmax.xlane.f32.xlu0 %v541
  %v543 = vpop.xlane.xlu0 %542
  %v544 = vsub.f32 %v479, %v498
  %v545 = vsub.f32 %v480, %v501
  %v546 = vsub.f32 %v481, %v504
  %v547 = vsub.f32 %v482, %v507
  %v548 = vsub.f32 %v483, %v510
  %v549 = vsub.f32 %v484, %v513
  %v550 = vsub.f32 %v485, %v516
  %v551 = vsub.f32 %v486, %v519
  %v552 = vsub.f32 %v487, %v522
  %v553 = vsub.f32 %v488, %v525
  %v554 = vsub.f32 %v489, %v528
  %v555 = vsub.f32 %v490, %v531
  %v556 = vsub.f32 %v491, %v534
  %v557 = vsub.f32 %v492, %v537
  %v558 = vsub.f32 %v493, %v540
  %v559 = vsub.f32 %v494, %v543
  %v560 = vmul.f32 %v544, 1.442695
  %v561 = vpow.pop %v560
  %v562 = vmul.f32 %v545, 1.442695
  %v563 = vpow.pop %v562
  %v564 = vmul.f32 %v546, 1.442695
  %v565 = vpow.pop %v564
  %v566 = vmul.f32 %v547, 1.442695
  %v567 = vpow.pop %v566
  %v568 = vmul.f32 %v548, 1.442695
  %v569 = vpow.pop %v568
  %v570 = vmul.f32 %v549, 1.442695
  %v571 = vpow.pop %v570
  %v572 = vmul.f32 %v550, 1.442695
  %v573 = vpow.pop %v572
  %v574 = vmul.f32 %v551, 1.442695
  %v575 = vpow.pop %v574
  %v576 = vmul.f32 %v552, 1.442695
  %v577 = vpow.pop %v576
  %v578 = vmul.f32 %v553, 1.442695
  %v579 = vpow.pop %v578
  %v580 = vmul.f32 %v554, 1.442695
  %v581 = vpow.pop %v580
  %v582 = vmul.f32 %v555, 1.442695
  %v583 = vpow.pop %v582
  %v584 = vmul.f32 %v556, 1.442695
  %v585 = vpow.pop %v584
  %v586 = vmul.f32 %v557, 1.442695
  %v587 = vpow.pop %v586
  %v588 = vmul.f32 %v558, 1.442695
  %v589 = vpow.pop %v588
  %v590 = vmul.f32 %v559, 1.442695
  %v591 = vpow.pop %v590
  %v592 = vsel %vm495, %v561, 0.0
  %593 = vadd.xlane.f32.xlu0 %v592
  %v594 = vpop.xlane.xlu0 %593
  %v595 = vsel %vm495, %v563, 0.0
  %596 = vadd.xlane.f32.xlu0 %v595
  %v597 = vpop.xlane.xlu0 %596
  %v598 = vsel %vm495, %v565, 0.0
  %599 = vadd.xlane.f32.xlu0 %v598
  %v600 = vpop.xlane.xlu0 %599
  %v601 = vsel %vm495, %v567, 0.0
  %602 = vadd.xlane.f32.xlu0 %v601
  %v603 = vpop.xlane.xlu0 %602
  %v604 = vsel %vm495, %v569, 0.0
  %605 = vadd.xlane.f32.xlu0 %v604
  %v606 = vpop.xlane.xlu0 %605
  %v607 = vsel %vm495, %v571, 0.0
  %608 = vadd.xlane.f32.xlu0 %v607
  %v609 = vpop.xlane.xlu0 %608
  %v610 = vsel %vm495, %v573, 0.0
  %611 = vadd.xlane.f32.xlu0 %v610
  %v612 = vpop.xlane.xlu0 %611
  %v613 = vsel %vm495, %v575, 0.0
  %614 = vadd.xlane.f32.xlu0 %v613
  %v615 = vpop.xlane.xlu0 %614
  %v616 = vsel %vm495, %v577, 0.0
  %617 = vadd.xlane.f32.xlu0 %v616
  %v618 = vpop.xlane.xlu0 %617
  %v619 = vsel %vm495, %v579, 0.0
  %620 = vadd.xlane.f32.xlu0 %v619
  %v621 = vpop.xlane.xlu0 %620
  %v622 = vsel %vm495, %v581, 0.0
  %623 = vadd.xlane.f32.xlu0 %v622
  %v624 = vpop.xlane.xlu0 %623
  %v625 = vsel %vm495, %v583, 0.0
  %626 = vadd.xlane.f32.xlu0 %v625
  %v627 = vpop.xlane.xlu0 %626
  %v628 = vsel %vm495, %v585, 0.0
  %629 = vadd.xlane.f32.xlu0 %v628
  %v630 = vpop.xlane.xlu0 %629
  %v631 = vsel %vm495, %v587, 0.0
  %632 = vadd.xlane.f32.xlu0 %v631
  %v633 = vpop.xlane.xlu0 %632
  %v634 = vsel %vm495, %v589, 0.0
  %635 = vadd.xlane.f32.xlu0 %v634
  %v636 = vpop.xlane.xlu0 %635
  %v637 = vsel %vm495, %v591, 0.0
  %638 = vadd.xlane.f32.xlu0 %v637
  %v639 = vpop.xlane.xlu0 %638
  %v640 = vrcp.pop %v594
  %v641 = vmul.f32 %v594, %v640
  %v642 = vsub.f32 1.0, %v641
  %v643 = vmul.f32 %v640, %v642
  %v644 = vadd.f32 %v640, %v643
  %vm645 = vweird.f32 %v594
  %vm646 = vweird.f32 %v640
  %vm647 = vmor %vm645, %vm646
  %v648 = vsel %vm647, %v640, %v644
  %v649 = vand.u32 2147483647, %v594
  %vm650 = vcmp.eq.f32.partialorder %v649, 8.507059e+37
  %v651 = vand.u32 %v594, 2147483648
  %v652 = vor.u32 1.1754944e-38, %v651
  %v653 = vsel %vm650, %v652, %v648
  %v654 = vmul.f32 %v561, %v653
  %v655 = vrcp.pop %v597
  %v656 = vmul.f32 %v597, %v655
  %v657 = vsub.f32 1.0, %v656
  %v658 = vmul.f32 %v655, %v657
  %v659 = vadd.f32 %v655, %v658
  %vm660 = vweird.f32 %v597
  %vm661 = vweird.f32 %v655
  %vm662 = vmor %vm660, %vm661
  %v663 = vsel %vm662, %v655, %v659
  %v664 = vand.u32 2147483647, %v597
  %vm665 = vcmp.eq.f32.partialorder %v664, 8.507059e+37
  %v666 = vand.u32 %v597, 2147483648
  %v667 = vor.u32 1.1754944e-38, %v666
  %v668 = vsel %vm665, %v667, %v663
  %v669 = vmul.f32 %v563, %v668
  %v670 = vrcp.pop %v600
  %v671 = vmul.f32 %v600, %v670
  %v672 = vsub.f32 1.0, %v671
  %v673 = vmul.f32 %v670, %v672
  %v674 = vadd.f32 %v670, %v673
  %vm675 = vweird.f32 %v600
  %vm676 = vweird.f32 %v670
  %vm677 = vmor %vm675, %vm676
  %v678 = vsel %vm677, %v670, %v674
  %v679 = vand.u32 2147483647, %v600
  %vm680 = vcmp.eq.f32.partialorder %v679, 8.507059e+37
  %v681 = vand.u32 %v600, 2147483648
  %v682 = vor.u32 1.1754944e-38, %v681
  %v683 = vsel %vm680, %v682, %v678
  %v684 = vmul.f32 %v565, %v683
  %v685 = vrcp.pop %v603
  %v686 = vmul.f32 %v603, %v685
  %v687 = vsub.f32 1.0, %v686
  %v688 = vmul.f32 %v685, %v687
  %v689 = vadd.f32 %v685, %v688
  %vm690 = vweird.f32 %v603
  %vm691 = vweird.f32 %v685
  %vm692 = vmor %vm690, %vm691
  %v693 = vsel %vm692, %v685, %v689
  %v694 = vand.u32 2147483647, %v603
  %vm695 = vcmp.eq.f32.partialorder %v694, 8.507059e+37
  %v696 = vand.u32 %v603, 2147483648
  %v697 = vor.u32 1.1754944e-38, %v696
  %v698 = vsel %vm695, %v697, %v693
  %v699 = vmul.f32 %v567, %v698
  %v700 = vrcp.pop %v606
  %v701 = vmul.f32 %v606, %v700
  %v702 = vsub.f32 1.0, %v701
  %v703 = vmul.f32 %v700, %v702
  %v704 = vadd.f32 %v700, %v703
  %vm705 = vweird.f32 %v606
  %vm706 = vweird.f32 %v700
  %vm707 = vmor %vm705, %vm706
  %v708 = vsel %vm707, %v700, %v704
  %v709 = vand.u32 2147483647, %v606
  %vm710 = vcmp.eq.f32.partialorder %v709, 8.507059e+37
  %v711 = vand.u32 %v606, 2147483648
  %v712 = vor.u32 1.1754944e-38, %v711
  %v713 = vsel %vm710, %v712, %v708
  %v714 = vmul.f32 %v569, %v713
  %v715 = vrcp.pop %v609
  %v716 = vmul.f32 %v609, %v715
  %v717 = vsub.f32 1.0, %v716
  %v718 = vmul.f32 %v715, %v717
  %v719 = vadd.f32 %v715, %v718
  %vm720 = vweird.f32 %v609
  %vm721 = vweird.f32 %v715
  %vm722 = vmor %vm720, %vm721
  %v723 = vsel %vm722, %v715, %v719
  %v724 = vand.u32 2147483647, %v609
  %vm725 = vcmp.eq.f32.partialorder %v724, 8.507059e+37
  %v726 = vand.u32 %v609, 2147483648
  %v727 = vor.u32 1.1754944e-38, %v726
  %v728 = vsel %vm725, %v727, %v723
  %v729 = vmul.f32 %v571, %v728
  %v730 = vrcp.pop %v612
  %v731 = vmul.f32 %v612, %v730
  %v732 = vsub.f32 1.0, %v731
  %v733 = vmul.f32 %v730, %v732
  %v734 = vadd.f32 %v730, %v733
  %vm735 = vweird.f32 %v612
  %vm736 = vweird.f32 %v730
  %vm737 = vmor %vm735, %vm736
  %v738 = vsel %vm737, %v730, %v734
  %v739 = vand.u32 2147483647, %v612
  %vm740 = vcmp.eq.f32.partialorder %v739, 8.507059e+37
  %v741 = vand.u32 %v612, 2147483648
  %v742 = vor.u32 1.1754944e-38, %v741
  %v743 = vsel %vm740, %v742, %v738
  %v744 = vmul.f32 %v573, %v743
  %v745 = vrcp.pop %v615
  %v746 = vmul.f32 %v615, %v745
  %v747 = vsub.f32 1.0, %v746
  %v748 = vmul.f32 %v745, %v747
  %v749 = vadd.f32 %v745, %v748
  %vm750 = vweird.f32 %v615
  %vm751 = vweird.f32 %v745
  %vm752 = vmor %vm750, %vm751
  %v753 = vsel %vm752, %v745, %v749
  %v754 = vand.u32 2147483647, %v615
  %vm755 = vcmp.eq.f32.partialorder %v754, 8.507059e+37
  %v756 = vand.u32 %v615, 2147483648
  %v757 = vor.u32 1.1754944e-38, %v756
  %v758 = vsel %vm755, %v757, %v753
  %v759 = vmul.f32 %v575, %v758
  %v760 = vrcp.pop %v618
  %v761 = vmul.f32 %v618, %v760
  %v762 = vsub.f32 1.0, %v761
  %v763 = vmul.f32 %v760, %v762
  %v764 = vadd.f32 %v760, %v763
  %vm765 = vweird.f32 %v618
  %vm766 = vweird.f32 %v760
  %vm767 = vmor %vm765, %vm766
  %v768 = vsel %vm767, %v760, %v764
  %v769 = vand.u32 2147483647, %v618
  %vm770 = vcmp.eq.f32.partialorder %v769, 8.507059e+37
  %v771 = vand.u32 %v618, 2147483648
  %v772 = vor.u32 1.1754944e-38, %v771
  %v773 = vsel %vm770, %v772, %v768
  %v774 = vmul.f32 %v577, %v773
  %v775 = vrcp.pop %v621
  %v776 = vmul.f32 %v621, %v775
  %v777 = vsub.f32 1.0, %v776
  %v778 = vmul.f32 %v775, %v777
  %v779 = vadd.f32 %v775, %v778
  %vm780 = vweird.f32 %v621
  %vm781 = vweird.f32 %v775
  %vm782 = vmor %vm780, %vm781
  %v783 = vsel %vm782, %v775, %v779
  %v784 = vand.u32 2147483647, %v621
  %vm785 = vcmp.eq.f32.partialorder %v784, 8.507059e+37
  %v786 = vand.u32 %v621, 2147483648
  %v787 = vor.u32 1.1754944e-38, %v786
  %v788 = vsel %vm785, %v787, %v783
  %v789 = vmul.f32 %v579, %v788
  %v790 = vrcp.pop %v624
  %v791 = vmul.f32 %v624, %v790
  %v792 = vsub.f32 1.0, %v791
  %v793 = vmul.f32 %v790, %v792
  %v794 = vadd.f32 %v790, %v793
  %vm795 = vweird.f32 %v624
  %vm796 = vweird.f32 %v790
  %vm797 = vmor %vm795, %vm796
  %v798 = vsel %vm797, %v790, %v794
  %v799 = vand.u32 2147483647, %v624
  %vm800 = vcmp.eq.f32.partialorder %v799, 8.507059e+37
  %v801 = vand.u32 %v624, 2147483648
  %v802 = vor.u32 1.1754944e-38, %v801
  %v803 = vsel %vm800, %v802, %v798
  %v804 = vmul.f32 %v581, %v803
  %v805 = vrcp.pop %v627
  %v806 = vmul.f32 %v627, %v805
  %v807 = vsub.f32 1.0, %v806
  %v808 = vmul.f32 %v805, %v807
  %v809 = vadd.f32 %v805, %v808
  %vm810 = vweird.f32 %v627
  %vm811 = vweird.f32 %v805
  %vm812 = vmor %vm810, %vm811
  %v813 = vsel %vm812, %v805, %v809
  %v814 = vand.u32 2147483647, %v627
  %vm815 = vcmp.eq.f32.partialorder %v814, 8.507059e+37
  %v816 = vand.u32 %v627, 2147483648
  %v817 = vor.u32 1.1754944e-38, %v816
  %v818 = vsel %vm815, %v817, %v813
  %v819 = vmul.f32 %v583, %v818
  %v820 = vrcp.pop %v630
  %v821 = vmul.f32 %v630, %v820
  %v822 = vsub.f32 1.0, %v821
  %v823 = vmul.f32 %v820, %v822
  %v824 = vadd.f32 %v820, %v823
  %vm825 = vweird.f32 %v630
  %vm826 = vweird.f32 %v820
  %vm827 = vmor %vm825, %vm826
  %v828 = vsel %vm827, %v820, %v824
  %v829 = vand.u32 2147483647, %v630
  %vm830 = vcmp.eq.f32.partialorder %v829, 8.507059e+37
  %v831 = vand.u32 %v630, 2147483648
  %v832 = vor.u32 1.1754944e-38, %v831
  %v833 = vsel %vm830, %v832, %v828
  %v834 = vmul.f32 %v585, %v833
  %v835 = vrcp.pop %v633
  %v836 = vmul.f32 %v633, %v835
  %v837 = vsub.f32 1.0, %v836
  %v838 = vmul.f32 %v835, %v837
  %v839 = vadd.f32 %v835, %v838
  %vm840 = vweird.f32 %v633
  %vm841 = vweird.f32 %v835
  %vm842 = vmor %vm840, %vm841
  %v843 = vsel %vm842, %v835, %v839
  %v844 = vand.u32 2147483647, %v633
  %vm845 = vcmp.eq.f32.partialorder %v844, 8.507059e+37
  %v846 = vand.u32 %v633, 2147483648
  %v847 = vor.u32 1.1754944e-38, %v846
  %v848 = vsel %vm845, %v847, %v843
  %v849 = vmul.f32 %v587, %v848
  %v850 = vrcp.pop %v636
  %v851 = vmul.f32 %v636, %v850
  %v852 = vsub.f32 1.0, %v851
  %v853 = vmul.f32 %v850, %v852
  %v854 = vadd.f32 %v850, %v853
  %vm855 = vweird.f32 %v636
  %vm856 = vweird.f32 %v850
  %vm857 = vmor %vm855, %vm856
  %v858 = vsel %vm857, %v850, %v854
  %v859 = vand.u32 2147483647, %v636
  %vm860 = vcmp.eq.f32.partialorder %v859, 8.507059e+37
  %v861 = vand.u32 %v636, 2147483648
  %v862 = vor.u32 1.1754944e-38, %v861
  %v863 = vsel %vm860, %v862, %v858
  %v864 = vmul.f32 %v589, %v863
  %v865 = vrcp.pop %v639
  %v866 = vmul.f32 %v639, %v865
  %v867 = vsub.f32 1.0, %v866
  %v868 = vmul.f32 %v865, %v867
  %v869 = vadd.f32 %v865, %v868
  %vm870 = vweird.f32 %v639
  %vm871 = vweird.f32 %v865
  %vm872 = vmor %vm870, %vm871
  %v873 = vsel %vm872, %v865, %v869
  %v874 = vand.u32 2147483647, %v639
  %vm875 = vcmp.eq.f32.partialorder %v874, 8.507059e+37
  %v876 = vand.u32 %v639, 2147483648
  %v877 = vor.u32 1.1754944e-38, %v876
  %v878 = vsel %vm875, %v877, %v873
  %v879 = vmul.f32 %v591, %v878
  %vm880 = vcmask 15360
  %v882 = vsel %vm880, %v654, 0
  %vm884 = vcmask 1041408
  %v886 = vsel %vm884, %v46, 0
  %888 = vmatpush.msra.mxu0 0.0
  %889 = vmatpush.msra.mxu0 0.0
  %890 = vmatpush.msra.mxu0 0.0
  %891 = vmatpush.msra.mxu0 0.0
  %892 = vmatpush.msra.mxu0 0.0
  %893 = vmatpush.msra.mxu0 0.0
  %894 = vmatpush.msra.mxu0 0.0
  %895 = vmatpush.msra.mxu0 0.0
  %896 = vmatpush.msra.mxu0 0.0
  %897 = vmatpush.msra.mxu0 0.0
  %898 = vmatpush.msra.mxu0 0.0
  %899 = vmatpush.msra.mxu0 0.0
  %900 = vmatpush.msra.mxu0 0.0
  %901 = vmatpush.msra.mxu0 0.0
  %902 = vmatpush.msra.mxu0 0.0
  %903 = vmatpush.msra.mxu0 %v886
  %904 = vmatmul.f32.gmra.mxu0 %v882
  %v905 = vpop.f32.mrf.mxu0
  %v906 = vadd.f32 0.0, %v905
  %907 = vdwg.mxu0
  %v909 = vsel %vm880, %v669, 0
  %v912 = vsel %vm884, %v47, 0
  %914 = vmatpush.msra.mxu0 0.0
  %915 = vmatpush.msra.mxu0 0.0
  %916 = vmatpush.msra.mxu0 0.0
  %917 = vmatpush.msra.mxu0 0.0
  %918 = vmatpush.msra.mxu0 0.0
  %919 = vmatpush.msra.mxu0 0.0
  %920 = vmatpush.msra.mxu0 0.0
  %921 = vmatpush.msra.mxu0 0.0
  %922 = vmatpush.msra.mxu0 0.0
  %923 = vmatpush.msra.mxu0 0.0
  %924 = vmatpush.msra.mxu0 0.0
  %925 = vmatpush.msra.mxu0 0.0
  %926 = vmatpush.msra.mxu0 0.0
  %927 = vmatpush.msra.mxu0 0.0
  %928 = vmatpush.msra.mxu0 0.0
  %929 = vmatpush.msra.mxu0 %v912
  %930 = vmatmul.f32.gmra.mxu0 %v909
  %v931 = vpop.f32.mrf.mxu0
  %v932 = vadd.f32 0.0, %v931
  %933 = vdwg.mxu0
  %v935 = vsel %vm880, %v684, 0
  %v938 = vsel %vm884, %v48, 0
  %940 = vmatpush.msra.mxu0 0.0
  %941 = vmatpush.msra.mxu0 0.0
  %942 = vmatpush.msra.mxu0 0.0
  %943 = vmatpush.msra.mxu0 0.0
  %944 = vmatpush.msra.mxu0 0.0
  %945 = vmatpush.msra.mxu0 0.0
  %946 = vmatpush.msra.mxu0 0.0
  %947 = vmatpush.msra.mxu0 0.0
  %948 = vmatpush.msra.mxu0 0.0
  %949 = vmatpush.msra.mxu0 0.0
  %950 = vmatpush.msra.mxu0 0.0
  %951 = vmatpush.msra.mxu0 0.0
  %952 = vmatpush.msra.mxu0 0.0
  %953 = vmatpush.msra.mxu0 0.0
  %954 = vmatpush.msra.mxu0 0.0
  %955 = vmatpush.msra.mxu0 %v938
  %956 = vmatmul.f32.gmra.mxu0 %v935
  %v957 = vpop.f32.mrf.mxu0
  %v958 = vadd.f32 0.0, %v957
  %959 = vdwg.mxu0
  %v961 = vsel %vm880, %v699, 0
  %v964 = vsel %vm884, %v49, 0
  %966 = vmatpush.msra.mxu0 0.0
  %967 = vmatpush.msra.mxu0 0.0
  %968 = vmatpush.msra.mxu0 0.0
  %969 = vmatpush.msra.mxu0 0.0
  %970 = vmatpush.msra.mxu0 0.0
  %971 = vmatpush.msra.mxu0 0.0
  %972 = vmatpush.msra.mxu0 0.0
  %973 = vmatpush.msra.mxu0 0.0
  %974 = vmatpush.msra.mxu0 0.0
  %975 = vmatpush.msra.mxu0 0.0
  %976 = vmatpush.msra.mxu0 0.0
  %977 = vmatpush.msra.mxu0 0.0
  %978 = vmatpush.msra.mxu0 0.0
  %979 = vmatpush.msra.mxu0 0.0
  %980 = vmatpush.msra.mxu0 0.0
  %981 = vmatpush.msra.mxu0 %v964
  %982 = vmatmul.f32.gmra.mxu0 %v961
  %v983 = vpop.f32.mrf.mxu0
  %v984 = vadd.f32 0.0, %v983
  %985 = vdwg.mxu0
  %v987 = vsel %vm880, %v714, 0
  %v990 = vsel %vm884, %v50, 0
  %992 = vmatpush.msra.mxu0 0.0
  %993 = vmatpush.msra.mxu0 0.0
  %994 = vmatpush.msra.mxu0 0.0
  %995 = vmatpush.msra.mxu0 0.0
  %996 = vmatpush.msra.mxu0 0.0
  %997 = vmatpush.msra.mxu0 0.0
  %998 = vmatpush.msra.mxu0 0.0
  %999 = vmatpush.msra.mxu0 0.0
  %1000 = vmatpush.msra.mxu0 0.0
  %1001 = vmatpush.msra.mxu0 0.0
  %1002 = vmatpush.msra.mxu0 0.0
  %1003 = vmatpush.msra.mxu0 0.0
  %1004 = vmatpush.msra.mxu0 0.0
  %1005 = vmatpush.msra.mxu0 0.0
  %1006 = vmatpush.msra.mxu0 0.0
  %1007 = vmatpush.msra.mxu0 %v990
  %1008 = vmatmul.f32.gmra.mxu0 %v987
  %v1009 = vpop.f32.mrf.mxu0
  %v1010 = vadd.f32 0.0, %v1009
  %1011 = vdwg.mxu0
  %v1013 = vsel %vm880, %v729, 0
  %v1016 = vsel %vm884, %v51, 0
  %1018 = vmatpush.msra.mxu0 0.0
  %1019 = vmatpush.msra.mxu0 0.0
  %1020 = vmatpush.msra.mxu0 0.0
  %1021 = vmatpush.msra.mxu0 0.0
  %1022 = vmatpush.msra.mxu0 0.0
  %1023 = vmatpush.msra.mxu0 0.0
  %1024 = vmatpush.msra.mxu0 0.0
  %1025 = vmatpush.msra.mxu0 0.0
  %1026 = vmatpush.msra.mxu0 0.0
  %1027 = vmatpush.msra.mxu0 0.0
  %1028 = vmatpush.msra.mxu0 0.0
  %1029 = vmatpush.msra.mxu0 0.0
  %1030 = vmatpush.msra.mxu0 0.0
  %1031 = vmatpush.msra.mxu0 0.0
  %1032 = vmatpush.msra.mxu0 0.0
  %1033 = vmatpush.msra.mxu0 %v1016
  %1034 = vmatmul.f32.gmra.mxu0 %v1013
  %v1035 = vpop.f32.mrf.mxu0
  %v1036 = vadd.f32 0.0, %v1035
  %1037 = vdwg.mxu0
  %v1039 = vsel %vm880, %v744, 0
  %v1042 = vsel %vm884, %v52, 0
  %1044 = vmatpush.msra.mxu0 0.0
  %1045 = vmatpush.msra.mxu0 0.0
  %1046 = vmatpush.msra.mxu0 0.0
  %1047 = vmatpush.msra.mxu0 0.0
  %1048 = vmatpush.msra.mxu0 0.0
  %1049 = vmatpush.msra.mxu0 0.0
  %1050 = vmatpush.msra.mxu0 0.0
  %1051 = vmatpush.msra.mxu0 0.0
  %1052 = vmatpush.msra.mxu0 0.0
  %1053 = vmatpush.msra.mxu0 0.0
  %1054 = vmatpush.msra.mxu0 0.0
  %1055 = vmatpush.msra.mxu0 0.0
  %1056 = vmatpush.msra.mxu0 0.0
  %1057 = vmatpush.msra.mxu0 0.0
  %1058 = vmatpush.msra.mxu0 0.0
  %1059 = vmatpush.msra.mxu0 %v1042
  %1060 = vmatmul.f32.gmra.mxu0 %v1039
  %v1061 = vpop.f32.mrf.mxu0
  %v1062 = vadd.f32 0.0, %v1061
  %1063 = vdwg.mxu0
  %v1065 = vsel %vm880, %v759, 0
  %v1068 = vsel %vm884, %v53, 0
  %1070 = vmatpush.msra.mxu0 0.0
  %1071 = vmatpush.msra.mxu0 0.0
  %1072 = vmatpush.msra.mxu0 0.0
  %1073 = vmatpush.msra.mxu0 0.0
  %1074 = vmatpush.msra.mxu0 0.0
  %1075 = vmatpush.msra.mxu0 0.0
  %1076 = vmatpush.msra.mxu0 0.0
  %1077 = vmatpush.msra.mxu0 0.0
  %1078 = vmatpush.msra.mxu0 0.0
  %1079 = vmatpush.msra.mxu0 0.0
  %1080 = vmatpush.msra.mxu0 0.0
  %1081 = vmatpush.msra.mxu0 0.0
  %1082 = vmatpush.msra.mxu0 0.0
  %1083 = vmatpush.msra.mxu0 0.0
  %1084 = vmatpush.msra.mxu0 0.0
  %1085 = vmatpush.msra.mxu0 %v1068
  %1086 = vmatmul.f32.gmra.mxu0 %v1065
  %v1087 = vpop.f32.mrf.mxu0
  %v1088 = vadd.f32 0.0, %v1087
  %1089 = vdwg.mxu0
  %v1091 = vsel %vm880, %v774, 0
  %v1094 = vsel %vm884, %v54, 0
  %1096 = vmatpush.msra.mxu0 0.0
  %1097 = vmatpush.msra.mxu0 0.0
  %1098 = vmatpush.msra.mxu0 0.0
  %1099 = vmatpush.msra.mxu0 0.0
  %1100 = vmatpush.msra.mxu0 0.0
  %1101 = vmatpush.msra.mxu0 0.0
  %1102 = vmatpush.msra.mxu0 0.0
  %1103 = vmatpush.msra.mxu0 0.0
  %1104 = vmatpush.msra.mxu0 0.0
  %1105 = vmatpush.msra.mxu0 0.0
  %1106 = vmatpush.msra.mxu0 0.0
  %1107 = vmatpush.msra.mxu0 0.0
  %1108 = vmatpush.msra.mxu0 0.0
  %1109 = vmatpush.msra.mxu0 0.0
  %1110 = vmatpush.msra.mxu0 0.0
  %1111 = vmatpush.msra.mxu0 %v1094
  %1112 = vmatmul.f32.gmra.mxu0 %v1091
  %v1113 = vpop.f32.mrf.mxu0
  %v1114 = vadd.f32 0.0, %v1113
  %1115 = vdwg.mxu0
  %v1117 = vsel %vm880, %v789, 0
  %v1120 = vsel %vm884, %v55, 0
  %1122 = vmatpush.msra.mxu0 0.0
  %1123 = vmatpush.msra.mxu0 0.0
  %1124 = vmatpush.msra.mxu0 0.0
  %1125 = vmatpush.msra.mxu0 0.0
  %1126 = vmatpush.msra.mxu0 0.0
  %1127 = vmatpush.msra.mxu0 0.0
  %1128 = vmatpush.msra.mxu0 0.0
  %1129 = vmatpush.msra.mxu0 0.0
  %1130 = vmatpush.msra.mxu0 0.0
  %1131 = vmatpush.msra.mxu0 0.0
  %1132 = vmatpush.msra.mxu0 0.0
  %1133 = vmatpush.msra.mxu0 0.0
  %1134 = vmatpush.msra.mxu0 0.0
  %1135 = vmatpush.msra.mxu0 0.0
  %1136 = vmatpush.msra.mxu0 0.0
  %1137 = vmatpush.msra.mxu0 %v1120
  %1138 = vmatmul.f32.gmra.mxu0 %v1117
  %v1139 = vpop.f32.mrf.mxu0
  %v1140 = vadd.f32 0.0, %v1139
  %1141 = vdwg.mxu0
  %v1143 = vsel %vm880, %v804, 0
  %v1146 = vsel %vm884, %v56, 0
  %1148 = vmatpush.msra.mxu0 0.0
  %1149 = vmatpush.msra.mxu0 0.0
  %1150 = vmatpush.msra.mxu0 0.0
  %1151 = vmatpush.msra.mxu0 0.0
  %1152 = vmatpush.msra.mxu0 0.0
  %1153 = vmatpush.msra.mxu0 0.0
  %1154 = vmatpush.msra.mxu0 0.0
  %1155 = vmatpush.msra.mxu0 0.0
  %1156 = vmatpush.msra.mxu0 0.0
  %1157 = vmatpush.msra.mxu0 0.0
  %1158 = vmatpush.msra.mxu0 0.0
  %1159 = vmatpush.msra.mxu0 0.0
  %1160 = vmatpush.msra.mxu0 0.0
  %1161 = vmatpush.msra.mxu0 0.0
  %1162 = vmatpush.msra.mxu0 0.0
  %1163 = vmatpush.msra.mxu0 %v1146
  %1164 = vmatmul.f32.gmra.mxu0 %v1143
  %v1165 = vpop.f32.mrf.mxu0
  %v1166 = vadd.f32 0.0, %v1165
  %1167 = vdwg.mxu0
  %v1169 = vsel %vm880, %v819, 0
  %v1172 = vsel %vm884, %v57, 0
  %1174 = vmatpush.msra.mxu0 0.0
  %1175 = vmatpush.msra.mxu0 0.0
  %1176 = vmatpush.msra.mxu0 0.0
  %1177 = vmatpush.msra.mxu0 0.0
  %1178 = vmatpush.msra.mxu0 0.0
  %1179 = vmatpush.msra.mxu0 0.0
  %1180 = vmatpush.msra.mxu0 0.0
  %1181 = vmatpush.msra.mxu0 0.0
  %1182 = vmatpush.msra.mxu0 0.0
  %1183 = vmatpush.msra.mxu0 0.0
  %1184 = vmatpush.msra.mxu0 0.0
  %1185 = vmatpush.msra.mxu0 0.0
  %1186 = vmatpush.msra.mxu0 0.0
  %1187 = vmatpush.msra.mxu0 0.0
  %1188 = vmatpush.msra.mxu0 0.0
  %1189 = vmatpush.msra.mxu0 %v1172
  %1190 = vmatmul.f32.gmra.mxu0 %v1169
  %v1191 = vpop.f32.mrf.mxu0
  %v1192 = vadd.f32 0.0, %v1191
  %1193 = vdwg.mxu0
  %v1195 = vsel %vm880, %v834, 0
  %v1198 = vsel %vm884, %v58, 0
  %1200 = vmatpush.msra.mxu0 0.0
  %1201 = vmatpush.msra.mxu0 0.0
  %1202 = vmatpush.msra.mxu0 0.0
  %1203 = vmatpush.msra.mxu0 0.0
  %1204 = vmatpush.msra.mxu0 0.0
  %1205 = vmatpush.msra.mxu0 0.0
  %1206 = vmatpush.msra.mxu0 0.0
  %1207 = vmatpush.msra.mxu0 0.0
  %1208 = vmatpush.msra.mxu0 0.0
  %1209 = vmatpush.msra.mxu0 0.0
  %1210 = vmatpush.msra.mxu0 0.0
  %1211 = vmatpush.msra.mxu0 0.0
  %1212 = vmatpush.msra.mxu0 0.0
  %1213 = vmatpush.msra.mxu0 0.0
  %1214 = vmatpush.msra.mxu0 0.0
  %1215 = vmatpush.msra.mxu0 %v1198
  %1216 = vmatmul.f32.gmra.mxu0 %v1195
  %v1217 = vpop.f32.mrf.mxu0
  %v1218 = vadd.f32 0.0, %v1217
  %1219 = vdwg.mxu0
  %v1221 = vsel %vm880, %v849, 0
  %v1224 = vsel %vm884, %v59, 0
  %1226 = vmatpush.msra.mxu0 0.0
  %1227 = vmatpush.msra.mxu0 0.0
  %1228 = vmatpush.msra.mxu0 0.0
  %1229 = vmatpush.msra.mxu0 0.0
  %1230 = vmatpush.msra.mxu0 0.0
  %1231 = vmatpush.msra.mxu0 0.0
  %1232 = vmatpush.msra.mxu0 0.0
  %1233 = vmatpush.msra.mxu0 0.0
  %1234 = vmatpush.msra.mxu0 0.0
  %1235 = vmatpush.msra.mxu0 0.0
  %1236 = vmatpush.msra.mxu0 0.0
  %1237 = vmatpush.msra.mxu0 0.0
  %1238 = vmatpush.msra.mxu0 0.0
  %1239 = vmatpush.msra.mxu0 0.0
  %1240 = vmatpush.msra.mxu0 0.0
  %1241 = vmatpush.msra.mxu0 %v1224
  %1242 = vmatmul.f32.gmra.mxu0 %v1221
  %v1243 = vpop.f32.mrf.mxu0
  %v1244 = vadd.f32 0.0, %v1243
  %1245 = vdwg.mxu0
  %v1247 = vsel %vm880, %v864, 0
  %v1250 = vsel %vm884, %v60, 0
  %1252 = vmatpush.msra.mxu0 0.0
  %1253 = vmatpush.msra.mxu0 0.0
  %1254 = vmatpush.msra.mxu0 0.0
  %1255 = vmatpush.msra.mxu0 0.0
  %1256 = vmatpush.msra.mxu0 0.0
  %1257 = vmatpush.msra.mxu0 0.0
  %1258 = vmatpush.msra.mxu0 0.0
  %1259 = vmatpush.msra.mxu0 0.0
  %1260 = vmatpush.msra.mxu0 0.0
  %1261 = vmatpush.msra.mxu0 0.0
  %1262 = vmatpush.msra.mxu0 0.0
  %1263 = vmatpush.msra.mxu0 0.0
  %1264 = vmatpush.msra.mxu0 0.0
  %1265 = vmatpush.msra.mxu0 0.0
  %1266 = vmatpush.msra.mxu0 0.0
  %1267 = vmatpush.msra.mxu0 %v1250
  %1268 = vmatmul.f32.gmra.mxu0 %v1247
  %v1269 = vpop.f32.mrf.mxu0
  %v1270 = vadd.f32 0.0, %v1269
  %1271 = vdwg.mxu0
  %v1273 = vsel %vm880, %v879, 0
  %v1276 = vsel %vm884, %v61, 0
  %1278 = vmatpush.msra.mxu0 0.0
  %1279 = vmatpush.msra.mxu0 0.0
  %1280 = vmatpush.msra.mxu0 0.0
  %1281 = vmatpush.msra.mxu0 0.0
  %1282 = vmatpush.msra.mxu0 0.0
  %1283 = vmatpush.msra.mxu0 0.0
  %1284 = vmatpush.msra.mxu0 0.0
  %1285 = vmatpush.msra.mxu0 0.0
  %1286 = vmatpush.msra.mxu0 0.0
  %1287 = vmatpush.msra.mxu0 0.0
  %1288 = vmatpush.msra.mxu0 0.0
  %1289 = vmatpush.msra.mxu0 0.0
  %1290 = vmatpush.msra.mxu0 0.0
  %1291 = vmatpush.msra.mxu0 0.0
  %1292 = vmatpush.msra.mxu0 0.0
  %1293 = vmatpush.msra.mxu0 %v1276
  %1294 = vmatmul.f32.gmra.mxu0 %v1273
  %v1295 = vpop.f32.mrf.mxu0
  %v1296 = vadd.f32 0.0, %v1295
  %1297 = vdwg.mxu0
  %vm1298 = vcmask 254976
  %1299 = vst.msk [vmem:[%s3] sm:$0x3] %vm1298, %v906
  %1300 = vst.msk [vmem:[%s3 + $0x2] sm:$0x3] %vm1298, %v932
  %1301 = vst.msk [vmem:[%s3 + $0x4] sm:$0x3] %vm1298, %v958
  %1302 = vst.msk [vmem:[%s3 + $0x6] sm:$0x3] %vm1298, %v984
  %1303 = vst.msk [vmem:[%s3 + $0x8] sm:$0x3] %vm1298, %v1010
  %1304 = vst.msk [vmem:[%s3 + $0xa] sm:$0x3] %vm1298, %v1036
  %1305 = vst.msk [vmem:[%s3 + $0xc] sm:$0x3] %vm1298, %v1062
  %1306 = vst.msk [vmem:[%s3 + $0xe] sm:$0x3] %vm1298, %v1088
  %1307 = vst.msk [vmem:[%s3 + $0x10] sm:$0x3] %vm1298, %v1114
  %1308 = vst.msk [vmem:[%s3 + $0x12] sm:$0x3] %vm1298, %v1140
  %1309 = vst.msk [vmem:[%s3 + $0x14] sm:$0x3] %vm1298, %v1166
  %1310 = vst.msk [vmem:[%s3 + $0x16] sm:$0x3] %vm1298, %v1192
  %1311 = vst.msk [vmem:[%s3 + $0x18] sm:$0x3] %vm1298, %v1218
  %1312 = vst.msk [vmem:[%s3 + $0x1a] sm:$0x3] %vm1298, %v1244
  %1313 = vst.msk [vmem:[%s3 + $0x1c] sm:$0x3] %vm1298, %v1270
  %1314 = vst.msk [vmem:[%s3 + $0x1e] sm:$0x3] %vm1298, %v1296
  // Predicated region
  $region14: #{transformer_listener_forward.13} parent=0 // pred_check
    _
  $region15: #{transformer_listener_forward.13} parent=0 // pred_check_branch
    %1316 = sbr.rel (0) target = $region17
  $region16: #{transformer_listener_forward.13} parent=0 // pred_region
    _
  $region17: #{transformer_listener_forward.13} parent=0 // pred_fallthru
    _
  // Predicated region
  $region18: #{transformer_listener_forward.13} parent=0 // pred_check
    _
  $region19: #{transformer_listener_forward.13} parent=0 // pred_check_branch
    %1318 = sbr.rel (0) target = $region21
  $region20: #{transformer_listener_forward.13} parent=0 // pred_region
    _
  $region21: #{transformer_listener_forward.13} parent=0 // pred_fallthru
    _

// kernel: transformer_listener_forward.14
$region0: #{transformer_listener_forward.14}
  #allocation0 [shape = 'u32[]', space=smem, size = 0x4, offset = 0x4, fixed_abs, tag = 'smem constant byte address 0x4 - core index']
  #allocation1 [shape = 'u32[72,128]{1,0:T(1,128)}', space=vmem, size = 0x9000, scoped, tag = 'internal scratch']
  #allocation2 [shape = 'f32[8,128]{1,0:T(8,128)}', space=vmem, size = 0x1000, scoped, tag = 'scratch operand']
  %s0 = inlined_call_operand.vmem [shape: f32[8,128], index: 0, kind: input, shape index: {}]
  %s1 = inlined_call_operand.vmem [shape: f32[128,128], index: 1, kind: input, shape index: {}]
  %s2 = inlined_call_operand.vmem [shape: f32[1,128], index: 2, kind: input, shape index: {}]
  %s3 = inlined_call_operand.vmem [shape: f32[8,128], index: 3, kind: input, shape index: {}]
  %s4 = inlined_call_operand.vmem [shape: f32[1,128], index: 4, kind: input, shape index: {}]
  %s5 = inlined_call_operand.vmem [shape: f32[1,128], index: 5, kind: input, shape index: {}]
  %s6 = inlined_call_operand.vmem [shape: f32[8,128], index: 6, kind: output, shape index: {}]
  %s7 = sld [smem:[#allocation0]]
  $region42: #{transformer_listener_forward.14} parent=0
    _
  %s9 = ssub.s32 1, %s7
  %s10 = scalar_select 0, %s9, %s7
  // Predicated region
  $region2: #{transformer_listener_forward.14} parent=0 // pred_check
    _
  $region3: #{transformer_listener_forward.14} parent=0 // pred_check_branch
    %12 = sbr.rel (0) target = $region5
  $region4: #{transformer_listener_forward.14} parent=0 // pred_region
    _
  $region5: #{transformer_listener_forward.14} parent=0 // pred_fallthru
    _
  // Predicated region
  $region6: #{transformer_listener_forward.14} parent=0 // pred_check
    _
  $region7: #{transformer_listener_forward.14} parent=0 // pred_check_branch
    %14 = sbr.rel (0) target = $region9
  $region8: #{transformer_listener_forward.14} parent=0 // pred_region
    _
  $region9: #{transformer_listener_forward.14} parent=0 // pred_fallthru
    _
  // Predicated region
  $region10: #{transformer_listener_forward.14} parent=0 // pred_check
    _
  $region11: #{transformer_listener_forward.14} parent=0 // pred_check_branch
    %16 = sbr.rel (0) target = $region13
  $region12: #{transformer_listener_forward.14} parent=0 // pred_region
    _
  $region13: #{transformer_listener_forward.14} parent=0 // pred_fallthru
    _
  // Predicated region
  $region14: #{transformer_listener_forward.14} parent=0 // pred_check
    _
  $region15: #{transformer_listener_forward.14} parent=0 // pred_check_branch
    %18 = sbr.rel (0) target = $region17
  $region16: #{transformer_listener_forward.14} parent=0 // pred_region
    _
  $region17: #{transformer_listener_forward.14} parent=0 // pred_fallthru
    _
  // Predicated region
  $region18: #{transformer_listener_forward.14} parent=0 // pred_check
    _
  $region19: #{transformer_listener_forward.14} parent=0 // pred_check_branch
    %20 = sbr.rel (0) target = $region21
  $region20: #{transformer_listener_forward.14} parent=0 // pred_region
    _
  $region21: #{transformer_listener_forward.14} parent=0 // pred_fallthru
    _
  // Predicated region
  $region22: #{transformer_listener_forward.14} parent=0 // pred_check
    _
  $region23: #{transformer_listener_forward.14} parent=0 // pred_check_branch
    %22 = sbr.rel (0) target = $region25
  $region24: #{transformer_listener_forward.14} parent=0 // pred_region
    _
  $region25: #{transformer_listener_forward.14} parent=0 // pred_fallthru
    _
  %p23 = scmp.eq.s32.totalorder 0, 0
  // Predicated region
  $region26: #{transformer_listener_forward.14} parent=0 // pred_check
    %p24 = pneg %p23
  $region27: #{transformer_listener_forward.14} parent=0 // pred_check_branch
    %26 = sbr.rel (%p24) target = $region29
  $region28: #{transformer_listener_forward.14} parent=0 // pred_region
    %27 = vst [vmem:[#allocation2] sm:$0xff] 0.0
  $region29: #{transformer_listener_forward.14} parent=0 // pred_fallthru
    _
  %v28 = vld [vmem:[#allocation2] sm:$0xff]
  %v29 = vld [vmem:[%s0] sm:$0xff]
  %v30 = vpack.c.bf16 %v29, %v29
  %v31 = vld [vmem:[%s1] sm:$0xff]
  %v32 = vld [vmem:[%s1 + $0x8] sm:$0xff]
  %v33 = vld [vmem:[%s1 + $0x10] sm:$0xff]
  %v34 = vld [vmem:[%s1 + $0x18] sm:$0xff]
  %v35 = vld [vmem:[%s1 + $0x20] sm:$0xff]
  %v36 = vld [vmem:[%s1 + $0x28] sm:$0xff]
  %v37 = vld [vmem:[%s1 + $0x30] sm:$0xff]
  %v38 = vld [vmem:[%s1 + $0x38] sm:$0xff]
  %v39 = vld [vmem:[%s1 + $0x40] sm:$0xff]
  %v40 = vld [vmem:[%s1 + $0x48] sm:$0xff]
  %v41 = vld [vmem:[%s1 + $0x50] sm:$0xff]
  %v42 = vld [vmem:[%s1 + $0x58] sm:$0xff]
  %v43 = vld [vmem:[%s1 + $0x60] sm:$0xff]
  %v44 = vld [vmem:[%s1 + $0x68] sm:$0xff]
  %v45 = vld [vmem:[%s1 + $0x70] sm:$0xff]
  %v46 = vld [vmem:[%s1 + $0x78] sm:$0xff]
  %v47 = vpack.c.bf16 %v32, %v31
  %v48 = vpack.c.bf16 %v34, %v33
  %v49 = vpack.c.bf16 %v36, %v35
  %v50 = vpack.c.bf16 %v38, %v37
  %v51 = vpack.c.bf16 %v40, %v39
  %v52 = vpack.c.bf16 %v42, %v41
  %v53 = vpack.c.bf16 %v44, %v43
  %v54 = vpack.c.bf16 %v46, %v45
  %55 = vmatpush.bf16.msra.mxu0 %v54
  %56 = vmatpush.bf16.msra.mxu0 %v53
  %57 = vmatpush.bf16.msra.mxu0 %v52
  %58 = vmatpush.bf16.msra.mxu0 %v51
  %59 = vmatpush.bf16.msra.mxu0 %v50
  %60 = vmatpush.bf16.msra.mxu0 %v49
  %61 = vmatpush.bf16.msra.mxu0 %v48
  %62 = vmatpush.bf16.msra.mxu0 %v47
  %63 = vmatmul.bf16.gmra.mxu0 %v30
  %v64 = vpop.f32.mrf.mxu0
  %v65 = vadd.f32 0.0, %v64
  %v66 = vpop.f32.mrf.mxu0
  %67 = vdwg.mxu0
  %v68 = vadd.f32 %v28, %v65
  %69 = vst [vmem:[#allocation2] sm:$0xff] %v68
  // Predicated region
  $region30: #{transformer_listener_forward.14} parent=0 // pred_check
    %p70 = pneg %p23
  $region31: #{transformer_listener_forward.14} parent=0 // pred_check_branch
    %72 = sbr.rel (%p70) target = $region33
  $region32: #{transformer_listener_forward.14} parent=0 // pred_region
    %v73 = vld [vmem:[#allocation2] sm:$0xff]
    %v74 = vld [vmem:[%s2] sm:$0x1]
    %v76 = vperm.slane %v74, 0
    %v78 = vadd.f32 %v73, %v76
    %v79 = vld [vmem:[%s3] sm:$0xff]
    %v80 = vadd.f32 %v78, %v79
    %81 = vadd.xlane.f32.xlu0 %v80
    %v82 = vpop.xlane.xlu0 %81
    %v83 = vrcp.pop 128.0
    %v84 = vmul.f32 128.0, %v83
    %v85 = vsub.f32 1.0, %v84
    %v86 = vmul.f32 %v83, %v85
    %v87 = vadd.f32 %v83, %v86
    %vm88 = vweird.f32 %v83
    %v89 = vsel %vm88, %v83, %v87
    %v90 = vmul.f32 %v82, %v89
    %v91 = vsub.f32 %v80, %v90
    %v92 = vmul.f32 %v91, %v91
    %93 = vadd.xlane.f32.xlu0 %v92
    %v94 = vpop.xlane.xlu0 %93
    %v95 = vmul.f32 %v94, %v89
    %v96 = vadd.f32 %v95, 1e-05
    %v97 = vrsqrt.pop %v96
    %v98 = vmul.f32 %v97, %v96
    %v99 = vmul.f32 %v98, %v97
    %v100 = vmul.f32 0.5, %v99
    %v101 = vsub.f32 1.5, %v100
    %v102 = vmul.f32 %v97, %v101
    %vm103 = vweird.f32 %v96
    %vm104 = vweird.f32 %v97
    %vm105 = vmor %vm103, %vm104
    %v106 = vsel %vm105, %v97, %v102
    %v107 = vmul.f32 %v91, %v106
    %v108 = vld [vmem:[%s4] sm:$0x1]
    %v110 = vperm.slane %v108, 0
    %v112 = vmul.f32 %v107, %v110
    %v113 = vld [vmem:[%s5] sm:$0x1]
    %v115 = vperm.slane %v113, 0
    %v117 = vadd.f32 %v112, %v115
    %118 = vst [vmem:[%s6] sm:$0xff] %v117
  $region33: #{transformer_listener_forward.14} parent=0 // pred_fallthru
    _
  // Predicated region
  $region34: #{transformer_listener_forward.14} parent=0 // pred_check
    _
  $region35: #{transformer_listener_forward.14} parent=0 // pred_check_branch
    %120 = sbr.rel (0) target = $region37
  $region36: #{transformer_listener_forward.14} parent=0 // pred_region
    _
  $region37: #{transformer_listener_forward.14} parent=0 // pred_fallthru
    _
  // Predicated region
  $region38: #{transformer_listener_forward.14} parent=0 // pred_check
    _
  $region39: #{transformer_listener_forward.14} parent=0 // pred_check_branch
    %122 = sbr.rel (0) target = $region41
  $region40: #{transformer_listener_forward.14} parent=0 // pred_region
    _
  $region41: #{transformer_listener_forward.14} parent=0 // pred_fallthru
    _

// kernel: transformer_listener_forward.21
$region0: #{transformer_listener_forward.21}
  #allocation0 [shape = 'u32[]', space=smem, size = 0x4, offset = 0x4, fixed_abs, tag = 'smem constant byte address 0x4 - core index']
  #allocation1 [shape = 'u32[72,128]{1,0:T(1,128)}', space=vmem, size = 0x9000, scoped, tag = 'internal scratch']
  #allocation2 [shape = 'f32[8,128]{1,0:T(8,128)}', space=vmem, size = 0x1000, scoped, tag = 'scratch operand']
  %s0 = inlined_call_operand.vmem [shape: f32[8,256], index: 0, kind: input, shape index: {}]
  %s1 = inlined_call_operand.vmem [shape: f32[256,128], index: 1, kind: input, shape index: {}]
  %s2 = inlined_call_operand.vmem [shape: f32[1,128], index: 2, kind: input, shape index: {}]
  %s3 = inlined_call_operand.vmem [shape: f32[8,128], index: 3, kind: input, shape index: {}]
  %s4 = inlined_call_operand.vmem [shape: f32[1,128], index: 4, kind: input, shape index: {}]
  %s5 = inlined_call_operand.vmem [shape: f32[1,128], index: 5, kind: input, shape index: {}]
  %s6 = inlined_call_operand.hbm [shape: f32[8,128], index: 6, kind: output, shape index: {}]
  %s7 = sld [smem:[#allocation0]]
  $region42: #{transformer_listener_forward.21} parent=0
    _
  %s9 = ssub.s32 1, %s7
  %s10 = scalar_select 0, %s9, %s7
  $region1: #{transformer_listener_forward.21} parent=0
    #allocation3 [shape = 'u8[4096]{0}', space=vmem, size = 0x1000, scoped, tag = 'output window, operand 0, single buffered']
    #allocation4 [shape = 's32[1]{0}', space=sflag, size = 0x4, scoped, tag = 'scoped memory for transformer_listener_forward.21']
    %11 = vsyncpa [#allocation4], 0
    // Predicated region
    $region2: #{transformer_listener_forward.21} parent=1 // pred_check
      _
    $region3: #{transformer_listener_forward.21} parent=1 // pred_check_branch
      %13 = sbr.rel (0) target = $region5
    $region4: #{transformer_listener_forward.21} parent=1 // pred_region
      _
    $region5: #{transformer_listener_forward.21} parent=1 // pred_fallthru
      _
    // Predicated region
    $region6: #{transformer_listener_forward.21} parent=1 // pred_check
      _
    $region7: #{transformer_listener_forward.21} parent=1 // pred_check_branch
      %15 = sbr.rel (0) target = $region9
    $region8: #{transformer_listener_forward.21} parent=1 // pred_region
      _
    $region9: #{transformer_listener_forward.21} parent=1 // pred_fallthru
      _
    // Predicated region
    $region10: #{transformer_listener_forward.21} parent=1 // pred_check
      _
    $region11: #{transformer_listener_forward.21} parent=1 // pred_check_branch
      %17 = sbr.rel (0) target = $region13
    $region12: #{transformer_listener_forward.21} parent=1 // pred_region
      _
    $region13: #{transformer_listener_forward.21} parent=1 // pred_fallthru
      _
    // Predicated region
    $region14: #{transformer_listener_forward.21} parent=1 // pred_check
      _
    $region15: #{transformer_listener_forward.21} parent=1 // pred_check_branch
      %19 = sbr.rel (0) target = $region17
    $region16: #{transformer_listener_forward.21} parent=1 // pred_region
      _
    $region17: #{transformer_listener_forward.21} parent=1 // pred_fallthru
      _
    // Predicated region
    $region18: #{transformer_listener_forward.21} parent=1 // pred_check
      _
    $region19: #{transformer_listener_forward.21} parent=1 // pred_check_branch
      %21 = sbr.rel (0) target = $region21
    $region20: #{transformer_listener_forward.21} parent=1 // pred_region
      _
    $region21: #{transformer_listener_forward.21} parent=1 // pred_fallthru
      _
    // Predicated region
    $region22: #{transformer_listener_forward.21} parent=1 // pred_check
      _
    $region23: #{transformer_listener_forward.21} parent=1 // pred_check_branch
      %23 = sbr.rel (0) target = $region25
    $region24: #{transformer_listener_forward.21} parent=1 // pred_region
      _
    $region25: #{transformer_listener_forward.21} parent=1 // pred_fallthru
      _
    %p24 = scmp.eq.s32.totalorder 0, 0
    // Predicated region
    $region26: #{transformer_listener_forward.21} parent=1 // pred_check
      %p25 = pneg %p24
    $region27: #{transformer_listener_forward.21} parent=1 // pred_check_branch
      %27 = sbr.rel (%p25) target = $region29
    $region28: #{transformer_listener_forward.21} parent=1 // pred_region
      %28 = vst [vmem:[#allocation2] sm:$0xff] 0.0
    $region29: #{transformer_listener_forward.21} parent=1 // pred_fallthru
      _
    %v29 = vld [vmem:[#allocation2] sm:$0xff]
    %v30 = vld [vmem:[%s0] sm:$0xff]
    %v31 = vld [vmem:[%s0 + $0x8] sm:$0xff]
    %v32 = vpack.c.bf16 %v30, %v30
    %v33 = vpack.c.bf16 %v31, %v31
    %v34 = vld [vmem:[%s1] sm:$0xff]
    %v35 = vld [vmem:[%s1 + $0x8] sm:$0xff]
    %v36 = vld [vmem:[%s1 + $0x10] sm:$0xff]
    %v37 = vld [vmem:[%s1 + $0x18] sm:$0xff]
    %v38 = vld [vmem:[%s1 + $0x20] sm:$0xff]
    %v39 = vld [vmem:[%s1 + $0x28] sm:$0xff]
    %v40 = vld [vmem:[%s1 + $0x30] sm:$0xff]
    %v41 = vld [vmem:[%s1 + $0x38] sm:$0xff]
    %v42 = vld [vmem:[%s1 + $0x40] sm:$0xff]
    %v43 = vld [vmem:[%s1 + $0x48] sm:$0xff]
    %v44 = vld [vmem:[%s1 + $0x50] sm:$0xff]
    %v45 = vld [vmem:[%s1 + $0x58] sm:$0xff]
    %v46 = vld [vmem:[%s1 + $0x60] sm:$0xff]
    %v47 = vld [vmem:[%s1 + $0x68] sm:$0xff]
    %v48 = vld [vmem:[%s1 + $0x70] sm:$0xff]
    %v49 = vld [vmem:[%s1 + $0x78] sm:$0xff]
    %v50 = vld [vmem:[%s1 + $0x80] sm:$0xff]
    %v51 = vld [vmem:[%s1 + $0x88] sm:$0xff]
    %v52 = vld [vmem:[%s1 + $0x90] sm:$0xff]
    %v53 = vld [vmem:[%s1 + $0x98] sm:$0xff]
    %v54 = vld [vmem:[%s1 + $0xa0] sm:$0xff]
    %v55 = vld [vmem:[%s1 + $0xa8] sm:$0xff]
    %v56 = vld [vmem:[%s1 + $0xb0] sm:$0xff]
    %v57 = vld [vmem:[%s1 + $0xb8] sm:$0xff]
    %v58 = vld [vmem:[%s1 + $0xc0] sm:$0xff]
    %v59 = vld [vmem:[%s1 + $0xc8] sm:$0xff]
    %v60 = vld [vmem:[%s1 + $0xd0] sm:$0xff]
    %v61 = vld [vmem:[%s1 + $0xd8] sm:$0xff]
    %v62 = vld [vmem:[%s1 + $0xe0] sm:$0xff]
    %v63 = vld [vmem:[%s1 + $0xe8] sm:$0xff]
    %v64 = vld [vmem:[%s1 + $0xf0] sm:$0xff]
    %v65 = vld [vmem:[%s1 + $0xf8] sm:$0xff]
    %v66 = vpack.c.bf16 %v35, %v34
    %v67 = vpack.c.bf16 %v37, %v36
    %v68 = vpack.c.bf16 %v39, %v38
    %v69 = vpack.c.bf16 %v41, %v40
    %v70 = vpack.c.bf16 %v43, %v42
    %v71 = vpack.c.bf16 %v45, %v44
    %v72 = vpack.c.bf16 %v47, %v46
    %v73 = vpack.c.bf16 %v49, %v48
    %v74 = vpack.c.bf16 %v51, %v50
    %v75 = vpack.c.bf16 %v53, %v52
    %v76 = vpack.c.bf16 %v55, %v54
    %v77 = vpack.c.bf16 %v57, %v56
    %v78 = vpack.c.bf16 %v59, %v58
    %v79 = vpack.c.bf16 %v61, %v60
    %v80 = vpack.c.bf16 %v63, %v62
    %v81 = vpack.c.bf16 %v65, %v64
    %82 = vmatpush.bf16.msra.mxu0 %v73
    %83 = vmatpush.bf16.msra.mxu0 %v72
    %84 = vmatpush.bf16.msra.mxu0 %v71
    %85 = vmatpush.bf16.msra.mxu0 %v70
    %86 = vmatpush.bf16.msra.mxu0 %v69
    %87 = vmatpush.bf16.msra.mxu0 %v68
    %88 = vmatpush.bf16.msra.mxu0 %v67
    %89 = vmatpush.bf16.msra.mxu0 %v66
    %90 = vmatmul.bf16.gmra.mxu0 %v32
    %v91 = vpop.f32.mrf.mxu0
    %v92 = vadd.f32 0.0, %v91
    %v93 = vpop.f32.mrf.mxu0
    %94 = vdwg.mxu0
    %95 = vmatpush.bf16.msra.mxu0 %v81
    %96 = vmatpush.bf16.msra.mxu0 %v80
    %97 = vmatpush.bf16.msra.mxu0 %v79
    %98 = vmatpush.bf16.msra.mxu0 %v78
    %99 = vmatpush.bf16.msra.mxu0 %v77
    %100 = vmatpush.bf16.msra.mxu0 %v76
    %101 = vmatpush.bf16.msra.mxu0 %v75
    %102 = vmatpush.bf16.msra.mxu0 %v74
    %103 = vmatmul.bf16.gmra.mxu0 %v33
    %v104 = vpop.f32.mrf.mxu0
    %v105 = vadd.f32 %v92, %v104
    %v106 = vpop.f32.mrf.mxu0
    %107 = vdwg.mxu0
    %v108 = vadd.f32 %v29, %v105
    %109 = vst [vmem:[#allocation2] sm:$0xff] %v108
    // Predicated region
    $region30: #{transformer_listener_forward.21} parent=1 // pred_check
      %p110 = pneg %p24
    $region31: #{transformer_listener_forward.21} parent=1 // pred_check_branch
      %112 = sbr.rel (%p110) target = $region33
    $region32: #{transformer_listener_forward.21} parent=1 // pred_region
      %v113 = vld [vmem:[#allocation2] sm:$0xff]
      %v114 = vld [vmem:[%s2] sm:$0x1]
      %v116 = vperm.slane %v114, 0
      %v118 = vadd.f32 %v113, %v116
      %v119 = vld [vmem:[%s3] sm:$0xff]
      %v120 = vadd.f32 %v118, %v119
      %121 = vadd.xlane.f32.xlu0 %v120
      %v122 = vpop.xlane.xlu0 %121
      %v123 = vrcp.pop 128.0
      %v124 = vmul.f32 128.0, %v123
      %v125 = vsub.f32 1.0, %v124
      %v126 = vmul.f32 %v123, %v125
      %v127 = vadd.f32 %v123, %v126
      %vm128 = vweird.f32 %v123
      %v129 = vsel %vm128, %v123, %v127
      %v130 = vmul.f32 %v122, %v129
      %v131 = vsub.f32 %v120, %v130
      %v132 = vmul.f32 %v131, %v131
      %133 = vadd.xlane.f32.xlu0 %v132
      %v134 = vpop.xlane.xlu0 %133
      %v135 = vmul.f32 %v134, %v129
      %v136 = vadd.f32 %v135, 1e-05
      %v137 = vrsqrt.pop %v136
      %v138 = vmul.f32 %v137, %v136
      %v139 = vmul.f32 %v138, %v137
      %v140 = vmul.f32 0.5, %v139
      %v141 = vsub.f32 1.5, %v140
      %v142 = vmul.f32 %v137, %v141
      %vm143 = vweird.f32 %v136
      %vm144 = vweird.f32 %v137
      %vm145 = vmor %vm143, %vm144
      %v146 = vsel %vm145, %v137, %v142
      %v147 = vmul.f32 %v131, %v146
      %v148 = vld [vmem:[%s4] sm:$0x1]
      %v150 = vperm.slane %v148, 0
      %v152 = vmul.f32 %v147, %v150
      %v153 = vld [vmem:[%s5] sm:$0x1]
      %v155 = vperm.slane %v153, 0
      %v157 = vadd.f32 %v152, %v155
      %158 = vst [vmem:[#allocation3] sm:$0xff] %v157
    $region33: #{transformer_listener_forward.21} parent=1 // pred_fallthru
      _
    // Predicated region
    $region34: #{transformer_listener_forward.21} parent=1 // pred_check
      _
    $region35: #{transformer_listener_forward.21} parent=1 // pred_check_branch
      %160 = sbr.rel (0) target = $region37
    $region36: #{transformer_listener_forward.21} parent=1 // pred_region
      %162 = vsyncadd [#allocation4], 0
      %s164 = sshll.u32 [#allocation3], 4
      %s165 = int_to_ptr.vmem [resolvable:$true] %s164
      %s166 = sshll.u32 %s6, 4
      %s167 = int_to_ptr.hbm [resolvable:$true] %s166
      %169 = dma.vmem_to_hbm [thread:$0]  %s165, 128, %s167, [#allocation4]
    $region37: #{transformer_listener_forward.21} parent=1 // pred_fallthru
      _
    // Predicated region
    $region38: #{transformer_listener_forward.21} parent=1 // pred_check
      _
    $region39: #{transformer_listener_forward.21} parent=1 // pred_check_branch
      %171 = sbr.rel (0) target = $region41
    $region40: #{transformer_listener_forward.21} parent=1 // pred_region
      %173 = dma.done [#allocation4], 128
    $region41: #{transformer_listener_forward.21} parent=1 // pred_fallthru
      _
    %174 = vsyncpa [#allocation4], 1

</llo_original>
